<compile_context>
chip_gen: v7x
topology: tpu7x:2x2x1
jax: 0.10.0
libtpu: 0.0.40
codegen_flags: <defaults>
</compile_context>

<pallas_src>
import functools

import jax
import jax.numpy as jnp
from jax.experimental import pallas as pl
from jax.experimental.pallas import tpu as pltpu

NUM_GROUPS = 8
GN_EPS = 1e-5
CH = 64           # every stage of this ResNet is 64 channels, stride 1


def _resnet_stack_kernel(H, W, nconv,
                         x_ref, w_ref, gn_ref, gmat_ref, gmt_ref,
                         out_ref, act_ref, res_ref):
    """One grid step = one (3x3 conv -> GroupNorm(8) -> [+shortcut] -> ReLU) layer.

    Grid = (batch, conv_index).  Per-step refs:
      x_ref    : (H+2, W+2, C)  padded network input (read at conv 0)        f32
      w_ref    : (9, C, C)      this conv's taps as (Cin, Cout) matrices     bf16
      gn_ref   : (2, C)         [gamma; beta] for this conv's GroupNorm      f32
      gmat_ref : (C, G)         one-hot channel->group, pre-scaled 1/(HW*gsz)
      gmt_ref  : (G, C)         one-hot group->channel
      out_ref  : (H, W, C)      final activation (written at the last conv)
      act_ref  : (H+2, W+2, C)  resident padded activation (VMEM scratch)    f32
      res_ref  : (H*W, C)       resident BasicBlock shortcut copy (scratch)  f32
    """
    HW = H * W
    C = act_ref.shape[-1]
    c = pl.program_id(1)

    @pl.when(c == 0)
    def _load_input():
        act_ref[...] = x_ref[...]
        res_ref[...] = jnp.zeros_like(res_ref)

    # First conv of each BasicBlock (c = 1, 3, ...): snapshot the block input
    # as the identity shortcut before it gets overwritten.
    @pl.when(c % 2 == 1)
    def _save_shortcut():
        res_ref[...] = act_ref[1:H + 1, 1:W + 1, :].reshape(HW, C)

    # 3x3 conv (stride 1, pad 1) = 9 shift-and-accumulate matmuls on the MXU,
    # bf16 operands, f32 accumulation.
    y = jnp.zeros((HW, C), jnp.float32)
    for t in range(9):
        i, j = divmod(t, 3)
        tap = act_ref[i:i + H, j:j + W, :].reshape(HW, C).astype(jnp.bfloat16)
        y = y + jnp.dot(tap, w_ref[t], preferred_element_type=jnp.float32)

    # GroupNorm(8): per-channel sums -> per-group stats via two stacked tiny
    # matmuls, folded into one per-channel scale/shift  out = y * a + b.
    csum = jnp.sum(y, axis=0, keepdims=True)                      # (1, C)
    csq = jnp.sum(y * y, axis=0, keepdims=True)                   # (1, C)
    gstats = jnp.dot(jnp.concatenate([csum, csq], axis=0), gmat_ref[...],
                     preferred_element_type=jnp.float32)          # (2, G) = [mean; E[x^2]]
    gmean = gstats[0:1]
    gvar = jnp.maximum(gstats[1:2] - gmean * gmean, 0.0)
    ginv = jax.lax.rsqrt(gvar + GN_EPS)
    back = jnp.dot(jnp.concatenate([gmean, ginv], axis=0), gmt_ref[...],
                   preferred_element_type=jnp.float32)            # (2, C) = [mean_c; inv_c]
    a = back[1:2] * gn_ref[0:1, :]                                # inv_c * gamma
    b = gn_ref[1:2, :] - back[0:1] * a                            # beta - mean_c * a
    out = y * a + b

    # Second conv of each BasicBlock adds the identity shortcut; every layer in
    # this network ends with a ReLU.
    is_conv_b = jnp.logical_and(c >= 2, c % 2 == 0)
    out = jnp.where(is_conv_b, out + res_ref[...], out)
    out = jnp.maximum(out, 0.0)

    # Write the new activation into the interior of the padded tile (the zero
    # halo is preserved for the next conv).
    act_ref[1:H + 1, 1:W + 1, :] = out.reshape(H, W, C)

    @pl.when(c == nconv - 1)
    def _emit_output():
        out_ref[...] = out.reshape(H, W, C)


def _fused_resnet(x_pad, w_all, gn_all, gmat, gmt, H, W):
    N = x_pad.shape[0]
    C = x_pad.shape[-1]
    nconv = w_all.shape[0]
    G = NUM_GROUPS

    kernel = functools.partial(_resnet_stack_kernel, H, W, nconv)
    flops = int(2 * N * nconv * H * W * 9 * C * C)
    bytes_accessed = int(x_pad.size * 4 + w_all.size * 2 + gn_all.size * 4 +
                         (gmat.size + gmt.size) * 4 + N * H * W * C * 4)
    return pl.pallas_call(
        kernel,
        out_shape=jax.ShapeDtypeStruct((N, H, W, C), jnp.float32),
        grid=(N, nconv),
        in_specs=[
            pl.BlockSpec((None, H + 2, W + 2, C), lambda n, c: (n, 0, 0, 0)),
            pl.BlockSpec((None, 9, C, C), lambda n, c: (c, 0, 0, 0)),
            pl.BlockSpec((None, 2, C), lambda n, c: (c, 0, 0)),
            pl.BlockSpec((C, G), lambda n, c: (0, 0)),
            pl.BlockSpec((G, C), lambda n, c: (0, 0)),
        ],
        out_specs=pl.BlockSpec((None, H, W, C), lambda n, c: (n, 0, 0, 0)),
        scratch_shapes=[
            pltpu.VMEM((H + 2, W + 2, C), jnp.float32),   # resident padded activation
            pltpu.VMEM((H * W, C), jnp.float32),          # BasicBlock shortcut copy
        ],
        compiler_params=pltpu.CompilerParams(
            dimension_semantics=("parallel", "arbitrary")),
        cost_estimate=pl.CostEstimate(flops=flops,
                                      transcendentals=int(N * nconv * G),
                                      bytes_accessed=bytes_accessed),
    )(x_pad, w_all, gn_all, gmat, gmt)


# ------------------------- parameters (synthetic, deterministic) ----------------
def init_params(key):
    def conv_w(k, kh, kw, cin, cout):
        fan_in = kh * kw * cin
        return jax.random.normal(k, (kh, kw, cin, cout), jnp.float32) * (2.0 / fan_in) ** 0.5

    keys = jax.random.split(key, 1 + 4 * 8 * 2)
    params = {
        "conv1_w": conv_w(keys[0], 3, 3, 3, CH),
        "gn1_gamma": jnp.ones((CH,), jnp.float32),   # PyTorch GroupNorm default affine init
        "gn1_beta": jnp.zeros((CH,), jnp.float32),
        "blocks": [],
    }
    ki = 1
    for _layer in range(4):          # conv2_x .. conv5_x
        for _b in range(8):          # num_block = [8, 8, 8, 8]
            params["blocks"].append({
                "wa": conv_w(keys[ki], 3, 3, CH, CH),
                "ga": jnp.ones((CH,), jnp.float32),
                "ba": jnp.zeros((CH,), jnp.float32),
                "wb": conv_w(keys[ki + 1], 3, 3, CH, CH),
                "gb": jnp.ones((CH,), jnp.float32),
                "bb": jnp.zeros((CH,), jnp.float32),
            })
            ki += 2
    return params


# ------------------------- forward (Feature_Get.forward) ------------------------
def feature_get_forward(params, x_nchw, pre_feature=None, num=None):
    # Pre_Feature and num are ignored by the PyTorch forward; kept for parity.
    x = jnp.transpose(x_nchw, (0, 2, 3, 1)).astype(jnp.float32)       # NCHW -> NHWC
    N, H, W, cin = x.shape
    C, G = CH, NUM_GROUPS
    gsz = C // G

    # Zero-pad input channels up to 64 (conv1 weight rows padded with zeros to
    # match -> result unchanged) and add the 1-pixel spatial halo once.
    x = jnp.pad(x, ((0, 0), (0, 0), (0, 0), (0, C - cin)))
    x_pad = jnp.pad(x, ((0, 0), (1, 1), (1, 1), (0, 0)))              # (N, H+2, W+2, C)

    # Stack all 65 conv weights as per-tap (Cin, Cout) matrices, bf16 for the MXU.
    w1 = jnp.pad(params["conv1_w"], ((0, 0), (0, 0), (0, C - cin), (0, 0)))
    w_list = [w1]
    gn_list = [jnp.stack([params["gn1_gamma"], params["gn1_beta"]])]
    for blk in params["blocks"]:
        w_list += [blk["wa"], blk["wb"]]
        gn_list += [jnp.stack([blk["ga"], blk["ba"]]),
                    jnp.stack([blk["gb"], blk["bb"]])]
    nconv = len(w_list)
    w_all = jnp.stack(w_list).reshape(nconv, 9, C, C).astype(jnp.bfloat16)
    gn_all = jnp.stack(gn_list).astype(jnp.float32)                   # (nconv, 2, C)

    # One-hot channel->group matrix (pre-scaled by 1/(HW*group_size)) + transpose,
    # built once outside the kernel.
    denom = float(H * W * gsz)
    gmat = jnp.repeat(jnp.eye(G, dtype=jnp.float32), gsz, axis=0) / denom   # (C, G)
    gmt = jnp.repeat(jnp.eye(G, dtype=jnp.float32), gsz, axis=1)            # (G, C)

    out = _fused_resnet(x_pad, w_all, gn_all, gmat, gmt, H, W)
    return jnp.transpose(out, (0, 3, 1, 2))                           # NHWC -> NCHW


if __name__ == "__main__":
    key = jax.random.PRNGKey(0)
    pkey, xkey = jax.random.split(key)
    params = init_params(pkey)
    x = jax.random.normal(xkey, (2, 3, 16, 16), jnp.float32)          # NCHW like PyTorch
    fwd = jax.jit(feature_get_forward)
    out = fwd(params, x)
    jax.block_until_ready(out)
    assert out.shape == (2, CH, 16, 16), out.shape
    assert bool(jnp.all(jnp.isfinite(out)))
    print("KERNEL_OK")
</pallas_src>

<mosaic_0001>
module attributes {stable_mosaic.version = 11 : i64} {
  func.func @_resnet_stack_kernel(%arg0: i32, %arg1: i32, %arg2: memref<1x18x18x64xf32, #tpu.memory_space<vmem>>, %arg3: memref<1x9x64x64xbf16, #tpu.memory_space<vmem>>, %arg4: memref<1x2x64xf32, #tpu.memory_space<vmem>>, %arg5: memref<64x8xf32, #tpu.memory_space<vmem>>, %arg6: memref<8x64xf32, #tpu.memory_space<vmem>>, %arg7: memref<1x16x16x64xf32, #tpu.memory_space<vmem>>, %arg8: memref<18x18x64xf32, #tpu.memory_space<vmem>>, %arg9: memref<256x64xf32, #tpu.memory_space<vmem>>) attributes {dimension_semantics = [#tpu.dimension_semantics<parallel>, #tpu.dimension_semantics<arbitrary>], iteration_bounds = array<i64: 2, 65>, scalar_prefetch = 0 : i64, scratch_operands = 2 : i64, tpu.core_type = #tpu.core_type<tc>, window_params = [{transform_indices = @transform_0, window_bounds = array<i64: 1, 18, 18, 64>}, {transform_indices = @transform_1, window_bounds = array<i64: 1, 9, 64, 64>}, {transform_indices = @transform_2, window_bounds = array<i64: 1, 2, 64>}, {pipeline_mode = #tpu.pipeline_mode<synchronous>, transform_indices = @transform_3, window_bounds = array<i64: 64, 8>}, {pipeline_mode = #tpu.pipeline_mode<synchronous>, transform_indices = @transform_4, window_bounds = array<i64: 8, 64>}, {transform_indices = @transform_5, window_bounds = array<i64: 1, 16, 16, 64>}]} {
    %c0_i32 = arith.constant 0 : i32
    %0 = arith.cmpi eq, %arg1, %c0_i32 : i32
    %1 = arith.extui %0 : i1 to i32
    %c0_i32_0 = arith.constant 0 : i32
    %2 = arith.cmpi ne, %1, %c0_i32_0 : i32
    scf.if %2 {
      %c0_101 = arith.constant 0 : index
      %c0_102 = arith.constant 0 : index
      %c0_103 = arith.constant 0 : index
      %c0_104 = arith.constant 0 : index
      %136 = vector.load %arg2[%c0_101, %c0_102, %c0_103, %c0_104] : memref<1x18x18x64xf32, #tpu.memory_space<vmem>>, vector<1x18x18x64xf32>
      %137 = vector.shape_cast %136 : vector<1x18x18x64xf32> to vector<18x18x64xf32>
      %c0_105 = arith.constant 0 : index
      %c0_106 = arith.constant 0 : index
      %c0_107 = arith.constant 0 : index
      %138 = vector.load %arg8[%c0_105, %c0_106, %c0_107] : memref<18x18x64xf32, #tpu.memory_space<vmem>>, vector<18x18x64xf32>
      tpu.vector_store %arg8[%c0_105, %c0_106, %c0_107], %137 {strides = array<i32>} : memref<18x18x64xf32, #tpu.memory_space<vmem>>, vector<18x18x64xf32>,
      %cst_108 = arith.constant 0.000000e+00 : f32
      %139 = vector.broadcast %cst_108 : f32 to vector<256x64xf32>
      %c0_109 = arith.constant 0 : index
      %c0_110 = arith.constant 0 : index
      %140 = vector.load %arg9[%c0_109, %c0_110] : memref<256x64xf32, #tpu.memory_space<vmem>>, vector<256x64xf32>
      tpu.vector_store %arg9[%c0_109, %c0_110], %139 {strides = array<i32>} : memref<256x64xf32, #tpu.memory_space<vmem>>, vector<256x64xf32>,
    } else {
    }
    %c2_i32 = arith.constant 2 : i32
    %c0_i32_1 = arith.constant 0 : i32
    %3 = arith.cmpi eq, %c2_i32, %c0_i32_1 : i32
    %c1_i32 = arith.constant 1 : i32
    %4 = arith.select %3, %c1_i32, %c2_i32 : i32
    %5 = arith.remsi %arg1, %4 : i32
    %c0_i32_2 = arith.constant 0 : i32
    %6 = arith.cmpi ne, %5, %c0_i32_2 : i32
    %c0_i32_3 = arith.constant 0 : i32
    %7 = arith.cmpi slt, %5, %c0_i32_3 : i32
    %c0_i32_4 = arith.constant 0 : i32
    %8 = arith.cmpi slt, %4, %c0_i32_4 : i32
    %9 = arith.xori %7, %8 : i1
    %10 = arith.andi %9, %6 : i1
    %11 = arith.addi %5, %4 : i32
    %12 = arith.select %10, %11, %5 : i32
    %c1_i32_5 = arith.constant 1 : i32
    %13 = arith.cmpi eq, %12, %c1_i32_5 : i32
    %14 = arith.extui %13 : i1 to i32
    %c0_i32_6 = arith.constant 0 : i32
    %15 = arith.cmpi ne, %14, %c0_i32_6 : i32
    scf.if %15 {
      %c1_101 = arith.constant 1 : index
      %c1_102 = arith.constant 1 : index
      %c0_103 = arith.constant 0 : index
      %136 = vector.load %arg8[%c1_101, %c1_102, %c0_103] : memref<18x18x64xf32, #tpu.memory_space<vmem>>, vector<16x16x64xf32>
      %137 = vector.shape_cast %136 : vector<16x16x64xf32> to vector<256x64xf32>
      %c0_104 = arith.constant 0 : index
      %c0_105 = arith.constant 0 : index
      %138 = vector.load %arg9[%c0_104, %c0_105] : memref<256x64xf32, #tpu.memory_space<vmem>>, vector<256x64xf32>
      tpu.vector_store %arg9[%c0_104, %c0_105], %137 {strides = array<i32>} : memref<256x64xf32, #tpu.memory_space<vmem>>, vector<256x64xf32>,
    } else {
    }
    %cst = arith.constant 0.000000e+00 : f32
    %16 = vector.broadcast %cst : f32 to vector<256x64xf32>
    %c0 = arith.constant 0 : index
    %c0_7 = arith.constant 0 : index
    %c0_8 = arith.constant 0 : index
    %17 = vector.load %arg8[%c0, %c0_7, %c0_8] : memref<18x18x64xf32, #tpu.memory_space<vmem>>, vector<16x16x64xf32>
    %18 = vector.shape_cast %17 : vector<16x16x64xf32> to vector<256x64xf32>
    %19 = arith.truncf %18 : vector<256x64xf32> to vector<256x64xbf16>
    %c0_9 = arith.constant 0 : index
    %c0_10 = arith.constant 0 : index
    %c0_11 = arith.constant 0 : index
    %c0_12 = arith.constant 0 : index
    %20 = vector.load %arg3[%c0_9, %c0_10, %c0_11, %c0_12] : memref<1x9x64x64xbf16, #tpu.memory_space<vmem>>, vector<1x1x64x64xbf16>
    %21 = vector.shape_cast %20 : vector<1x1x64x64xbf16> to vector<64x64xbf16>
    %cst_13 = arith.constant dense<0.000000e+00> : vector<256x64xf32>
    %22 = tpu.matmul %19, %21, %cst_13 {dimension_numbers = #tpu.dot_dimension_numbers<[1], [0], [0], [1], [0, 0, 1, 1], [], []>} : vector<256x64xbf16>, vector<64x64xbf16>, vector<256x64xf32> -> vector<256x64xf32>
    %23 = arith.addf %16, %22 : vector<256x64xf32>
    %c0_14 = arith.constant 0 : index
    %c1 = arith.constant 1 : index
    %c0_15 = arith.constant 0 : index
    %24 = vector.load %arg8[%c0_14, %c1, %c0_15] : memref<18x18x64xf32, #tpu.memory_space<vmem>>, vector<16x16x64xf32>
    %25 = vector.shape_cast %24 : vector<16x16x64xf32> to vector<256x64xf32>
    %26 = arith.truncf %25 : vector<256x64xf32> to vector<256x64xbf16>
    %c0_16 = arith.constant 0 : index
    %c1_17 = arith.constant 1 : index
    %c0_18 = arith.constant 0 : index
    %c0_19 = arith.constant 0 : index
    %27 = vector.load %arg3[%c0_16, %c1_17, %c0_18, %c0_19] : memref<1x9x64x64xbf16, #tpu.memory_space<vmem>>, vector<1x1x64x64xbf16>
    %28 = vector.shape_cast %27 : vector<1x1x64x64xbf16> to vector<64x64xbf16>
    %cst_20 = arith.constant dense<0.000000e+00> : vector<256x64xf32>
    %29 = tpu.matmul %26, %28, %cst_20 {dimension_numbers = #tpu.dot_dimension_numbers<[1], [0], [0], [1], [0, 0, 1, 1], [], []>} : vector<256x64xbf16>, vector<64x64xbf16>, vector<256x64xf32> -> vector<256x64xf32>
    %30 = arith.addf %23, %29 : vector<256x64xf32>
    %c0_21 = arith.constant 0 : index
    %c2 = arith.constant 2 : index
    %c0_22 = arith.constant 0 : index
    %31 = vector.load %arg8[%c0_21, %c2, %c0_22] : memref<18x18x64xf32, #tpu.memory_space<vmem>>, vector<16x16x64xf32>
    %32 = vector.shape_cast %31 : vector<16x16x64xf32> to vector<256x64xf32>
    %33 = arith.truncf %32 : vector<256x64xf32> to vector<256x64xbf16>
    %c0_23 = arith.constant 0 : index
    %c2_24 = arith.constant 2 : index
    %c0_25 = arith.constant 0 : index
    %c0_26 = arith.constant 0 : index
    %34 = vector.load %arg3[%c0_23, %c2_24, %c0_25, %c0_26] : memref<1x9x64x64xbf16, #tpu.memory_space<vmem>>, vector<1x1x64x64xbf16>
    %35 = vector.shape_cast %34 : vector<1x1x64x64xbf16> to vector<64x64xbf16>
    %cst_27 = arith.constant dense<0.000000e+00> : vector<256x64xf32>
    %36 = tpu.matmul %33, %35, %cst_27 {dimension_numbers = #tpu.dot_dimension_numbers<[1], [0], [0], [1], [0, 0, 1, 1], [], []>} : vector<256x64xbf16>, vector<64x64xbf16>, vector<256x64xf32> -> vector<256x64xf32>
    %37 = arith.addf %30, %36 : vector<256x64xf32>
    %c1_28 = arith.constant 1 : index
    %c0_29 = arith.constant 0 : index
    %c0_30 = arith.constant 0 : index
    %38 = vector.load %arg8[%c1_28, %c0_29, %c0_30] : memref<18x18x64xf32, #tpu.memory_space<vmem>>, vector<16x16x64xf32>
    %39 = vector.shape_cast %38 : vector<16x16x64xf32> to vector<256x64xf32>
    %40 = arith.truncf %39 : vector<256x64xf32> to vector<256x64xbf16>
    %c0_31 = arith.constant 0 : index
    %c3 = arith.constant 3 : index
    %c0_32 = arith.constant 0 : index
    %c0_33 = arith.constant 0 : index
    %41 = vector.load %arg3[%c0_31, %c3, %c0_32, %c0_33] : memref<1x9x64x64xbf16, #tpu.memory_space<vmem>>, vector<1x1x64x64xbf16>
    %42 = vector.shape_cast %41 : vector<1x1x64x64xbf16> to vector<64x64xbf16>
    %cst_34 = arith.constant dense<0.000000e+00> : vector<256x64xf32>
    %43 = tpu.matmul %40, %42, %cst_34 {dimension_numbers = #tpu.dot_dimension_numbers<[1], [0], [0], [1], [0, 0, 1, 1], [], []>} : vector<256x64xbf16>, vector<64x64xbf16>, vector<256x64xf32> -> vector<256x64xf32>
    %44 = arith.addf %37, %43 : vector<256x64xf32>
    %c1_35 = arith.constant 1 : index
    %c1_36 = arith.constant 1 : index
    %c0_37 = arith.constant 0 : index
    %45 = vector.load %arg8[%c1_35, %c1_36, %c0_37] : memref<18x18x64xf32, #tpu.memory_space<vmem>>, vector<16x16x64xf32>
    %46 = vector.shape_cast %45 : vector<16x16x64xf32> to vector<256x64xf32>
    %47 = arith.truncf %46 : vector<256x64xf32> to vector<256x64xbf16>
    %c0_38 = arith.constant 0 : index
    %c4 = arith.constant 4 : index
    %c0_39 = arith.constant 0 : index
    %c0_40 = arith.constant 0 : index
    %48 = vector.load %arg3[%c0_38, %c4, %c0_39, %c0_40] : memref<1x9x64x64xbf16, #tpu.memory_space<vmem>>, vector<1x1x64x64xbf16>
    %49 = vector.shape_cast %48 : vector<1x1x64x64xbf16> to vector<64x64xbf16>
    %cst_41 = arith.constant dense<0.000000e+00> : vector<256x64xf32>
    %50 = tpu.matmul %47, %49, %cst_41 {dimension_numbers = #tpu.dot_dimension_numbers<[1], [0], [0], [1], [0, 0, 1, 1], [], []>} : vector<256x64xbf16>, vector<64x64xbf16>, vector<256x64xf32> -> vector<256x64xf32>
    %51 = arith.addf %44, %50 : vector<256x64xf32>
    %c1_42 = arith.constant 1 : index
    %c2_43 = arith.constant 2 : index
    %c0_44 = arith.constant 0 : index
    %52 = vector.load %arg8[%c1_42, %c2_43, %c0_44] : memref<18x18x64xf32, #tpu.memory_space<vmem>>, vector<16x16x64xf32>
    %53 = vector.shape_cast %52 : vector<16x16x64xf32> to vector<256x64xf32>
    %54 = arith.truncf %53 : vector<256x64xf32> to vector<256x64xbf16>
    %c0_45 = arith.constant 0 : index
    %c5 = arith.constant 5 : index
    %c0_46 = arith.constant 0 : index
    %c0_47 = arith.constant 0 : index
    %55 = vector.load %arg3[%c0_45, %c5, %c0_46, %c0_47] : memref<1x9x64x64xbf16, #tpu.memory_space<vmem>>, vector<1x1x64x64xbf16>
    %56 = vector.shape_cast %55 : vector<1x1x64x64xbf16> to vector<64x64xbf16>
    %cst_48 = arith.constant dense<0.000000e+00> : vector<256x64xf32>
    %57 = tpu.matmul %54, %56, %cst_48 {dimension_numbers = #tpu.dot_dimension_numbers<[1], [0], [0], [1], [0, 0, 1, 1], [], []>} : vector<256x64xbf16>, vector<64x64xbf16>, vector<256x64xf32> -> vector<256x64xf32>
    %58 = arith.addf %51, %57 : vector<256x64xf32>
    %c2_49 = arith.constant 2 : index
    %c0_50 = arith.constant 0 : index
    %c0_51 = arith.constant 0 : index
    %59 = vector.load %arg8[%c2_49, %c0_50, %c0_51] : memref<18x18x64xf32, #tpu.memory_space<vmem>>, vector<16x16x64xf32>
    %60 = vector.shape_cast %59 : vector<16x16x64xf32> to vector<256x64xf32>
    %61 = arith.truncf %60 : vector<256x64xf32> to vector<256x64xbf16>
    %c0_52 = arith.constant 0 : index
    %c6 = arith.constant 6 : index
    %c0_53 = arith.constant 0 : index
    %c0_54 = arith.constant 0 : index
    %62 = vector.load %arg3[%c0_52, %c6, %c0_53, %c0_54] : memref<1x9x64x64xbf16, #tpu.memory_space<vmem>>, vector<1x1x64x64xbf16>
    %63 = vector.shape_cast %62 : vector<1x1x64x64xbf16> to vector<64x64xbf16>
    %cst_55 = arith.constant dense<0.000000e+00> : vector<256x64xf32>
    %64 = tpu.matmul %61, %63, %cst_55 {dimension_numbers = #tpu.dot_dimension_numbers<[1], [0], [0], [1], [0, 0, 1, 1], [], []>} : vector<256x64xbf16>, vector<64x64xbf16>, vector<256x64xf32> -> vector<256x64xf32>
    %65 = arith.addf %58, %64 : vector<256x64xf32>
    %c2_56 = arith.constant 2 : index
    %c1_57 = arith.constant 1 : index
    %c0_58 = arith.constant 0 : index
    %66 = vector.load %arg8[%c2_56, %c1_57, %c0_58] : memref<18x18x64xf32, #tpu.memory_space<vmem>>, vector<16x16x64xf32>
    %67 = vector.shape_cast %66 : vector<16x16x64xf32> to vector<256x64xf32>
    %68 = arith.truncf %67 : vector<256x64xf32> to vector<256x64xbf16>
    %c0_59 = arith.constant 0 : index
    %c7 = arith.constant 7 : index
    %c0_60 = arith.constant 0 : index
    %c0_61 = arith.constant 0 : index
    %69 = vector.load %arg3[%c0_59, %c7, %c0_60, %c0_61] : memref<1x9x64x64xbf16, #tpu.memory_space<vmem>>, vector<1x1x64x64xbf16>
    %70 = vector.shape_cast %69 : vector<1x1x64x64xbf16> to vector<64x64xbf16>
    %cst_62 = arith.constant dense<0.000000e+00> : vector<256x64xf32>
    %71 = tpu.matmul %68, %70, %cst_62 {dimension_numbers = #tpu.dot_dimension_numbers<[1], [0], [0], [1], [0, 0, 1, 1], [], []>} : vector<256x64xbf16>, vector<64x64xbf16>, vector<256x64xf32> -> vector<256x64xf32>
    %72 = arith.addf %65, %71 : vector<256x64xf32>
    %c2_63 = arith.constant 2 : index
    %c2_64 = arith.constant 2 : index
    %c0_65 = arith.constant 0 : index
    %73 = vector.load %arg8[%c2_63, %c2_64, %c0_65] : memref<18x18x64xf32, #tpu.memory_space<vmem>>, vector<16x16x64xf32>
    %74 = vector.shape_cast %73 : vector<16x16x64xf32> to vector<256x64xf32>
    %75 = arith.truncf %74 : vector<256x64xf32> to vector<256x64xbf16>
    %c0_66 = arith.constant 0 : index
    %c8 = arith.constant 8 : index
    %c0_67 = arith.constant 0 : index
    %c0_68 = arith.constant 0 : index
    %76 = vector.load %arg3[%c0_66, %c8, %c0_67, %c0_68] : memref<1x9x64x64xbf16, #tpu.memory_space<vmem>>, vector<1x1x64x64xbf16>
    %77 = vector.shape_cast %76 : vector<1x1x64x64xbf16> to vector<64x64xbf16>
    %cst_69 = arith.constant dense<0.000000e+00> : vector<256x64xf32>
    %78 = tpu.matmul %75, %77, %cst_69 {dimension_numbers = #tpu.dot_dimension_numbers<[1], [0], [0], [1], [0, 0, 1, 1], [], []>} : vector<256x64xbf16>, vector<64x64xbf16>, vector<256x64xf32> -> vector<256x64xf32>
    %79 = arith.addf %72, %78 : vector<256x64xf32>
    %cst_70 = arith.constant dense<0.000000e+00> : vector<64xf32>
    %80 = vector.multi_reduction <add>, %79, %cst_70 [0] : vector<256x64xf32> to vector<64xf32>
    %81 = vector.shape_cast %80 : vector<64xf32> to vector<1x64xf32>
    %82 = arith.mulf %79, %79 : vector<256x64xf32>
    %cst_71 = arith.constant dense<0.000000e+00> : vector<64xf32>
    %83 = vector.multi_reduction <add>, %82, %cst_71 [0] : vector<256x64xf32> to vector<64xf32>
    %84 = vector.shape_cast %83 : vector<64xf32> to vector<1x64xf32>
    %85 = tpu.concatenate %81, %84 in 0 : vector<1x64xf32>, vector<1x64xf32> -> vector<2x64xf32>
    %c0_72 = arith.constant 0 : index
    %c0_73 = arith.constant 0 : index
    %86 = vector.load %arg5[%c0_72, %c0_73] : memref<64x8xf32, #tpu.memory_space<vmem>>, vector<64x8xf32>
    %cst_74 = arith.constant dense<0.000000e+00> : vector<2x8xf32>
    %87 = tpu.matmul %85, %86, %cst_74 {dimension_numbers = #tpu.dot_dimension_numbers<[1], [0], [0], [1], [0, 0, 1, 1], [], []>} : vector<2x64xf32>, vector<64x8xf32>, vector<2x8xf32> -> vector<2x8xf32>
    %88 = vector.extract_strided_slice %87 {offsets = [0, 0], sizes = [1, 8], strides = [1, 1]} : vector<2x8xf32> to vector<1x8xf32>
    %89 = vector.extract_strided_slice %87 {offsets = [1, 0], sizes = [1, 8], strides = [1, 1]} : vector<2x8xf32> to vector<1x8xf32>
    %90 = arith.mulf %88, %88 : vector<1x8xf32>
    %91 = arith.subf %89, %90 : vector<1x8xf32>
    %cst_75 = arith.constant 0.000000e+00 : f32
    %92 = vector.broadcast %cst_75 : f32 to vector<1x8xf32>
    %93 = arith.maximumf %91, %92 : vector<1x8xf32>
    %cst_76 = arith.constant 9.99999974E-6 : f32
    %94 = vector.broadcast %cst_76 : f32 to vector<1x8xf32>
    %95 = arith.addf %93, %94 : vector<1x8xf32>
    %96 = math.rsqrt %95 : vector<1x8xf32>
    %97 = tpu.concatenate %88, %96 in 0 : vector<1x8xf32>, vector<1x8xf32> -> vector<2x8xf32>
    %c0_77 = arith.constant 0 : index
    %c0_78 = arith.constant 0 : index
    %98 = vector.load %arg6[%c0_77, %c0_78] : memref<8x64xf32, #tpu.memory_space<vmem>>, vector<8x64xf32>
    %cst_79 = arith.constant dense<0.000000e+00> : vector<2x64xf32>
    %99 = tpu.matmul %97, %98, %cst_79 {dimension_numbers = #tpu.dot_dimension_numbers<[1], [0], [0], [1], [0, 0, 1, 1], [], []>} : vector<2x8xf32>, vector<8x64xf32>, vector<2x64xf32> -> vector<2x64xf32>
    %100 = vector.extract_strided_slice %99 {offsets = [1, 0], sizes = [1, 64], strides = [1, 1]} : vector<2x64xf32> to vector<1x64xf32>
    %c0_80 = arith.constant 0 : index
    %c0_81 = arith.constant 0 : index
    %c0_82 = arith.constant 0 : index
    %101 = vector.load %arg4[%c0_80, %c0_81, %c0_82] : memref<1x2x64xf32, #tpu.memory_space<vmem>>, vector<1x1x64xf32>
    %102 = vector.shape_cast %101 : vector<1x1x64xf32> to vector<1x64xf32>
    %103 = arith.mulf %100, %102 : vector<1x64xf32>
    %c0_83 = arith.constant 0 : index
    %c1_84 = arith.constant 1 : index
    %c0_85 = arith.constant 0 : index
    %104 = vector.load %arg4[%c0_83, %c1_84, %c0_85] : memref<1x2x64xf32, #tpu.memory_space<vmem>>, vector<1x1x64xf32>
    %105 = vector.shape_cast %104 : vector<1x1x64xf32> to vector<1x64xf32>
    %106 = vector.extract_strided_slice %99 {offsets = [0, 0], sizes = [1, 64], strides = [1, 1]} : vector<2x64xf32> to vector<1x64xf32>
    %107 = arith.mulf %106, %103 : vector<1x64xf32>
    %108 = arith.subf %105, %107 : vector<1x64xf32>
    %109 = vector.broadcast %103 : vector<1x64xf32> to vector<256x64xf32>
    %110 = arith.mulf %79, %109 : vector<256x64xf32>
    %111 = vector.broadcast %108 : vector<1x64xf32> to vector<256x64xf32>
    %112 = arith.addf %110, %111 : vector<256x64xf32>
    %c2_i32_86 = arith.constant 2 : i32
    %113 = arith.cmpi sge, %arg1, %c2_i32_86 : i32
    %c2_i32_87 = arith.constant 2 : i32
    %c0_i32_88 = arith.constant 0 : i32
    %114 = arith.cmpi eq, %c2_i32_87, %c0_i32_88 : i32
    %c1_i32_89 = arith.constant 1 : i32
    %115 = arith.select %114, %c1_i32_89, %c2_i32_87 : i32
    %116 = arith.remsi %arg1, %115 : i32
    %c0_i32_90 = arith.constant 0 : i32
    %117 = arith.cmpi ne, %116, %c0_i32_90 : i32
    %c0_i32_91 = arith.constant 0 : i32
    %118 = arith.cmpi slt, %116, %c0_i32_91 : i32
    %c0_i32_92 = arith.constant 0 : i32
    %119 = arith.cmpi slt, %115, %c0_i32_92 : i32
    %120 = arith.xori %118, %119 : i1
    %121 = arith.andi %120, %117 : i1
    %122 = arith.addi %116, %115 : i32
    %123 = arith.select %121, %122, %116 : i32
    %c0_i32_93 = arith.constant 0 : i32
    %124 = arith.cmpi eq, %123, %c0_i32_93 : i32
    %125 = arith.andi %113, %124 : i1
    %c0_94 = arith.constant 0 : index
    %c0_95 = arith.constant 0 : index
    %126 = vector.load %arg9[%c0_94, %c0_95] : memref<256x64xf32, #tpu.memory_space<vmem>>, vector<256x64xf32>
    %127 = arith.addf %112, %126 : vector<256x64xf32>
    %128 = arith.select %125, %127, %112 : vector<256x64xf32>
    %cst_96 = arith.constant 0.000000e+00 : f32
    %129 = vector.broadcast %cst_96 : f32 to vector<256x64xf32>
    %130 = arith.maximumf %128, %129 : vector<256x64xf32>
    %131 = vector.shape_cast %130 : vector<256x64xf32> to vector<16x16x64xf32>
    %c1_97 = arith.constant 1 : index
    %c1_98 = arith.constant 1 : index
    %c0_99 = arith.constant 0 : index
    %132 = vector.load %arg8[%c1_97, %c1_98, %c0_99] : memref<18x18x64xf32, #tpu.memory_space<vmem>>, vector<16x16x64xf32>
    tpu.vector_store %arg8[%c1_97, %c1_98, %c0_99], %131 {strides = array<i32>} : memref<18x18x64xf32, #tpu.memory_space<vmem>>, vector<16x16x64xf32>,
    %c64_i32 = arith.constant 64 : i32
    %133 = arith.cmpi eq, %arg1, %c64_i32 : i32
    %134 = arith.extui %133 : i1 to i32
    %c0_i32_100 = arith.constant 0 : i32
    %135 = arith.cmpi ne, %134, %c0_i32_100 : i32
    scf.if %135 {
      %136 = vector.shape_cast %130 : vector<256x64xf32> to vector<16x16x64xf32>
      %c0_101 = arith.constant 0 : index
      %c0_102 = arith.constant 0 : index
      %c0_103 = arith.constant 0 : index
      %c0_104 = arith.constant 0 : index
      %137 = vector.load %arg7[%c0_101, %c0_102, %c0_103, %c0_104] : memref<1x16x16x64xf32, #tpu.memory_space<vmem>>, vector<1x16x16x64xf32>
      %138 = vector.shape_cast %137 : vector<1x16x16x64xf32> to vector<16x16x64xf32>
      %139 = vector.shape_cast %136 : vector<16x16x64xf32> to vector<1x16x16x64xf32>
      tpu.vector_store %arg7[%c0_101, %c0_102, %c0_103, %c0_104], %139 {strides = array<i32>} : memref<1x16x16x64xf32, #tpu.memory_space<vmem>>, vector<1x16x16x64xf32>,
    } else {
    }
    return
  }
  func.func @transform_0(%arg0: i32, %arg1: i32) -> (i32, i32, i32, i32) {
    %c0_i32 = arith.constant 0 : i32
    %c0_i32_0 = arith.constant 0 : i32
    %c0_i32_1 = arith.constant 0 : i32
    %c0_i32_2 = arith.constant 0 : i32
    return %arg0, %c0_i32, %c0_i32_0, %c0_i32_1 : i32, i32, i32, i32
  }
  func.func @transform_1(%arg0: i32, %arg1: i32) -> (i32, i32, i32, i32) {
    %c0_i32 = arith.constant 0 : i32
    %c0_i32_0 = arith.constant 0 : i32
    %c0_i32_1 = arith.constant 0 : i32
    %c0_i32_2 = arith.constant 0 : i32
    return %arg1, %c0_i32, %c0_i32_0, %c0_i32_1 : i32, i32, i32, i32
  }
  func.func @transform_2(%arg0: i32, %arg1: i32) -> (i32, i32, i32) {
    %c0_i32 = arith.constant 0 : i32
    %c0_i32_0 = arith.constant 0 : i32
    %c0_i32_1 = arith.constant 0 : i32
    return %arg1, %c0_i32, %c0_i32_0 : i32, i32, i32
  }
  func.func @transform_3(%arg0: i32, %arg1: i32) -> (i32, i32) {
    %c0_i32 = arith.constant 0 : i32
    %c0_i32_0 = arith.constant 0 : i32
    %c0_i32_1 = arith.constant 0 : i32
    return %c0_i32, %c0_i32_0 : i32, i32
  }
  func.func @transform_4(%arg0: i32, %arg1: i32) -> (i32, i32) {
    %c0_i32 = arith.constant 0 : i32
    %c0_i32_0 = arith.constant 0 : i32
    %c0_i32_1 = arith.constant 0 : i32
    return %c0_i32, %c0_i32_0 : i32, i32
  }
  func.func @transform_5(%arg0: i32, %arg1: i32) -> (i32, i32, i32, i32) {
    %c0_i32 = arith.constant 0 : i32
    %c0_i32_0 = arith.constant 0 : i32
    %c0_i32_1 = arith.constant 0 : i32
    %c0_i32_2 = arith.constant 0 : i32
    return %arg0, %c0_i32, %c0_i32_0, %c0_i32_1 : i32, i32, i32, i32
  }
}

</mosaic_0001>

<llo_original>
// kernel: feature_get_forward.1
$region0: #{feature_get_forward.1}
  #allocation0 [shape = 'u32[]', space=smem, size = 0x4, offset = 0x4, fixed_abs, tag = 'smem constant byte address 0x4 - core index']
  #allocation1 [shape = 'u32[144,128]{1,0:T(1,128)}', space=vmem, size = 0x12000, scoped, tag = 'internal scratch']
  #allocation2 [shape = 'f32[18,18,64]{2,1,0:T(8,128)}', space=vmem, size = 0x36000, scoped, tag = 'scratch operand']
  #allocation3 [shape = 'f32[256,64]{1,0:T(8,128)}', space=vmem, size = 0x20000, scoped, tag = 'scratch operand']
  %s0 = inlined_call_operand.vmem [shape: f32[2,18,18,64], index: 0, kind: input, shape index: {}]
  %s1 = inlined_call_operand.vmem [shape: bf16[65,9,64,64], index: 1, kind: input, shape index: {}]
  %s2 = inlined_call_operand.vmem [shape: f32[65,2,64], index: 2, kind: input, shape index: {}]
  %s3 = inlined_call_operand.vmem [shape: f32[64,8], index: 3, kind: input, shape index: {}]
  %s4 = inlined_call_operand.vmem [shape: f32[8,64], index: 4, kind: input, shape index: {}]
  %s5 = inlined_call_operand.hbm [shape: f32[2,16,16,64], index: 5, kind: output, shape index: {}]
  %s6 = sld [smem:[#allocation0]]
  $region65: #{feature_get_forward.1} parent=0
    _
  %s8 = ssub.s32 1, %s6
  %s9 = scalar_select 0, %s8, %s6
  $region1: #{feature_get_forward.1} parent=0
    #allocation4 [shape = 'u8[262144]{0}', space=vmem, size = 0x40000, scoped, tag = 'output window, operand 0']
    #allocation5 [shape = 's32[2]{0}', space=sflag, size = 0x8, scoped, tag = 'scoped memory for feature_get_forward.1']
    %10 = vsyncpa [#allocation5], 0
    %s11 = scalar_lea.sflag [#allocation5], 1
    %12 = vsyncpa %s11, 0
    loop: start=0, step=1, limit=132
    $region2: #{feature_get_forward.1} parent=1 // loop_pre_header
      _
    $region3: #{feature_get_forward.1} parent=1 // loop_header
      %s14 = sphi 0, %s18
      %p15 = scmp.ge.s32.totalorder %s14, 132
      %s21 = sphi 0, %s33
      %s22 = sphi 0, %s29
      %s23 = sphi 0, %s21
      %s24 = sphi 0, %s22
      %s25 = sphi 0, %s23
      %s26 = sphi 0, %s24
      %s36 = sphi 0, %s38
      %s39 = sphi 0, %s36
      %s40 = sphi 0, %s39
      %s56 = sphi 0, %s40
      %s62 = sphi 0, %s64
      %s65 = sphi 0, %s62
      %s66 = sphi 0, %s65
      %s82 = sphi 0, %s66
      %s88 = sphi 0, %s90
      %s91 = sphi 0, %s88
      %s92 = sphi 0, %s91
      %s108 = sphi 0, %s92
      %s112 = sphi 0, %s112
      %s114 = sphi 0, %s112
      %s115 = sphi 0, %s114
      %s129 = sphi 0, %s115
      %s133 = sphi 0, %s133
      %s135 = sphi 0, %s133
      %s136 = sphi 0, %s135
      %s150 = sphi 0, %s136
      %s156 = sphi 0, %s158
      %s159 = sphi 0, %s156
      %s160 = sphi 0, %s159
      %s176 = sphi 0, %s160
    $region4: #{feature_get_forward.1} parent=1 // loop_header_branch
      %17 = sbr.rel (%p15) target = $region8
    $region5: #{feature_get_forward.1} parent=1 // loop_body
      %s19 = ssub.s32 %s14, 1
      %s20 = ssub.s32 %s14, 2
      %s27 = sadd.s32 1, %s22
      %p28 = scmp.ge.s32.totalorder %s27, 65
      %s29 = scalar_select %p28, 0, %s27
      %s30 = sadd.s32 1, %s21
      %s31 = scalar_select %p28, %s30, %s21
      %p32 = scmp.ge.s32.totalorder %s31, 2
      %s33 = scalar_select %p32, 0, %s31
      %s34 = ssub.s32 %s21, %s33
      %p35 = scmp.eq.s32.totalorder %s34, 0
      %s37 = sadd.s32 %s36, 1
      %s38 = scalar_select %p35, %s36, %s37
      %p41 = pneg %p35
      %p42 = scmp.eq.s32.totalorder %s14, 129
      %p43 = por %p41, %p42
      %p44 = scmp.ne.s32.totalorder %s36, %s39
      %p45 = scmp.eq.s32.totalorder %s14, 0
      %p46 = por %p44, %p45
      %p47 = scmp.ne.s32.totalorder %s36, %s39
      %p48 = scmp.eq.s32.totalorder %s19, 129
      %p49 = por %p47, %p48
      %p50 = scmp.ne.s32.totalorder %s39, %s40
      %p51 = scmp.eq.s32.totalorder %s19, 0
      %p52 = por %p50, %p51
      %p53 = scmp.ne.s32.totalorder %s39, %s40
      %p54 = scmp.eq.s32.totalorder %s20, 129
      %p55 = por %p53, %p54
      %p57 = scmp.ne.s32.totalorder %s40, %s56
      %p58 = scmp.eq.s32.totalorder %s20, 0
      %p59 = por %p57, %p58
      %s60 = ssub.s32 %s22, %s29
      %p61 = scmp.eq.s32.totalorder %s60, 0
      %s63 = sadd.s32 %s62, 1
      %s64 = scalar_select %p61, %s62, %s63
      %p67 = pneg %p61
      %p68 = scmp.eq.s32.totalorder %s14, 129
      %p69 = por %p67, %p68
      %p70 = scmp.ne.s32.totalorder %s62, %s65
      %p71 = scmp.eq.s32.totalorder %s14, 0
      %p72 = por %p70, %p71
      %p73 = scmp.ne.s32.totalorder %s62, %s65
      %p74 = scmp.eq.s32.totalorder %s19, 129
      %p75 = por %p73, %p74
      %p76 = scmp.ne.s32.totalorder %s65, %s66
      %p77 = scmp.eq.s32.totalorder %s19, 0
      %p78 = por %p76, %p77
      %p79 = scmp.ne.s32.totalorder %s65, %s66
      %p80 = scmp.eq.s32.totalorder %s20, 129
      %p81 = por %p79, %p80
      %p83 = scmp.ne.s32.totalorder %s66, %s82
      %p84 = scmp.eq.s32.totalorder %s20, 0
      %p85 = por %p83, %p84
      %s86 = ssub.s32 %s22, %s29
      %p87 = scmp.eq.s32.totalorder %s86, 0
      %s89 = sadd.s32 %s88, 1
      %s90 = scalar_select %p87, %s88, %s89
      %p93 = pneg %p87
      %p94 = scmp.eq.s32.totalorder %s14, 129
      %p95 = por %p93, %p94
      %p96 = scmp.ne.s32.totalorder %s88, %s91
      %p97 = scmp.eq.s32.totalorder %s14, 0
      %p98 = por %p96, %p97
      %p99 = scmp.ne.s32.totalorder %s88, %s91
      %p100 = scmp.eq.s32.totalorder %s19, 129
      %p101 = por %p99, %p100
      %p102 = scmp.ne.s32.totalorder %s91, %s92
      %p103 = scmp.eq.s32.totalorder %s19, 0
      %p104 = por %p102, %p103
      %p105 = scmp.ne.s32.totalorder %s91, %s92
      %p106 = scmp.eq.s32.totalorder %s20, 129
      %p107 = por %p105, %p106
      %p109 = scmp.ne.s32.totalorder %s92, %s108
      %p110 = scmp.eq.s32.totalorder %s20, 0
      %p111 = por %p109, %p110
      %s113 = sadd.s32 %s112, 1
      %p116 = scmp.eq.s32.totalorder %s14, 129
      %p117 = scmp.ne.s32.totalorder %s112, %s114
      %p118 = scmp.eq.s32.totalorder %s14, 0
      %p119 = por %p117, %p118
      %p120 = scmp.ne.s32.totalorder %s112, %s114
      %p121 = scmp.eq.s32.totalorder %s19, 129
      %p122 = por %p120, %p121
      %p123 = scmp.ne.s32.totalorder %s114, %s115
      %p124 = scmp.eq.s32.totalorder %s19, 0
      %p125 = por %p123, %p124
      %p126 = scmp.ne.s32.totalorder %s114, %s115
      %p127 = scmp.eq.s32.totalorder %s20, 129
      %p128 = por %p126, %p127
      %p130 = scmp.ne.s32.totalorder %s115, %s129
      %p131 = scmp.eq.s32.totalorder %s20, 0
      %p132 = por %p130, %p131
      %s134 = sadd.s32 %s133, 1
      %p137 = scmp.eq.s32.totalorder %s14, 129
      %p138 = scmp.ne.s32.totalorder %s133, %s135
      %p139 = scmp.eq.s32.totalorder %s14, 0
      %p140 = por %p138, %p139
      %p141 = scmp.ne.s32.totalorder %s133, %s135
      %p142 = scmp.eq.s32.totalorder %s19, 129
      %p143 = por %p141, %p142
      %p144 = scmp.ne.s32.totalorder %s135, %s136
      %p145 = scmp.eq.s32.totalorder %s19, 0
      %p146 = por %p144, %p145
      %p147 = scmp.ne.s32.totalorder %s135, %s136
      %p148 = scmp.eq.s32.totalorder %s20, 129
      %p149 = por %p147, %p148
      %p151 = scmp.ne.s32.totalorder %s136, %s150
      %p152 = scmp.eq.s32.totalorder %s20, 0
      %p153 = por %p151, %p152
      %s154 = ssub.s32 %s21, %s33
      %p155 = scmp.eq.s32.totalorder %s154, 0
      %s157 = sadd.s32 %s156, 1
      %s158 = scalar_select %p155, %s156, %s157
      %p161 = pneg %p155
      %p162 = scmp.eq.s32.totalorder %s14, 129
      %p163 = por %p161, %p162
      %p164 = scmp.ne.s32.totalorder %s156, %s159
      %p165 = scmp.eq.s32.totalorder %s14, 0
      %p166 = por %p164, %p165
      %p167 = scmp.ne.s32.totalorder %s156, %s159
      %p168 = scmp.eq.s32.totalorder %s19, 129
      %p169 = por %p167, %p168
      %p170 = scmp.ne.s32.totalorder %s159, %s160
      %p171 = scmp.eq.s32.totalorder %s19, 0
      %p172 = por %p170, %p171
      %p173 = scmp.ne.s32.totalorder %s159, %s160
      %p174 = scmp.eq.s32.totalorder %s20, 129
      %p175 = por %p173, %p174
      %p177 = scmp.ne.s32.totalorder %s160, %s176
      %p178 = scmp.eq.s32.totalorder %s20, 0
      %p179 = por %p177, %p178
      %p180 = scmp.le.s32.totalorder 1, %s14
      %p181 = scmp.lt.s32.totalorder %s14, 131
      %p182 = pnand %p180, %p181
      %p183 = pneg %p182
      // Predicated region
      $region9: #{feature_get_forward.1} parent=5 // pred_check
        _
      $region10: #{feature_get_forward.1} parent=5 // pred_check_branch
        %185 = sbr.rel (%p182) target = $region12
      $region11: #{feature_get_forward.1} parent=5 // pred_region
        %s186 = ssub.s32 %s14, 1
        // Predicated region
        $region13: #{feature_get_forward.1} parent=11 // pred_check
          %p187 = pneg %p125
        $region14: #{feature_get_forward.1} parent=11 // pred_check_branch
          %189 = sbr.rel (%p187) target = $region16
        $region15: #{feature_get_forward.1} parent=11 // pred_region
          _
        $region16: #{feature_get_forward.1} parent=11 // pred_fallthru
          _
        // Predicated region
        $region17: #{feature_get_forward.1} parent=11 // pred_check
          %p190 = pneg %p146
        $region18: #{feature_get_forward.1} parent=11 // pred_check_branch
          %192 = sbr.rel (%p190) target = $region20
        $region19: #{feature_get_forward.1} parent=11 // pred_region
          _
        $region20: #{feature_get_forward.1} parent=11 // pred_fallthru
          _
      $region12: #{feature_get_forward.1} parent=5 // pred_fallthru
        _
      %p193 = scmp.lt.s32.totalorder %s14, 130
      // Predicated region
      $region21: #{feature_get_forward.1} parent=5 // pred_check
        %p194 = pneg %p193
      $region22: #{feature_get_forward.1} parent=5 // pred_check_branch
        %196 = sbr.rel (%p194) target = $region24
      $region23: #{feature_get_forward.1} parent=5 // pred_region
        // Predicated region
        $region25: #{feature_get_forward.1} parent=23 // pred_check
          %p197 = pneg %p46
        $region26: #{feature_get_forward.1} parent=23 // pred_check_branch
          %199 = sbr.rel (%p197) target = $region28
        $region27: #{feature_get_forward.1} parent=23 // pred_region
          %p200 = scmp.lt.s32.totalorder %s21, 1
          %s201 = scalar_select %p200, %s21, 1
          %s202 = smul.addr %s201, 54
          %s203 = smul.addr %s202, 8
          %s204 = scalar_lea.vmem %s0, %s203
        $region28: #{feature_get_forward.1} parent=23 // pred_fallthru
          _
        // Predicated region
        $region29: #{feature_get_forward.1} parent=23 // pred_check
          %p205 = pneg %p72
        $region30: #{feature_get_forward.1} parent=23 // pred_check_branch
          %207 = sbr.rel (%p205) target = $region32
        $region31: #{feature_get_forward.1} parent=23 // pred_region
          %p208 = scmp.lt.s32.totalorder %s22, 64
          %s209 = scalar_select %p208, %s22, 64
          %s210 = smul.addr %s209, 72
          %s211 = smul.addr %s210, 4
          %s212 = scalar_lea.vmem %s1, %s211
        $region32: #{feature_get_forward.1} parent=23 // pred_fallthru
          _
        // Predicated region
        $region33: #{feature_get_forward.1} parent=23 // pred_check
          %p213 = pneg %p98
        $region34: #{feature_get_forward.1} parent=23 // pred_check_branch
          %215 = sbr.rel (%p213) target = $region36
        $region35: #{feature_get_forward.1} parent=23 // pred_region
          %p216 = scmp.lt.s32.totalorder %s22, 64
          %s217 = scalar_select %p216, %s22, 64
          %s218 = smul.addr %s217, 2
          %s219 = scalar_lea.vmem %s2, %s218
        $region36: #{feature_get_forward.1} parent=23 // pred_fallthru
          _
      $region24: #{feature_get_forward.1} parent=5 // pred_fallthru
        _
      %p220 = scmp.le.s32.totalorder 1, %s14
      %p221 = scmp.lt.s32.totalorder %s14, 131
      %p222 = pnand %p220, %p221
      %p223 = pneg %p222
      // Predicated region
      $region37: #{feature_get_forward.1} parent=5 // pred_check
        _
      $region38: #{feature_get_forward.1} parent=5 // pred_check_branch
        %225 = sbr.rel (%p222) target = $region40
      $region39: #{feature_get_forward.1} parent=5 // pred_region
        %s226 = ssub.s32 %s14, 1
        %p227 = scmp.lt.s32.totalorder %s23, 1
        %s228 = scalar_select %p227, %s23, 1
        %s229 = smul.addr %s228, 54
        %s230 = smul.addr %s229, 8
        %s231 = scalar_lea.vmem %s0, %s230
        %p232 = pneg %p52
        %p233 = pneg %p49
        %p234 = scmp.lt.s32.totalorder %s24, 64
        %s235 = scalar_select %p234, %s24, 64
        %s236 = smul.addr %s235, 72
        %s237 = smul.addr %s236, 4
        %s238 = scalar_lea.vmem %s1, %s237
        %p239 = pneg %p78
        %p240 = pneg %p75
        %p241 = scmp.lt.s32.totalorder %s24, 64
        %s242 = scalar_select %p241, %s24, 64
        %s243 = smul.addr %s242, 2
        %s244 = scalar_lea.vmem %s2, %s243
        %p245 = pneg %p104
        %p246 = pneg %p101
        %p247 = pneg %p125
        %p248 = pneg %p122
        %p249 = pneg %p146
        %p250 = pneg %p143
        %p251 = pneg %p172
        %p252 = pneg %p169
        %s253 = sand.u32 %s159, 1
        %s254 = scalar_lea.sflag [#allocation5], %s253
        %s255 = sand.u32 %s159, 1
        %s256 = smul.addr %s255, 256
        %s257 = scalar_lea.vmem [#allocation4], %s256
        %p258 = scmp.lt.s32.totalorder %s23, 1
        %s259 = scalar_select %p258, %s23, 1
        %s260 = smul.addr %s259, 54
        %s261 = smul.addr %s260, 8
        %s262 = scalar_lea.vmem %s0, %s261
        %p263 = scmp.lt.s32.totalorder %s24, 64
        %s264 = scalar_select %p263, %s24, 64
        %s265 = smul.addr %s264, 72
        %s266 = smul.addr %s265, 4
        %s267 = scalar_lea.vmem %s1, %s266
        %p268 = scmp.lt.s32.totalorder %s24, 64
        %s269 = scalar_select %p268, %s24, 64
        %s270 = smul.addr %s269, 2
        %s271 = scalar_lea.vmem %s2, %s270
        %p273 = scmp.eq.s32.totalorder %s24, 0
        // Predicated region
        $region41: #{feature_get_forward.1} parent=39 // pred_check
          %p274 = pneg %p273
        $region42: #{feature_get_forward.1} parent=39 // pred_check_branch
          %276 = sbr.rel (%p274) target = $region44
        $region43: #{feature_get_forward.1} parent=39 // pred_region
          %v277 = vld [vmem:[%s262] sm:$0xff]
          %v278 = vld [vmem:[%s262 + $0x8] sm:$0xff]
          %v279 = vld [vmem:[%s262 + $0x10] sm:$0x3]
          %v280 = vld [vmem:[%s262 + $0x18] sm:$0xff]
          %v281 = vld [vmem:[%s262 + $0x20] sm:$0xff]
          %v282 = vld [vmem:[%s262 + $0x28] sm:$0x3]
          %v283 = vld [vmem:[%s262 + $0x30] sm:$0xff]
          %v284 = vld [vmem:[%s262 + $0x38] sm:$0xff]
          %v285 = vld [vmem:[%s262 + $0x40] sm:$0x3]
          %v286 = vld [vmem:[%s262 + $0x48] sm:$0xff]
          %v287 = vld [vmem:[%s262 + $0x50] sm:$0xff]
          %v288 = vld [vmem:[%s262 + $0x58] sm:$0x3]
          %v289 = vld [vmem:[%s262 + $0x60] sm:$0xff]
          %v290 = vld [vmem:[%s262 + $0x68] sm:$0xff]
          %v291 = vld [vmem:[%s262 + $0x70] sm:$0x3]
          %v292 = vld [vmem:[%s262 + $0x78] sm:$0xff]
          %v293 = vld [vmem:[%s262 + $0x80] sm:$0xff]
          %v294 = vld [vmem:[%s262 + $0x88] sm:$0x3]
          %v295 = vld [vmem:[%s262 + $0x90] sm:$0xff]
          %v296 = vld [vmem:[%s262 + $0x98] sm:$0xff]
          %v297 = vld [vmem:[%s262 + $0xa0] sm:$0x3]
          %v298 = vld [vmem:[%s262 + $0xa8] sm:$0xff]
          %v299 = vld [vmem:[%s262 + $0xb0] sm:$0xff]
          %v300 = vld [vmem:[%s262 + $0xb8] sm:$0x3]
          %v301 = vld [vmem:[%s262 + $0xc0] sm:$0xff]
          %v302 = vld [vmem:[%s262 + $0xc8] sm:$0xff]
          %v303 = vld [vmem:[%s262 + $0xd0] sm:$0x3]
          %v304 = vld [vmem:[%s262 + $0xd8] sm:$0xff]
          %v305 = vld [vmem:[%s262 + $0xe0] sm:$0xff]
          %v306 = vld [vmem:[%s262 + $0xe8] sm:$0x3]
          %v307 = vld [vmem:[%s262 + $0xf0] sm:$0xff]
          %v308 = vld [vmem:[%s262 + $0xf8] sm:$0xff]
          %v309 = vld [vmem:[%s262 + $0x100] sm:$0x3]
          %v310 = vld [vmem:[%s262 + $0x108] sm:$0xff]
          %v311 = vld [vmem:[%s262 + $0x110] sm:$0xff]
          %v312 = vld [vmem:[%s262 + $0x118] sm:$0x3]
          %v313 = vld [vmem:[%s262 + $0x120] sm:$0xff]
          %v314 = vld [vmem:[%s262 + $0x128] sm:$0xff]
          %v315 = vld [vmem:[%s262 + $0x130] sm:$0x3]
          %v316 = vld [vmem:[%s262 + $0x138] sm:$0xff]
          %v317 = vld [vmem:[%s262 + $0x140] sm:$0xff]
          %v318 = vld [vmem:[%s262 + $0x148] sm:$0x3]
          %v319 = vld [vmem:[%s262 + $0x150] sm:$0xff]
          %v320 = vld [vmem:[%s262 + $0x158] sm:$0xff]
          %v321 = vld [vmem:[%s262 + $0x160] sm:$0x3]
          %v322 = vld [vmem:[%s262 + $0x168] sm:$0xff]
          %v323 = vld [vmem:[%s262 + $0x170] sm:$0xff]
          %v324 = vld [vmem:[%s262 + $0x178] sm:$0x3]
          %v325 = vld [vmem:[%s262 + $0x180] sm:$0xff]
          %v326 = vld [vmem:[%s262 + $0x188] sm:$0xff]
          %v327 = vld [vmem:[%s262 + $0x190] sm:$0x3]
          %v328 = vld [vmem:[%s262 + $0x198] sm:$0xff]
          %v329 = vld [vmem:[%s262 + $0x1a0] sm:$0xff]
          %v330 = vld [vmem:[%s262 + $0x1a8] sm:$0x3]
          %vm331 = vcmask 523264
          %332 = vst.msk [vmem:[#allocation2] sm:$0xff] %vm331, %v277
          %333 = vst.msk [vmem:[#allocation2 + $0x8] sm:$0xff] %vm331, %v278
          %vm334 = vcmask 517120
          %335 = vst.msk [vmem:[#allocation2 + $0x10] sm:$0x3] %vm334, %v279
          %336 = vst.msk [vmem:[#allocation2 + $0x18] sm:$0xff] %vm331, %v280
          %337 = vst.msk [vmem:[#allocation2 + $0x20] sm:$0xff] %vm331, %v281
          %338 = vst.msk [vmem:[#allocation2 + $0x28] sm:$0x3] %vm334, %v282
          %339 = vst.msk [vmem:[#allocation2 + $0x30] sm:$0xff] %vm331, %v283
          %340 = vst.msk [vmem:[#allocation2 + $0x38] sm:$0xff] %vm331, %v284
          %341 = vst.msk [vmem:[#allocation2 + $0x40] sm:$0x3] %vm334, %v285
          %342 = vst.msk [vmem:[#allocation2 + $0x48] sm:$0xff] %vm331, %v286
          %343 = vst.msk [vmem:[#allocation2 + $0x50] sm:$0xff] %vm331, %v287
          %344 = vst.msk [vmem:[#allocation2 + $0x58] sm:$0x3] %vm334, %v288
          %345 = vst.msk [vmem:[#allocation2 + $0x60] sm:$0xff] %vm331, %v289
          %346 = vst.msk [vmem:[#allocation2 + $0x68] sm:$0xff] %vm331, %v290
          %347 = vst.msk [vmem:[#allocation2 + $0x70] sm:$0x3] %vm334, %v291
          %348 = vst.msk [vmem:[#allocation2 + $0x78] sm:$0xff] %vm331, %v292
          %349 = vst.msk [vmem:[#allocation2 + $0x80] sm:$0xff] %vm331, %v293
          %350 = vst.msk [vmem:[#allocation2 + $0x88] sm:$0x3] %vm334, %v294
          %351 = vst.msk [vmem:[#allocation2 + $0x90] sm:$0xff] %vm331, %v295
          %352 = vst.msk [vmem:[#allocation2 + $0x98] sm:$0xff] %vm331, %v296
          %353 = vst.msk [vmem:[#allocation2 + $0xa0] sm:$0x3] %vm334, %v297
          %354 = vst.msk [vmem:[#allocation2 + $0xa8] sm:$0xff] %vm331, %v298
          %355 = vst.msk [vmem:[#allocation2 + $0xb0] sm:$0xff] %vm331, %v299
          %356 = vst.msk [vmem:[#allocation2 + $0xb8] sm:$0x3] %vm334, %v300
          %357 = vst.msk [vmem:[#allocation2 + $0xc0] sm:$0xff] %vm331, %v301
          %358 = vst.msk [vmem:[#allocation2 + $0xc8] sm:$0xff] %vm331, %v302
          %359 = vst.msk [vmem:[#allocation2 + $0xd0] sm:$0x3] %vm334, %v303
          %360 = vst.msk [vmem:[#allocation2 + $0xd8] sm:$0xff] %vm331, %v304
          %361 = vst.msk [vmem:[#allocation2 + $0xe0] sm:$0xff] %vm331, %v305
          %362 = vst.msk [vmem:[#allocation2 + $0xe8] sm:$0x3] %vm334, %v306
          %363 = vst.msk [vmem:[#allocation2 + $0xf0] sm:$0xff] %vm331, %v307
          %364 = vst.msk [vmem:[#allocation2 + $0xf8] sm:$0xff] %vm331, %v308
          %365 = vst.msk [vmem:[#allocation2 + $0x100] sm:$0x3] %vm334, %v309
          %366 = vst.msk [vmem:[#allocation2 + $0x108] sm:$0xff] %vm331, %v310
          %367 = vst.msk [vmem:[#allocation2 + $0x110] sm:$0xff] %vm331, %v311
          %368 = vst.msk [vmem:[#allocation2 + $0x118] sm:$0x3] %vm334, %v312
          %369 = vst.msk [vmem:[#allocation2 + $0x120] sm:$0xff] %vm331, %v313
          %370 = vst.msk [vmem:[#allocation2 + $0x128] sm:$0xff] %vm331, %v314
          %371 = vst.msk [vmem:[#allocation2 + $0x130] sm:$0x3] %vm334, %v315
          %372 = vst.msk [vmem:[#allocation2 + $0x138] sm:$0xff] %vm331, %v316
          %373 = vst.msk [vmem:[#allocation2 + $0x140] sm:$0xff] %vm331, %v317
          %374 = vst.msk [vmem:[#allocation2 + $0x148] sm:$0x3] %vm334, %v318
          %375 = vst.msk [vmem:[#allocation2 + $0x150] sm:$0xff] %vm331, %v319
          %376 = vst.msk [vmem:[#allocation2 + $0x158] sm:$0xff] %vm331, %v320
          %377 = vst.msk [vmem:[#allocation2 + $0x160] sm:$0x3] %vm334, %v321
          %378 = vst.msk [vmem:[#allocation2 + $0x168] sm:$0xff] %vm331, %v322
          %379 = vst.msk [vmem:[#allocation2 + $0x170] sm:$0xff] %vm331, %v323
          %380 = vst.msk [vmem:[#allocation2 + $0x178] sm:$0x3] %vm334, %v324
          %381 = vst.msk [vmem:[#allocation2 + $0x180] sm:$0xff] %vm331, %v325
          %382 = vst.msk [vmem:[#allocation2 + $0x188] sm:$0xff] %vm331, %v326
          %383 = vst.msk [vmem:[#allocation2 + $0x190] sm:$0x3] %vm334, %v327
          %384 = vst.msk [vmem:[#allocation2 + $0x198] sm:$0xff] %vm331, %v328
          %385 = vst.msk [vmem:[#allocation2 + $0x1a0] sm:$0xff] %vm331, %v329
          %386 = vst.msk [vmem:[#allocation2 + $0x1a8] sm:$0x3] %vm334, %v330
          %387 = vst.msk [vmem:[#allocation3] sm:$0xff] %vm331, 0.0
          %388 = vst.msk [vmem:[#allocation3 + $0x8] sm:$0xff] %vm331, 0.0
          %389 = vst.msk [vmem:[#allocation3 + $0x10] sm:$0xff] %vm331, 0.0
          %390 = vst.msk [vmem:[#allocation3 + $0x18] sm:$0xff] %vm331, 0.0
          %391 = vst.msk [vmem:[#allocation3 + $0x20] sm:$0xff] %vm331, 0.0
          %392 = vst.msk [vmem:[#allocation3 + $0x28] sm:$0xff] %vm331, 0.0
          %393 = vst.msk [vmem:[#allocation3 + $0x30] sm:$0xff] %vm331, 0.0
          %394 = vst.msk [vmem:[#allocation3 + $0x38] sm:$0xff] %vm331, 0.0
          %395 = vst.msk [vmem:[#allocation3 + $0x40] sm:$0xff] %vm331, 0.0
          %396 = vst.msk [vmem:[#allocation3 + $0x48] sm:$0xff] %vm331, 0.0
          %397 = vst.msk [vmem:[#allocation3 + $0x50] sm:$0xff] %vm331, 0.0
          %398 = vst.msk [vmem:[#allocation3 + $0x58] sm:$0xff] %vm331, 0.0
          %399 = vst.msk [vmem:[#allocation3 + $0x60] sm:$0xff] %vm331, 0.0
          %400 = vst.msk [vmem:[#allocation3 + $0x68] sm:$0xff] %vm331, 0.0
          %401 = vst.msk [vmem:[#allocation3 + $0x70] sm:$0xff] %vm331, 0.0
          %402 = vst.msk [vmem:[#allocation3 + $0x78] sm:$0xff] %vm331, 0.0
          %403 = vst.msk [vmem:[#allocation3 + $0x80] sm:$0xff] %vm331, 0.0
          %404 = vst.msk [vmem:[#allocation3 + $0x88] sm:$0xff] %vm331, 0.0
          %405 = vst.msk [vmem:[#allocation3 + $0x90] sm:$0xff] %vm331, 0.0
          %406 = vst.msk [vmem:[#allocation3 + $0x98] sm:$0xff] %vm331, 0.0
          %407 = vst.msk [vmem:[#allocation3 + $0xa0] sm:$0xff] %vm331, 0.0
          %408 = vst.msk [vmem:[#allocation3 + $0xa8] sm:$0xff] %vm331, 0.0
          %409 = vst.msk [vmem:[#allocation3 + $0xb0] sm:$0xff] %vm331, 0.0
          %410 = vst.msk [vmem:[#allocation3 + $0xb8] sm:$0xff] %vm331, 0.0
          %411 = vst.msk [vmem:[#allocation3 + $0xc0] sm:$0xff] %vm331, 0.0
          %412 = vst.msk [vmem:[#allocation3 + $0xc8] sm:$0xff] %vm331, 0.0
          %413 = vst.msk [vmem:[#allocation3 + $0xd0] sm:$0xff] %vm331, 0.0
          %414 = vst.msk [vmem:[#allocation3 + $0xd8] sm:$0xff] %vm331, 0.0
          %415 = vst.msk [vmem:[#allocation3 + $0xe0] sm:$0xff] %vm331, 0.0
          %416 = vst.msk [vmem:[#allocation3 + $0xe8] sm:$0xff] %vm331, 0.0
          %417 = vst.msk [vmem:[#allocation3 + $0xf0] sm:$0xff] %vm331, 0.0
          %418 = vst.msk [vmem:[#allocation3 + $0xf8] sm:$0xff] %vm331, 0.0
        $region44: #{feature_get_forward.1} parent=39 // pred_fallthru
          _
        %p419 = scmp.lt.s32.totalorder %s24, 0
        %s420 = ssub.s32 0, %s24
        %s421 = scalar_select %p419, %s420, %s24
        %s422 = sand.u32 %s421, 1
        %s423 = ssub.s32 0, %s422
        %s424 = scalar_select %p419, %s423, %s422
        %p425 = scmp.ne.s32.totalorder %s424, 0
        %p426 = scmp.lt.s32.totalorder %s424, 0
        %p427 = pnand %p426, %p425
        %p428 = pneg %p427
        %s429 = sadd.s32 %s424, 2
        %s430 = scalar_select %p428, %s429, %s424
        %p431 = scmp.eq.s32.totalorder %s430, 1
        // Predicated region
        $region45: #{feature_get_forward.1} parent=39 // pred_check
          %p432 = pneg %p431
        $region46: #{feature_get_forward.1} parent=39 // pred_check_branch
          %434 = sbr.rel (%p432) target = $region48
        $region47: #{feature_get_forward.1} parent=39 // pred_region
          %s435 = scalar_lea.vmem [#allocation2], 24
          %v436 = vld [vmem:[%s435 + $0x1] sm:$0xff]
          %v437 = vld [vmem:[%s435 + $0x9] sm:$0xff]
          %v438 = vld [vmem:[%s435 + $0x19] sm:$0xff]
          %v439 = vld [vmem:[%s435 + $0x21] sm:$0xff]
          %v440 = vld [vmem:[%s435 + $0x31] sm:$0xff]
          %v441 = vld [vmem:[%s435 + $0x39] sm:$0xff]
          %v442 = vld [vmem:[%s435 + $0x49] sm:$0xff]
          %v443 = vld [vmem:[%s435 + $0x51] sm:$0xff]
          %v444 = vld [vmem:[%s435 + $0x61] sm:$0xff]
          %v445 = vld [vmem:[%s435 + $0x69] sm:$0xff]
          %v446 = vld [vmem:[%s435 + $0x79] sm:$0xff]
          %v447 = vld [vmem:[%s435 + $0x81] sm:$0xff]
          %v448 = vld [vmem:[%s435 + $0x91] sm:$0xff]
          %v449 = vld [vmem:[%s435 + $0x99] sm:$0xff]
          %v450 = vld [vmem:[%s435 + $0xa9] sm:$0xff]
          %v451 = vld [vmem:[%s435 + $0xb1] sm:$0xff]
          %v452 = vld [vmem:[%s435 + $0xc1] sm:$0xff]
          %v453 = vld [vmem:[%s435 + $0xc9] sm:$0xff]
          %v454 = vld [vmem:[%s435 + $0xd9] sm:$0xff]
          %v455 = vld [vmem:[%s435 + $0xe1] sm:$0xff]
          %v456 = vld [vmem:[%s435 + $0xf1] sm:$0xff]
          %v457 = vld [vmem:[%s435 + $0xf9] sm:$0xff]
          %v458 = vld [vmem:[%s435 + $0x109] sm:$0xff]
          %v459 = vld [vmem:[%s435 + $0x111] sm:$0xff]
          %v460 = vld [vmem:[%s435 + $0x121] sm:$0xff]
          %v461 = vld [vmem:[%s435 + $0x129] sm:$0xff]
          %v462 = vld [vmem:[%s435 + $0x139] sm:$0xff]
          %v463 = vld [vmem:[%s435 + $0x141] sm:$0xff]
          %v464 = vld [vmem:[%s435 + $0x151] sm:$0xff]
          %v465 = vld [vmem:[%s435 + $0x159] sm:$0xff]
          %v466 = vld [vmem:[%s435 + $0x169] sm:$0xff]
          %v467 = vld [vmem:[%s435 + $0x171] sm:$0xff]
          %vm468 = vcmask 523264
          %469 = vst.msk [vmem:[#allocation3] sm:$0xff] %vm468, %v436
          %470 = vst.msk [vmem:[#allocation3 + $0x8] sm:$0xff] %vm468, %v437
          %471 = vst.msk [vmem:[#allocation3 + $0x10] sm:$0xff] %vm468, %v438
          %472 = vst.msk [vmem:[#allocation3 + $0x18] sm:$0xff] %vm468, %v439
          %473 = vst.msk [vmem:[#allocation3 + $0x20] sm:$0xff] %vm468, %v440
          %474 = vst.msk [vmem:[#allocation3 + $0x28] sm:$0xff] %vm468, %v441
          %475 = vst.msk [vmem:[#allocation3 + $0x30] sm:$0xff] %vm468, %v442
          %476 = vst.msk [vmem:[#allocation3 + $0x38] sm:$0xff] %vm468, %v443
          %477 = vst.msk [vmem:[#allocation3 + $0x40] sm:$0xff] %vm468, %v444
          %478 = vst.msk [vmem:[#allocation3 + $0x48] sm:$0xff] %vm468, %v445
          %479 = vst.msk [vmem:[#allocation3 + $0x50] sm:$0xff] %vm468, %v446
          %480 = vst.msk [vmem:[#allocation3 + $0x58] sm:$0xff] %vm468, %v447
          %481 = vst.msk [vmem:[#allocation3 + $0x60] sm:$0xff] %vm468, %v448
          %482 = vst.msk [vmem:[#allocation3 + $0x68] sm:$0xff] %vm468, %v449
          %483 = vst.msk [vmem:[#allocation3 + $0x70] sm:$0xff] %vm468, %v450
          %484 = vst.msk [vmem:[#allocation3 + $0x78] sm:$0xff] %vm468, %v451
          %485 = vst.msk [vmem:[#allocation3 + $0x80] sm:$0xff] %vm468, %v452
          %486 = vst.msk [vmem:[#allocation3 + $0x88] sm:$0xff] %vm468, %v453
          %487 = vst.msk [vmem:[#allocation3 + $0x90] sm:$0xff] %vm468, %v454
          %488 = vst.msk [vmem:[#allocation3 + $0x98] sm:$0xff] %vm468, %v455
          %489 = vst.msk [vmem:[#allocation3 + $0xa0] sm:$0xff] %vm468, %v456
          %490 = vst.msk [vmem:[#allocation3 + $0xa8] sm:$0xff] %vm468, %v457
          %491 = vst.msk [vmem:[#allocation3 + $0xb0] sm:$0xff] %vm468, %v458
          %492 = vst.msk [vmem:[#allocation3 + $0xb8] sm:$0xff] %vm468, %v459
          %493 = vst.msk [vmem:[#allocation3 + $0xc0] sm:$0xff] %vm468, %v460
          %494 = vst.msk [vmem:[#allocation3 + $0xc8] sm:$0xff] %vm468, %v461
          %495 = vst.msk [vmem:[#allocation3 + $0xd0] sm:$0xff] %vm468, %v462
          %496 = vst.msk [vmem:[#allocation3 + $0xd8] sm:$0xff] %vm468, %v463
          %497 = vst.msk [vmem:[#allocation3 + $0xe0] sm:$0xff] %vm468, %v464
          %498 = vst.msk [vmem:[#allocation3 + $0xe8] sm:$0xff] %vm468, %v465
          %499 = vst.msk [vmem:[#allocation3 + $0xf0] sm:$0xff] %vm468, %v466
          %500 = vst.msk [vmem:[#allocation3 + $0xf8] sm:$0xff] %vm468, %v467
        $region48: #{feature_get_forward.1} parent=39 // pred_fallthru
          _
        %v501 = vld [vmem:[#allocation2] sm:$0xff]
        %v502 = vld [vmem:[#allocation2 + $0x8] sm:$0xff]
        %v503 = vld [vmem:[#allocation2 + $0x18] sm:$0xff]
        %v504 = vld [vmem:[#allocation2 + $0x20] sm:$0xff]
        %v505 = vld [vmem:[#allocation2 + $0x30] sm:$0xff]
        %v506 = vld [vmem:[#allocation2 + $0x38] sm:$0xff]
        %v507 = vld [vmem:[#allocation2 + $0x48] sm:$0xff]
        %v508 = vld [vmem:[#allocation2 + $0x50] sm:$0xff]
        %v509 = vld [vmem:[#allocation2 + $0x60] sm:$0xff]
        %v510 = vld [vmem:[#allocation2 + $0x68] sm:$0xff]
        %v511 = vld [vmem:[#allocation2 + $0x78] sm:$0xff]
        %v512 = vld [vmem:[#allocation2 + $0x80] sm:$0xff]
        %v513 = vld [vmem:[#allocation2 + $0x90] sm:$0xff]
        %v514 = vld [vmem:[#allocation2 + $0x98] sm:$0xff]
        %v515 = vld [vmem:[#allocation2 + $0xa8] sm:$0xff]
        %v516 = vld [vmem:[#allocation2 + $0xb0] sm:$0xff]
        %v517 = vld [vmem:[#allocation2 + $0xc0] sm:$0xff]
        %v518 = vld [vmem:[#allocation2 + $0xc8] sm:$0xff]
        %v519 = vld [vmem:[#allocation2 + $0xd8] sm:$0xff]
        %v520 = vld [vmem:[#allocation2 + $0xe0] sm:$0xff]
        %v521 = vld [vmem:[#allocation2 + $0xf0] sm:$0xff]
        %v522 = vld [vmem:[#allocation2 + $0xf8] sm:$0xff]
        %v523 = vld [vmem:[#allocation2 + $0x108] sm:$0xff]
        %v524 = vld [vmem:[#allocation2 + $0x110] sm:$0xff]
        %v525 = vld [vmem:[#allocation2 + $0x120] sm:$0xff]
        %v526 = vld [vmem:[#allocation2 + $0x128] sm:$0xff]
        %v527 = vld [vmem:[#allocation2 + $0x138] sm:$0xff]
        %v528 = vld [vmem:[#allocation2 + $0x140] sm:$0xff]
        %v529 = vld [vmem:[#allocation2 + $0x150] sm:$0xff]
        %v530 = vld [vmem:[#allocation2 + $0x158] sm:$0xff]
        %v531 = vld [vmem:[#allocation2 + $0x168] sm:$0xff]
        %v532 = vld [vmem:[#allocation2 + $0x170] sm:$0xff]
        %v533 = vpack.c.bf16 %v502, %v501
        %v534 = vpack.c.bf16 %v504, %v503
        %v535 = vpack.c.bf16 %v506, %v505
        %v536 = vpack.c.bf16 %v508, %v507
        %v537 = vpack.c.bf16 %v510, %v509
        %v538 = vpack.c.bf16 %v512, %v511
        %v539 = vpack.c.bf16 %v514, %v513
        %v540 = vpack.c.bf16 %v516, %v515
        %v541 = vpack.c.bf16 %v518, %v517
        %v542 = vpack.c.bf16 %v520, %v519
        %v543 = vpack.c.bf16 %v522, %v521
        %v544 = vpack.c.bf16 %v524, %v523
        %v545 = vpack.c.bf16 %v526, %v525
        %v546 = vpack.c.bf16 %v528, %v527
        %v547 = vpack.c.bf16 %v530, %v529
        %v548 = vpack.c.bf16 %v532, %v531
        %v549 = vld [vmem:[%s267] sm:$0xf]
        %v550 = vld [vmem:[%s267 + $0x4] sm:$0xf]
        %v551 = vld [vmem:[%s267 + $0x8] sm:$0xf]
        %v552 = vld [vmem:[%s267 + $0xc] sm:$0xf]
        %v553 = vld [vmem:[%s267 + $0x10] sm:$0xf]
        %v554 = vld [vmem:[%s267 + $0x14] sm:$0xf]
        %v555 = vld [vmem:[%s267 + $0x18] sm:$0xf]
        %v556 = vld [vmem:[%s267 + $0x1c] sm:$0xf]
        %v557 = vld [vmem:[#allocation2 + $0x1] sm:$0xff]
        %v558 = vld [vmem:[#allocation2 + $0x9] sm:$0xff]
        %v559 = vld [vmem:[#allocation2 + $0x19] sm:$0xff]
        %v560 = vld [vmem:[#allocation2 + $0x21] sm:$0xff]
        %v561 = vld [vmem:[#allocation2 + $0x31] sm:$0xff]
        %v562 = vld [vmem:[#allocation2 + $0x39] sm:$0xff]
        %v563 = vld [vmem:[#allocation2 + $0x49] sm:$0xff]
        %v564 = vld [vmem:[#allocation2 + $0x51] sm:$0xff]
        %v565 = vld [vmem:[#allocation2 + $0x61] sm:$0xff]
        %v566 = vld [vmem:[#allocation2 + $0x69] sm:$0xff]
        %v567 = vld [vmem:[#allocation2 + $0x79] sm:$0xff]
        %v568 = vld [vmem:[#allocation2 + $0x81] sm:$0xff]
        %v569 = vld [vmem:[#allocation2 + $0x91] sm:$0xff]
        %v570 = vld [vmem:[#allocation2 + $0x99] sm:$0xff]
        %v571 = vld [vmem:[#allocation2 + $0xa9] sm:$0xff]
        %v572 = vld [vmem:[#allocation2 + $0xb1] sm:$0xff]
        %v573 = vld [vmem:[#allocation2 + $0xc1] sm:$0xff]
        %v574 = vld [vmem:[#allocation2 + $0xc9] sm:$0xff]
        %v575 = vld [vmem:[#allocation2 + $0xd9] sm:$0xff]
        %v576 = vld [vmem:[#allocation2 + $0xe1] sm:$0xff]
        %v577 = vld [vmem:[#allocation2 + $0xf1] sm:$0xff]
        %v578 = vld [vmem:[#allocation2 + $0xf9] sm:$0xff]
        %v579 = vld [vmem:[#allocation2 + $0x109] sm:$0xff]
        %v580 = vld [vmem:[#allocation2 + $0x111] sm:$0xff]
        %v581 = vld [vmem:[#allocation2 + $0x121] sm:$0xff]
        %v582 = vld [vmem:[#allocation2 + $0x129] sm:$0xff]
        %v583 = vld [vmem:[#allocation2 + $0x139] sm:$0xff]
        %v584 = vld [vmem:[#allocation2 + $0x141] sm:$0xff]
        %v585 = vld [vmem:[#allocation2 + $0x151] sm:$0xff]
        %v586 = vld [vmem:[#allocation2 + $0x159] sm:$0xff]
        %v587 = vld [vmem:[#allocation2 + $0x169] sm:$0xff]
        %v588 = vld [vmem:[#allocation2 + $0x171] sm:$0xff]
        %v589 = vpack.c.bf16 %v558, %v557
        %v590 = vpack.c.bf16 %v560, %v559
        %v591 = vpack.c.bf16 %v562, %v561
        %v592 = vpack.c.bf16 %v564, %v563
        %v593 = vpack.c.bf16 %v566, %v565
        %v594 = vpack.c.bf16 %v568, %v567
        %v595 = vpack.c.bf16 %v570, %v569
        %v596 = vpack.c.bf16 %v572, %v571
        %v597 = vpack.c.bf16 %v574, %v573
        %v598 = vpack.c.bf16 %v576, %v575
        %v599 = vpack.c.bf16 %v578, %v577
        %v600 = vpack.c.bf16 %v580, %v579
        %v601 = vpack.c.bf16 %v582, %v581
        %v602 = vpack.c.bf16 %v584, %v583
        %v603 = vpack.c.bf16 %v586, %v585
        %v604 = vpack.c.bf16 %v588, %v587
        %s605 = scalar_lea.vmem %s267, 32
        %v606 = vld [vmem:[%s605] sm:$0xf]
        %v607 = vld [vmem:[%s605 + $0x4] sm:$0xf]
        %v608 = vld [vmem:[%s605 + $0x8] sm:$0xf]
        %v609 = vld [vmem:[%s605 + $0xc] sm:$0xf]
        %v610 = vld [vmem:[%s605 + $0x10] sm:$0xf]
        %v611 = vld [vmem:[%s605 + $0x14] sm:$0xf]
        %v612 = vld [vmem:[%s605 + $0x18] sm:$0xf]
        %v613 = vld [vmem:[%s605 + $0x1c] sm:$0xf]
        %v622 = vunpack.c.l.b16 %v606
        %v623 = vunpack.c.l.b16 %v607
        %v624 = vunpack.c.l.b16 %v608
        %v625 = vunpack.c.l.b16 %v609
        %v626 = vunpack.c.l.b16 %v610
        %v627 = vunpack.c.l.b16 %v611
        %v628 = vunpack.c.l.b16 %v612
        %v629 = vunpack.c.l.b16 %v613
        %v630 = vpack.c.b16 %v623, %v622
        %v631 = vpack.c.b16 %v625, %v624
        %v632 = vpack.c.b16 %v627, %v626
        %v633 = vpack.c.b16 %v629, %v628
        %vm638 = vcmask 523264
        %v640 = vsel %vm638, %v589, 0
        %v643 = vsel %vm638, %v590, 0
        %v646 = vsel %vm638, %v591, 0
        %v649 = vsel %vm638, %v592, 0
        %v652 = vsel %vm638, %v593, 0
        %v655 = vsel %vm638, %v594, 0
        %v658 = vsel %vm638, %v595, 0
        %v661 = vsel %vm638, %v596, 0
        %v664 = vsel %vm638, %v597, 0
        %v667 = vsel %vm638, %v598, 0
        %v670 = vsel %vm638, %v599, 0
        %v673 = vsel %vm638, %v600, 0
        %v676 = vsel %vm638, %v601, 0
        %v679 = vsel %vm638, %v602, 0
        %v682 = vsel %vm638, %v603, 0
        %v685 = vsel %vm638, %v604, 0
        %687 = vmatprep.subr.bf16.mxu0 0
        %688 = vmatpush1.bf16.msra.mxu0 %v630
        %689 = vmatprep.subr.bf16.mxu0 0
        %690 = vmatpush1.bf16.msra.mxu0 %v631
        %691 = vmatprep.subr.bf16.mxu0 0
        %692 = vmatpush1.bf16.msra.mxu0 %v632
        %693 = vmatprep.subr.bf16.mxu0 0
        %694 = vmatpush1.bf16.msra.mxu0 %v633
        %695 = vmatprep.subr.bf16.mxu0 0
        %696 = vmatpush1.bf16.msra.mxu0 0
        %697 = vmatprep.subr.bf16.mxu0 0
        %698 = vmatpush1.bf16.msra.mxu0 0
        %699 = vmatprep.subr.bf16.mxu0 0
        %700 = vmatpush1.bf16.msra.mxu0 0
        %701 = vmatprep.subr.bf16.mxu0 0
        %702 = vmatpush1.bf16.msra.mxu0 0
        %703 = vmatprep.subr.bf16.mxu0 0
        %704 = vmatpush1.bf16.msra.mxu0 0
        %705 = vmatprep.subr.bf16.mxu0 0
        %706 = vmatpush1.bf16.msra.mxu0 0
        %707 = vmatprep.subr.bf16.mxu0 0
        %708 = vmatpush1.bf16.msra.mxu0 0
        %709 = vmatprep.subr.bf16.mxu0 0
        %710 = vmatpush1.bf16.msra.mxu0 0
        %711 = vmatprep.subr.bf16.mxu0 0
        %712 = vmatpush1.bf16.msra.mxu0 0
        %713 = vmatprep.subr.bf16.mxu0 0
        %714 = vmatpush1.bf16.msra.mxu0 0
        %715 = vmatprep.subr.bf16.mxu0 0
        %716 = vmatpush1.bf16.msra.mxu0 0
        %717 = vmatprep.subr.bf16.mxu0 0
        %718 = vmatpush1.bf16.msra.mxu0 0
        %719 = vmatprep.mubr.bf16.mxu0 0
        %720 = vmatmul.mubr.bf16.gmra.mrb[0].mxu0 %v640
        %v721 = vpop.f32.mrb[0].mxu0
        %v722 = vadd.f32 0.0, %v721
        %v723 = vpop.f32.mrb[0].mxu0
        %v724 = vpop.f32.mrb[0].mxu0
        %v725 = vadd.f32 0.0, %v724
        %v726 = vpop.f32.mrb[0].mxu0
        %727 = vmatprep.mubr.bf16.mxu0 0
        %728 = vmatmul.mubr.bf16.gmra.mrb[0].mxu0 %v643
        %v729 = vpop.f32.mrb[0].mxu0
        %v730 = vadd.f32 0.0, %v729
        %v731 = vpop.f32.mrb[0].mxu0
        %v732 = vpop.f32.mrb[0].mxu0
        %v733 = vadd.f32 0.0, %v732
        %v734 = vpop.f32.mrb[0].mxu0
        %735 = vmatprep.mubr.bf16.mxu0 0
        %736 = vmatmul.mubr.bf16.gmra.mrb[0].mxu0 %v646
        %v737 = vpop.f32.mrb[0].mxu0
        %v738 = vadd.f32 0.0, %v737
        %v739 = vpop.f32.mrb[0].mxu0
        %v740 = vpop.f32.mrb[0].mxu0
        %v741 = vadd.f32 0.0, %v740
        %v742 = vpop.f32.mrb[0].mxu0
        %743 = vmatprep.mubr.bf16.mxu0 0
        %744 = vmatmul.mubr.bf16.gmra.mrb[0].mxu0 %v649
        %v745 = vpop.f32.mrb[0].mxu0
        %v746 = vadd.f32 0.0, %v745
        %v747 = vpop.f32.mrb[0].mxu0
        %v748 = vpop.f32.mrb[0].mxu0
        %v749 = vadd.f32 0.0, %v748
        %v750 = vpop.f32.mrb[0].mxu0
        %751 = vmatprep.mubr.bf16.mxu0 0
        %752 = vmatmul.mubr.bf16.gmra.mrb[0].mxu0 %v652
        %v753 = vpop.f32.mrb[0].mxu0
        %v754 = vadd.f32 0.0, %v753
        %v755 = vpop.f32.mrb[0].mxu0
        %v756 = vpop.f32.mrb[0].mxu0
        %v757 = vadd.f32 0.0, %v756
        %v758 = vpop.f32.mrb[0].mxu0
        %759 = vmatprep.mubr.bf16.mxu0 0
        %760 = vmatmul.mubr.bf16.gmra.mrb[0].mxu0 %v655
        %v761 = vpop.f32.mrb[0].mxu0
        %v762 = vadd.f32 0.0, %v761
        %v763 = vpop.f32.mrb[0].mxu0
        %v764 = vpop.f32.mrb[0].mxu0
        %v765 = vadd.f32 0.0, %v764
        %v766 = vpop.f32.mrb[0].mxu0
        %767 = vmatprep.mubr.bf16.mxu0 0
        %768 = vmatmul.mubr.bf16.gmra.mrb[0].mxu0 %v658
        %v769 = vpop.f32.mrb[0].mxu0
        %v770 = vadd.f32 0.0, %v769
        %v771 = vpop.f32.mrb[0].mxu0
        %v772 = vpop.f32.mrb[0].mxu0
        %v773 = vadd.f32 0.0, %v772
        %v774 = vpop.f32.mrb[0].mxu0
        %775 = vmatprep.mubr.bf16.mxu0 0
        %776 = vmatmul.mubr.bf16.gmra.mrb[0].mxu0 %v661
        %v777 = vpop.f32.mrb[0].mxu0
        %v778 = vadd.f32 0.0, %v777
        %v779 = vpop.f32.mrb[0].mxu0
        %v780 = vpop.f32.mrb[0].mxu0
        %v781 = vadd.f32 0.0, %v780
        %v782 = vpop.f32.mrb[0].mxu0
        %783 = vmatprep.mubr.bf16.mxu0 0
        %784 = vmatmul.mubr.bf16.gmra.mrb[0].mxu0 %v664
        %v785 = vpop.f32.mrb[0].mxu0
        %v786 = vadd.f32 0.0, %v785
        %v787 = vpop.f32.mrb[0].mxu0
        %v788 = vpop.f32.mrb[0].mxu0
        %v789 = vadd.f32 0.0, %v788
        %v790 = vpop.f32.mrb[0].mxu0
        %791 = vmatprep.mubr.bf16.mxu0 0
        %792 = vmatmul.mubr.bf16.gmra.mrb[0].mxu0 %v667
        %v793 = vpop.f32.mrb[0].mxu0
        %v794 = vadd.f32 0.0, %v793
        %v795 = vpop.f32.mrb[0].mxu0
        %v796 = vpop.f32.mrb[0].mxu0
        %v797 = vadd.f32 0.0, %v796
        %v798 = vpop.f32.mrb[0].mxu0
        %799 = vmatprep.mubr.bf16.mxu0 0
        %800 = vmatmul.mubr.bf16.gmra.mrb[0].mxu0 %v670
        %v801 = vpop.f32.mrb[0].mxu0
        %v802 = vadd.f32 0.0, %v801
        %v803 = vpop.f32.mrb[0].mxu0
        %v804 = vpop.f32.mrb[0].mxu0
        %v805 = vadd.f32 0.0, %v804
        %v806 = vpop.f32.mrb[0].mxu0
        %807 = vmatprep.mubr.bf16.mxu0 0
        %808 = vmatmul.mubr.bf16.gmra.mrb[0].mxu0 %v673
        %v809 = vpop.f32.mrb[0].mxu0
        %v810 = vadd.f32 0.0, %v809
        %v811 = vpop.f32.mrb[0].mxu0
        %v812 = vpop.f32.mrb[0].mxu0
        %v813 = vadd.f32 0.0, %v812
        %v814 = vpop.f32.mrb[0].mxu0
        %815 = vmatprep.mubr.bf16.mxu0 0
        %816 = vmatmul.mubr.bf16.gmra.mrb[0].mxu0 %v676
        %v817 = vpop.f32.mrb[0].mxu0
        %v818 = vadd.f32 0.0, %v817
        %v819 = vpop.f32.mrb[0].mxu0
        %v820 = vpop.f32.mrb[0].mxu0
        %v821 = vadd.f32 0.0, %v820
        %v822 = vpop.f32.mrb[0].mxu0
        %823 = vmatprep.mubr.bf16.mxu0 0
        %824 = vmatmul.mubr.bf16.gmra.mrb[0].mxu0 %v679
        %v825 = vpop.f32.mrb[0].mxu0
        %v826 = vadd.f32 0.0, %v825
        %v827 = vpop.f32.mrb[0].mxu0
        %v828 = vpop.f32.mrb[0].mxu0
        %v829 = vadd.f32 0.0, %v828
        %v830 = vpop.f32.mrb[0].mxu0
        %831 = vmatprep.mubr.bf16.mxu0 0
        %832 = vmatmul.mubr.bf16.gmra.mrb[0].mxu0 %v682
        %v833 = vpop.f32.mrb[0].mxu0
        %v834 = vadd.f32 0.0, %v833
        %v835 = vpop.f32.mrb[0].mxu0
        %v836 = vpop.f32.mrb[0].mxu0
        %v837 = vadd.f32 0.0, %v836
        %v838 = vpop.f32.mrb[0].mxu0
        %839 = vmatprep.mubr.bf16.mxu0 0
        %840 = vmatmul.mubr.bf16.gmra.mrb[0].mxu0 %v685
        %v841 = vpop.f32.mrb[0].mxu0
        %v842 = vadd.f32 0.0, %v841
        %v843 = vpop.f32.mrb[0].mxu0
        %v844 = vpop.f32.mrb[0].mxu0
        %v845 = vadd.f32 0.0, %v844
        %v846 = vpop.f32.mrb[0].mxu0
        %847 = vdwg.mxu0
        %v856 = vunpack.c.l.b16 %v549
        %v857 = vunpack.c.l.b16 %v550
        %v858 = vunpack.c.l.b16 %v551
        %v859 = vunpack.c.l.b16 %v552
        %v860 = vunpack.c.l.b16 %v553
        %v861 = vunpack.c.l.b16 %v554
        %v862 = vunpack.c.l.b16 %v555
        %v863 = vunpack.c.l.b16 %v556
        %v864 = vpack.c.b16 %v857, %v856
        %v865 = vpack.c.b16 %v859, %v858
        %v866 = vpack.c.b16 %v861, %v860
        %v867 = vpack.c.b16 %v863, %v862
        %v873 = vsel %vm638, %v533, 0
        %v876 = vsel %vm638, %v534, 0
        %v879 = vsel %vm638, %v535, 0
        %v882 = vsel %vm638, %v536, 0
        %v885 = vsel %vm638, %v537, 0
        %v888 = vsel %vm638, %v538, 0
        %v891 = vsel %vm638, %v539, 0
        %v894 = vsel %vm638, %v540, 0
        %v897 = vsel %vm638, %v541, 0
        %v900 = vsel %vm638, %v542, 0
        %v903 = vsel %vm638, %v543, 0
        %v906 = vsel %vm638, %v544, 0
        %v909 = vsel %vm638, %v545, 0
        %v912 = vsel %vm638, %v546, 0
        %v915 = vsel %vm638, %v547, 0
        %v918 = vsel %vm638, %v548, 0
        %920 = vmatprep.subr.bf16.mxu0 0
        %921 = vmatpush1.bf16.msra.mxu0 %v864
        %922 = vmatprep.subr.bf16.mxu0 0
        %923 = vmatpush1.bf16.msra.mxu0 %v865
        %924 = vmatprep.subr.bf16.mxu0 0
        %925 = vmatpush1.bf16.msra.mxu0 %v866
        %926 = vmatprep.subr.bf16.mxu0 0
        %927 = vmatpush1.bf16.msra.mxu0 %v867
        %928 = vmatprep.subr.bf16.mxu0 0
        %929 = vmatpush1.bf16.msra.mxu0 0
        %930 = vmatprep.subr.bf16.mxu0 0
        %931 = vmatpush1.bf16.msra.mxu0 0
        %932 = vmatprep.subr.bf16.mxu0 0
        %933 = vmatpush1.bf16.msra.mxu0 0
        %934 = vmatprep.subr.bf16.mxu0 0
        %935 = vmatpush1.bf16.msra.mxu0 0
        %936 = vmatprep.subr.bf16.mxu0 0
        %937 = vmatpush1.bf16.msra.mxu0 0
        %938 = vmatprep.subr.bf16.mxu0 0
        %939 = vmatpush1.bf16.msra.mxu0 0
        %940 = vmatprep.subr.bf16.mxu0 0
        %941 = vmatpush1.bf16.msra.mxu0 0
        %942 = vmatprep.subr.bf16.mxu0 0
        %943 = vmatpush1.bf16.msra.mxu0 0
        %944 = vmatprep.subr.bf16.mxu0 0
        %945 = vmatpush1.bf16.msra.mxu0 0
        %946 = vmatprep.subr.bf16.mxu0 0
        %947 = vmatpush1.bf16.msra.mxu0 0
        %948 = vmatprep.subr.bf16.mxu0 0
        %949 = vmatpush1.bf16.msra.mxu0 0
        %950 = vmatprep.subr.bf16.mxu0 0
        %951 = vmatpush1.bf16.msra.mxu0 0
        %952 = vmatprep.mubr.bf16.mxu0 0
        %953 = vmatmul.mubr.bf16.gmra.mrb[0].mxu0 %v873
        %v954 = vpop.f32.mrb[0].mxu0
        %v955 = vadd.f32 %v722, %v954
        %v956 = vpop.f32.mrb[0].mxu0
        %v957 = vpop.f32.mrb[0].mxu0
        %v958 = vadd.f32 %v725, %v957
        %v959 = vpop.f32.mrb[0].mxu0
        %960 = vmatprep.mubr.bf16.mxu0 0
        %961 = vmatmul.mubr.bf16.gmra.mrb[0].mxu0 %v876
        %v962 = vpop.f32.mrb[0].mxu0
        %v963 = vadd.f32 %v730, %v962
        %v964 = vpop.f32.mrb[0].mxu0
        %v965 = vpop.f32.mrb[0].mxu0
        %v966 = vadd.f32 %v733, %v965
        %v967 = vpop.f32.mrb[0].mxu0
        %968 = vmatprep.mubr.bf16.mxu0 0
        %969 = vmatmul.mubr.bf16.gmra.mrb[0].mxu0 %v879
        %v970 = vpop.f32.mrb[0].mxu0
        %v971 = vadd.f32 %v738, %v970
        %v972 = vpop.f32.mrb[0].mxu0
        %v973 = vpop.f32.mrb[0].mxu0
        %v974 = vadd.f32 %v741, %v973
        %v975 = vpop.f32.mrb[0].mxu0
        %976 = vmatprep.mubr.bf16.mxu0 0
        %977 = vmatmul.mubr.bf16.gmra.mrb[0].mxu0 %v882
        %v978 = vpop.f32.mrb[0].mxu0
        %v979 = vadd.f32 %v746, %v978
        %v980 = vpop.f32.mrb[0].mxu0
        %v981 = vpop.f32.mrb[0].mxu0
        %v982 = vadd.f32 %v749, %v981
        %v983 = vpop.f32.mrb[0].mxu0
        %984 = vmatprep.mubr.bf16.mxu0 0
        %985 = vmatmul.mubr.bf16.gmra.mrb[0].mxu0 %v885
        %v986 = vpop.f32.mrb[0].mxu0
        %v987 = vadd.f32 %v754, %v986
        %v988 = vpop.f32.mrb[0].mxu0
        %v989 = vpop.f32.mrb[0].mxu0
        %v990 = vadd.f32 %v757, %v989
        %v991 = vpop.f32.mrb[0].mxu0
        %992 = vmatprep.mubr.bf16.mxu0 0
        %993 = vmatmul.mubr.bf16.gmra.mrb[0].mxu0 %v888
        %v994 = vpop.f32.mrb[0].mxu0
        %v995 = vadd.f32 %v762, %v994
        %v996 = vpop.f32.mrb[0].mxu0
        %v997 = vpop.f32.mrb[0].mxu0
        %v998 = vadd.f32 %v765, %v997
        %v999 = vpop.f32.mrb[0].mxu0
        %1000 = vmatprep.mubr.bf16.mxu0 0
        %1001 = vmatmul.mubr.bf16.gmra.mrb[0].mxu0 %v891
        %v1002 = vpop.f32.mrb[0].mxu0
        %v1003 = vadd.f32 %v770, %v1002
        %v1004 = vpop.f32.mrb[0].mxu0
        %v1005 = vpop.f32.mrb[0].mxu0
        %v1006 = vadd.f32 %v773, %v1005
        %v1007 = vpop.f32.mrb[0].mxu0
        %1008 = vmatprep.mubr.bf16.mxu0 0
        %1009 = vmatmul.mubr.bf16.gmra.mrb[0].mxu0 %v894
        %v1010 = vpop.f32.mrb[0].mxu0
        %v1011 = vadd.f32 %v778, %v1010
        %v1012 = vpop.f32.mrb[0].mxu0
        %v1013 = vpop.f32.mrb[0].mxu0
        %v1014 = vadd.f32 %v781, %v1013
        %v1015 = vpop.f32.mrb[0].mxu0
        %1016 = vmatprep.mubr.bf16.mxu0 0
        %1017 = vmatmul.mubr.bf16.gmra.mrb[0].mxu0 %v897
        %v1018 = vpop.f32.mrb[0].mxu0
        %v1019 = vadd.f32 %v786, %v1018
        %v1020 = vpop.f32.mrb[0].mxu0
        %v1021 = vpop.f32.mrb[0].mxu0
        %v1022 = vadd.f32 %v789, %v1021
        %v1023 = vpop.f32.mrb[0].mxu0
        %1024 = vmatprep.mubr.bf16.mxu0 0
        %1025 = vmatmul.mubr.bf16.gmra.mrb[0].mxu0 %v900
        %v1026 = vpop.f32.mrb[0].mxu0
        %v1027 = vadd.f32 %v794, %v1026
        %v1028 = vpop.f32.mrb[0].mxu0
        %v1029 = vpop.f32.mrb[0].mxu0
        %v1030 = vadd.f32 %v797, %v1029
        %v1031 = vpop.f32.mrb[0].mxu0
        %1032 = vmatprep.mubr.bf16.mxu0 0
        %1033 = vmatmul.mubr.bf16.gmra.mrb[0].mxu0 %v903
        %v1034 = vpop.f32.mrb[0].mxu0
        %v1035 = vadd.f32 %v802, %v1034
        %v1036 = vpop.f32.mrb[0].mxu0
        %v1037 = vpop.f32.mrb[0].mxu0
        %v1038 = vadd.f32 %v805, %v1037
        %v1039 = vpop.f32.mrb[0].mxu0
        %1040 = vmatprep.mubr.bf16.mxu0 0
        %1041 = vmatmul.mubr.bf16.gmra.mrb[0].mxu0 %v906
        %v1042 = vpop.f32.mrb[0].mxu0
        %v1043 = vadd.f32 %v810, %v1042
        %v1044 = vpop.f32.mrb[0].mxu0
        %v1045 = vpop.f32.mrb[0].mxu0
        %v1046 = vadd.f32 %v813, %v1045
        %v1047 = vpop.f32.mrb[0].mxu0
        %1048 = vmatprep.mubr.bf16.mxu0 0
        %1049 = vmatmul.mubr.bf16.gmra.mrb[0].mxu0 %v909
        %v1050 = vpop.f32.mrb[0].mxu0
        %v1051 = vadd.f32 %v818, %v1050
        %v1052 = vpop.f32.mrb[0].mxu0
        %v1053 = vpop.f32.mrb[0].mxu0
        %v1054 = vadd.f32 %v821, %v1053
        %v1055 = vpop.f32.mrb[0].mxu0
        %1056 = vmatprep.mubr.bf16.mxu0 0
        %1057 = vmatmul.mubr.bf16.gmra.mrb[0].mxu0 %v912
        %v1058 = vpop.f32.mrb[0].mxu0
        %v1059 = vadd.f32 %v826, %v1058
        %v1060 = vpop.f32.mrb[0].mxu0
        %v1061 = vpop.f32.mrb[0].mxu0
        %v1062 = vadd.f32 %v829, %v1061
        %v1063 = vpop.f32.mrb[0].mxu0
        %1064 = vmatprep.mubr.bf16.mxu0 0
        %1065 = vmatmul.mubr.bf16.gmra.mrb[0].mxu0 %v915
        %v1066 = vpop.f32.mrb[0].mxu0
        %v1067 = vadd.f32 %v834, %v1066
        %v1068 = vpop.f32.mrb[0].mxu0
        %v1069 = vpop.f32.mrb[0].mxu0
        %v1070 = vadd.f32 %v837, %v1069
        %v1071 = vpop.f32.mrb[0].mxu0
        %1072 = vmatprep.mubr.bf16.mxu0 0
        %1073 = vmatmul.mubr.bf16.gmra.mrb[0].mxu0 %v918
        %v1074 = vpop.f32.mrb[0].mxu0
        %v1075 = vadd.f32 %v842, %v1074
        %v1076 = vpop.f32.mrb[0].mxu0
        %v1077 = vpop.f32.mrb[0].mxu0
        %v1078 = vadd.f32 %v845, %v1077
        %v1079 = vpop.f32.mrb[0].mxu0
        %1080 = vdwg.mxu0
        %v1081 = vld [vmem:[#allocation2 + $0x2] sm:$0xff]
        %v1082 = vld [vmem:[#allocation2 + $0xa] sm:$0xff]
        %v1083 = vld [vmem:[#allocation2 + $0x1a] sm:$0xff]
        %v1084 = vld [vmem:[#allocation2 + $0x22] sm:$0xff]
        %v1085 = vld [vmem:[#allocation2 + $0x32] sm:$0xff]
        %v1086 = vld [vmem:[#allocation2 + $0x3a] sm:$0xff]
        %v1087 = vld [vmem:[#allocation2 + $0x4a] sm:$0xff]
        %v1088 = vld [vmem:[#allocation2 + $0x52] sm:$0xff]
        %v1089 = vld [vmem:[#allocation2 + $0x62] sm:$0xff]
        %v1090 = vld [vmem:[#allocation2 + $0x6a] sm:$0xff]
        %v1091 = vld [vmem:[#allocation2 + $0x7a] sm:$0xff]
        %v1092 = vld [vmem:[#allocation2 + $0x82] sm:$0xff]
        %v1093 = vld [vmem:[#allocation2 + $0x92] sm:$0xff]
        %v1094 = vld [vmem:[#allocation2 + $0x9a] sm:$0xff]
        %v1095 = vld [vmem:[#allocation2 + $0xaa] sm:$0xff]
        %v1096 = vld [vmem:[#allocation2 + $0xb2] sm:$0xff]
        %v1097 = vld [vmem:[#allocation2 + $0xc2] sm:$0xff]
        %v1098 = vld [vmem:[#allocation2 + $0xca] sm:$0xff]
        %v1099 = vld [vmem:[#allocation2 + $0xda] sm:$0xff]
        %v1100 = vld [vmem:[#allocation2 + $0xe2] sm:$0xff]
        %v1101 = vld [vmem:[#allocation2 + $0xf2] sm:$0xff]
        %v1102 = vld [vmem:[#allocation2 + $0xfa] sm:$0xff]
        %v1103 = vld [vmem:[#allocation2 + $0x10a] sm:$0xff]
        %v1104 = vld [vmem:[#allocation2 + $0x112] sm:$0xff]
        %v1105 = vld [vmem:[#allocation2 + $0x122] sm:$0xff]
        %v1106 = vld [vmem:[#allocation2 + $0x12a] sm:$0xff]
        %v1107 = vld [vmem:[#allocation2 + $0x13a] sm:$0xff]
        %v1108 = vld [vmem:[#allocation2 + $0x142] sm:$0xff]
        %v1109 = vld [vmem:[#allocation2 + $0x152] sm:$0xff]
        %v1110 = vld [vmem:[#allocation2 + $0x15a] sm:$0xff]
        %v1111 = vld [vmem:[#allocation2 + $0x16a] sm:$0xff]
        %v1112 = vld [vmem:[#allocation2 + $0x172] sm:$0xff]
        %v1113 = vpack.c.bf16 %v1082, %v1081
        %v1114 = vpack.c.bf16 %v1084, %v1083
        %v1115 = vpack.c.bf16 %v1086, %v1085
        %v1116 = vpack.c.bf16 %v1088, %v1087
        %v1117 = vpack.c.bf16 %v1090, %v1089
        %v1118 = vpack.c.bf16 %v1092, %v1091
        %v1119 = vpack.c.bf16 %v1094, %v1093
        %v1120 = vpack.c.bf16 %v1096, %v1095
        %v1121 = vpack.c.bf16 %v1098, %v1097
        %v1122 = vpack.c.bf16 %v1100, %v1099
        %v1123 = vpack.c.bf16 %v1102, %v1101
        %v1124 = vpack.c.bf16 %v1104, %v1103
        %v1125 = vpack.c.bf16 %v1106, %v1105
        %v1126 = vpack.c.bf16 %v1108, %v1107
        %v1127 = vpack.c.bf16 %v1110, %v1109
        %v1128 = vpack.c.bf16 %v1112, %v1111
        %s1129 = scalar_lea.vmem %s267, 64
        %v1130 = vld [vmem:[%s1129] sm:$0xf]
        %v1131 = vld [vmem:[%s1129 + $0x4] sm:$0xf]
        %v1132 = vld [vmem:[%s1129 + $0x8] sm:$0xf]
        %v1133 = vld [vmem:[%s1129 + $0xc] sm:$0xf]
        %v1134 = vld [vmem:[%s1129 + $0x10] sm:$0xf]
        %v1135 = vld [vmem:[%s1129 + $0x14] sm:$0xf]
        %v1136 = vld [vmem:[%s1129 + $0x18] sm:$0xf]
        %v1137 = vld [vmem:[%s1129 + $0x1c] sm:$0xf]
        %v1146 = vunpack.c.l.b16 %v1130
        %v1147 = vunpack.c.l.b16 %v1131
        %v1148 = vunpack.c.l.b16 %v1132
        %v1149 = vunpack.c.l.b16 %v1133
        %v1150 = vunpack.c.l.b16 %v1134
        %v1151 = vunpack.c.l.b16 %v1135
        %v1152 = vunpack.c.l.b16 %v1136
        %v1153 = vunpack.c.l.b16 %v1137
        %v1154 = vpack.c.b16 %v1147, %v1146
        %v1155 = vpack.c.b16 %v1149, %v1148
        %v1156 = vpack.c.b16 %v1151, %v1150
        %v1157 = vpack.c.b16 %v1153, %v1152
        %v1163 = vsel %vm638, %v1113, 0
        %v1166 = vsel %vm638, %v1114, 0
        %v1169 = vsel %vm638, %v1115, 0
        %v1172 = vsel %vm638, %v1116, 0
        %v1175 = vsel %vm638, %v1117, 0
        %v1178 = vsel %vm638, %v1118, 0
        %v1181 = vsel %vm638, %v1119, 0
        %v1184 = vsel %vm638, %v1120, 0
        %v1187 = vsel %vm638, %v1121, 0
        %v1190 = vsel %vm638, %v1122, 0
        %v1193 = vsel %vm638, %v1123, 0
        %v1196 = vsel %vm638, %v1124, 0
        %v1199 = vsel %vm638, %v1125, 0
        %v1202 = vsel %vm638, %v1126, 0
        %v1205 = vsel %vm638, %v1127, 0
        %v1208 = vsel %vm638, %v1128, 0
        %1210 = vmatprep.subr.bf16.mxu0 0
        %1211 = vmatpush1.bf16.msra.mxu0 %v1154
        %1212 = vmatprep.subr.bf16.mxu0 0
        %1213 = vmatpush1.bf16.msra.mxu0 %v1155
        %1214 = vmatprep.subr.bf16.mxu0 0
        %1215 = vmatpush1.bf16.msra.mxu0 %v1156
        %1216 = vmatprep.subr.bf16.mxu0 0
        %1217 = vmatpush1.bf16.msra.mxu0 %v1157
        %1218 = vmatprep.subr.bf16.mxu0 0
        %1219 = vmatpush1.bf16.msra.mxu0 0
        %1220 = vmatprep.subr.bf16.mxu0 0
        %1221 = vmatpush1.bf16.msra.mxu0 0
        %1222 = vmatprep.subr.bf16.mxu0 0
        %1223 = vmatpush1.bf16.msra.mxu0 0
        %1224 = vmatprep.subr.bf16.mxu0 0
        %1225 = vmatpush1.bf16.msra.mxu0 0
        %1226 = vmatprep.subr.bf16.mxu0 0
        %1227 = vmatpush1.bf16.msra.mxu0 0
        %1228 = vmatprep.subr.bf16.mxu0 0
        %1229 = vmatpush1.bf16.msra.mxu0 0
        %1230 = vmatprep.subr.bf16.mxu0 0
        %1231 = vmatpush1.bf16.msra.mxu0 0
        %1232 = vmatprep.subr.bf16.mxu0 0
        %1233 = vmatpush1.bf16.msra.mxu0 0
        %1234 = vmatprep.subr.bf16.mxu0 0
        %1235 = vmatpush1.bf16.msra.mxu0 0
        %1236 = vmatprep.subr.bf16.mxu0 0
        %1237 = vmatpush1.bf16.msra.mxu0 0
        %1238 = vmatprep.subr.bf16.mxu0 0
        %1239 = vmatpush1.bf16.msra.mxu0 0
        %1240 = vmatprep.subr.bf16.mxu0 0
        %1241 = vmatpush1.bf16.msra.mxu0 0
        %1242 = vmatprep.mubr.bf16.mxu0 0
        %1243 = vmatmul.mubr.bf16.gmra.mrb[0].mxu0 %v1163
        %v1244 = vpop.f32.mrb[0].mxu0
        %v1245 = vadd.f32 0.0, %v1244
        %v1246 = vpop.f32.mrb[0].mxu0
        %v1247 = vpop.f32.mrb[0].mxu0
        %v1248 = vadd.f32 0.0, %v1247
        %v1249 = vpop.f32.mrb[0].mxu0
        %1250 = vmatprep.mubr.bf16.mxu0 0
        %1251 = vmatmul.mubr.bf16.gmra.mrb[0].mxu0 %v1166
        %v1252 = vpop.f32.mrb[0].mxu0
        %v1253 = vadd.f32 0.0, %v1252
        %v1254 = vpop.f32.mrb[0].mxu0
        %v1255 = vpop.f32.mrb[0].mxu0
        %v1256 = vadd.f32 0.0, %v1255
        %v1257 = vpop.f32.mrb[0].mxu0
        %1258 = vmatprep.mubr.bf16.mxu0 0
        %1259 = vmatmul.mubr.bf16.gmra.mrb[0].mxu0 %v1169
        %v1260 = vpop.f32.mrb[0].mxu0
        %v1261 = vadd.f32 0.0, %v1260
        %v1262 = vpop.f32.mrb[0].mxu0
        %v1263 = vpop.f32.mrb[0].mxu0
        %v1264 = vadd.f32 0.0, %v1263
        %v1265 = vpop.f32.mrb[0].mxu0
        %1266 = vmatprep.mubr.bf16.mxu0 0
        %1267 = vmatmul.mubr.bf16.gmra.mrb[0].mxu0 %v1172
        %v1268 = vpop.f32.mrb[0].mxu0
        %v1269 = vadd.f32 0.0, %v1268
        %v1270 = vpop.f32.mrb[0].mxu0
        %v1271 = vpop.f32.mrb[0].mxu0
        %v1272 = vadd.f32 0.0, %v1271
        %v1273 = vpop.f32.mrb[0].mxu0
        %1274 = vmatprep.mubr.bf16.mxu0 0
        %1275 = vmatmul.mubr.bf16.gmra.mrb[0].mxu0 %v1175
        %v1276 = vpop.f32.mrb[0].mxu0
        %v1277 = vadd.f32 0.0, %v1276
        %v1278 = vpop.f32.mrb[0].mxu0
        %v1279 = vpop.f32.mrb[0].mxu0
        %v1280 = vadd.f32 0.0, %v1279
        %v1281 = vpop.f32.mrb[0].mxu0
        %1282 = vmatprep.mubr.bf16.mxu0 0
        %1283 = vmatmul.mubr.bf16.gmra.mrb[0].mxu0 %v1178
        %v1284 = vpop.f32.mrb[0].mxu0
        %v1285 = vadd.f32 0.0, %v1284
        %v1286 = vpop.f32.mrb[0].mxu0
        %v1287 = vpop.f32.mrb[0].mxu0
        %v1288 = vadd.f32 0.0, %v1287
        %v1289 = vpop.f32.mrb[0].mxu0
        %1290 = vmatprep.mubr.bf16.mxu0 0
        %1291 = vmatmul.mubr.bf16.gmra.mrb[0].mxu0 %v1181
        %v1292 = vpop.f32.mrb[0].mxu0
        %v1293 = vadd.f32 0.0, %v1292
        %v1294 = vpop.f32.mrb[0].mxu0
        %v1295 = vpop.f32.mrb[0].mxu0
        %v1296 = vadd.f32 0.0, %v1295
        %v1297 = vpop.f32.mrb[0].mxu0
        %1298 = vmatprep.mubr.bf16.mxu0 0
        %1299 = vmatmul.mubr.bf16.gmra.mrb[0].mxu0 %v1184
        %v1300 = vpop.f32.mrb[0].mxu0
        %v1301 = vadd.f32 0.0, %v1300
        %v1302 = vpop.f32.mrb[0].mxu0
        %v1303 = vpop.f32.mrb[0].mxu0
        %v1304 = vadd.f32 0.0, %v1303
        %v1305 = vpop.f32.mrb[0].mxu0
        %1306 = vmatprep.mubr.bf16.mxu0 0
        %1307 = vmatmul.mubr.bf16.gmra.mrb[0].mxu0 %v1187
        %v1308 = vpop.f32.mrb[0].mxu0
        %v1309 = vadd.f32 0.0, %v1308
        %v1310 = vpop.f32.mrb[0].mxu0
        %v1311 = vpop.f32.mrb[0].mxu0
        %v1312 = vadd.f32 0.0, %v1311
        %v1313 = vpop.f32.mrb[0].mxu0
        %1314 = vmatprep.mubr.bf16.mxu0 0
        %1315 = vmatmul.mubr.bf16.gmra.mrb[0].mxu0 %v1190
        %v1316 = vpop.f32.mrb[0].mxu0
        %v1317 = vadd.f32 0.0, %v1316
        %v1318 = vpop.f32.mrb[0].mxu0
        %v1319 = vpop.f32.mrb[0].mxu0
        %v1320 = vadd.f32 0.0, %v1319
        %v1321 = vpop.f32.mrb[0].mxu0
        %1322 = vmatprep.mubr.bf16.mxu0 0
        %1323 = vmatmul.mubr.bf16.gmra.mrb[0].mxu0 %v1193
        %v1324 = vpop.f32.mrb[0].mxu0
        %v1325 = vadd.f32 0.0, %v1324
        %v1326 = vpop.f32.mrb[0].mxu0
        %v1327 = vpop.f32.mrb[0].mxu0
        %v1328 = vadd.f32 0.0, %v1327
        %v1329 = vpop.f32.mrb[0].mxu0
        %1330 = vmatprep.mubr.bf16.mxu0 0
        %1331 = vmatmul.mubr.bf16.gmra.mrb[0].mxu0 %v1196
        %v1332 = vpop.f32.mrb[0].mxu0
        %v1333 = vadd.f32 0.0, %v1332
        %v1334 = vpop.f32.mrb[0].mxu0
        %v1335 = vpop.f32.mrb[0].mxu0
        %v1336 = vadd.f32 0.0, %v1335
        %v1337 = vpop.f32.mrb[0].mxu0
        %1338 = vmatprep.mubr.bf16.mxu0 0
        %1339 = vmatmul.mubr.bf16.gmra.mrb[0].mxu0 %v1199
        %v1340 = vpop.f32.mrb[0].mxu0
        %v1341 = vadd.f32 0.0, %v1340
        %v1342 = vpop.f32.mrb[0].mxu0
        %v1343 = vpop.f32.mrb[0].mxu0
        %v1344 = vadd.f32 0.0, %v1343
        %v1345 = vpop.f32.mrb[0].mxu0
        %1346 = vmatprep.mubr.bf16.mxu0 0
        %1347 = vmatmul.mubr.bf16.gmra.mrb[0].mxu0 %v1202
        %v1348 = vpop.f32.mrb[0].mxu0
        %v1349 = vadd.f32 0.0, %v1348
        %v1350 = vpop.f32.mrb[0].mxu0
        %v1351 = vpop.f32.mrb[0].mxu0
        %v1352 = vadd.f32 0.0, %v1351
        %v1353 = vpop.f32.mrb[0].mxu0
        %1354 = vmatprep.mubr.bf16.mxu0 0
        %1355 = vmatmul.mubr.bf16.gmra.mrb[0].mxu0 %v1205
        %v1356 = vpop.f32.mrb[0].mxu0
        %v1357 = vadd.f32 0.0, %v1356
        %v1358 = vpop.f32.mrb[0].mxu0
        %v1359 = vpop.f32.mrb[0].mxu0
        %v1360 = vadd.f32 0.0, %v1359
        %v1361 = vpop.f32.mrb[0].mxu0
        %1362 = vmatprep.mubr.bf16.mxu0 0
        %1363 = vmatmul.mubr.bf16.gmra.mrb[0].mxu0 %v1208
        %v1364 = vpop.f32.mrb[0].mxu0
        %v1365 = vadd.f32 0.0, %v1364
        %v1366 = vpop.f32.mrb[0].mxu0
        %v1367 = vpop.f32.mrb[0].mxu0
        %v1368 = vadd.f32 0.0, %v1367
        %v1369 = vpop.f32.mrb[0].mxu0
        %1370 = vdwg.mxu0
        %v1371 = vadd.f32 %v955, %v1245
        %v1372 = vadd.f32 %v958, %v1248
        %v1373 = vadd.f32 %v963, %v1253
        %v1374 = vadd.f32 %v966, %v1256
        %v1375 = vadd.f32 %v971, %v1261
        %v1376 = vadd.f32 %v974, %v1264
        %v1377 = vadd.f32 %v979, %v1269
        %v1378 = vadd.f32 %v982, %v1272
        %v1379 = vadd.f32 %v987, %v1277
        %v1380 = vadd.f32 %v990, %v1280
        %v1381 = vadd.f32 %v995, %v1285
        %v1382 = vadd.f32 %v998, %v1288
        %v1383 = vadd.f32 %v1003, %v1293
        %v1384 = vadd.f32 %v1006, %v1296
        %v1385 = vadd.f32 %v1011, %v1301
        %v1386 = vadd.f32 %v1014, %v1304
        %v1387 = vadd.f32 %v1019, %v1309
        %v1388 = vadd.f32 %v1022, %v1312
        %v1389 = vadd.f32 %v1027, %v1317
        %v1390 = vadd.f32 %v1030, %v1320
        %v1391 = vadd.f32 %v1035, %v1325
        %v1392 = vadd.f32 %v1038, %v1328
        %v1393 = vadd.f32 %v1043, %v1333
        %v1394 = vadd.f32 %v1046, %v1336
        %v1395 = vadd.f32 %v1051, %v1341
        %v1396 = vadd.f32 %v1054, %v1344
        %v1397 = vadd.f32 %v1059, %v1349
        %v1398 = vadd.f32 %v1062, %v1352
        %v1399 = vadd.f32 %v1067, %v1357
        %v1400 = vadd.f32 %v1070, %v1360
        %v1401 = vadd.f32 %v1075, %v1365
        %v1402 = vadd.f32 %v1078, %v1368
        %s1403 = scalar_lea.vmem [#allocation2], 24
        %v1404 = vld [vmem:[%s1403] sm:$0xff]
        %v1405 = vld [vmem:[%s1403 + $0x8] sm:$0xff]
        %v1406 = vld [vmem:[%s1403 + $0x18] sm:$0xff]
        %v1407 = vld [vmem:[%s1403 + $0x20] sm:$0xff]
        %v1408 = vld [vmem:[%s1403 + $0x30] sm:$0xff]
        %v1409 = vld [vmem:[%s1403 + $0x38] sm:$0xff]
        %v1410 = vld [vmem:[%s1403 + $0x48] sm:$0xff]
        %v1411 = vld [vmem:[%s1403 + $0x50] sm:$0xff]
        %v1412 = vld [vmem:[%s1403 + $0x60] sm:$0xff]
        %v1413 = vld [vmem:[%s1403 + $0x68] sm:$0xff]
        %v1414 = vld [vmem:[%s1403 + $0x78] sm:$0xff]
        %v1415 = vld [vmem:[%s1403 + $0x80] sm:$0xff]
        %v1416 = vld [vmem:[%s1403 + $0x90] sm:$0xff]
        %v1417 = vld [vmem:[%s1403 + $0x98] sm:$0xff]
        %v1418 = vld [vmem:[%s1403 + $0xa8] sm:$0xff]
        %v1419 = vld [vmem:[%s1403 + $0xb0] sm:$0xff]
        %v1420 = vld [vmem:[%s1403 + $0xc0] sm:$0xff]
        %v1421 = vld [vmem:[%s1403 + $0xc8] sm:$0xff]
        %v1422 = vld [vmem:[%s1403 + $0xd8] sm:$0xff]
        %v1423 = vld [vmem:[%s1403 + $0xe0] sm:$0xff]
        %v1424 = vld [vmem:[%s1403 + $0xf0] sm:$0xff]
        %v1425 = vld [vmem:[%s1403 + $0xf8] sm:$0xff]
        %v1426 = vld [vmem:[%s1403 + $0x108] sm:$0xff]
        %v1427 = vld [vmem:[%s1403 + $0x110] sm:$0xff]
        %v1428 = vld [vmem:[%s1403 + $0x120] sm:$0xff]
        %v1429 = vld [vmem:[%s1403 + $0x128] sm:$0xff]
        %v1430 = vld [vmem:[%s1403 + $0x138] sm:$0xff]
        %v1431 = vld [vmem:[%s1403 + $0x140] sm:$0xff]
        %v1432 = vld [vmem:[%s1403 + $0x150] sm:$0xff]
        %v1433 = vld [vmem:[%s1403 + $0x158] sm:$0xff]
        %v1434 = vld [vmem:[%s1403 + $0x168] sm:$0xff]
        %v1435 = vld [vmem:[%s1403 + $0x170] sm:$0xff]
        %v1436 = vpack.c.bf16 %v1405, %v1404
        %v1437 = vpack.c.bf16 %v1407, %v1406
        %v1438 = vpack.c.bf16 %v1409, %v1408
        %v1439 = vpack.c.bf16 %v1411, %v1410
        %v1440 = vpack.c.bf16 %v1413, %v1412
        %v1441 = vpack.c.bf16 %v1415, %v1414
        %v1442 = vpack.c.bf16 %v1417, %v1416
        %v1443 = vpack.c.bf16 %v1419, %v1418
        %v1444 = vpack.c.bf16 %v1421, %v1420
        %v1445 = vpack.c.bf16 %v1423, %v1422
        %v1446 = vpack.c.bf16 %v1425, %v1424
        %v1447 = vpack.c.bf16 %v1427, %v1426
        %v1448 = vpack.c.bf16 %v1429, %v1428
        %v1449 = vpack.c.bf16 %v1431, %v1430
        %v1450 = vpack.c.bf16 %v1433, %v1432
        %v1451 = vpack.c.bf16 %v1435, %v1434
        %s1452 = scalar_lea.vmem %s267, 96
        %v1453 = vld [vmem:[%s1452] sm:$0xf]
        %v1454 = vld [vmem:[%s1452 + $0x4] sm:$0xf]
        %v1455 = vld [vmem:[%s1452 + $0x8] sm:$0xf]
        %v1456 = vld [vmem:[%s1452 + $0xc] sm:$0xf]
        %v1457 = vld [vmem:[%s1452 + $0x10] sm:$0xf]
        %v1458 = vld [vmem:[%s1452 + $0x14] sm:$0xf]
        %v1459 = vld [vmem:[%s1452 + $0x18] sm:$0xf]
        %v1460 = vld [vmem:[%s1452 + $0x1c] sm:$0xf]
        %v1469 = vunpack.c.l.b16 %v1453
        %v1470 = vunpack.c.l.b16 %v1454
        %v1471 = vunpack.c.l.b16 %v1455
        %v1472 = vunpack.c.l.b16 %v1456
        %v1473 = vunpack.c.l.b16 %v1457
        %v1474 = vunpack.c.l.b16 %v1458
        %v1475 = vunpack.c.l.b16 %v1459
        %v1476 = vunpack.c.l.b16 %v1460
        %v1477 = vpack.c.b16 %v1470, %v1469
        %v1478 = vpack.c.b16 %v1472, %v1471
        %v1479 = vpack.c.b16 %v1474, %v1473
        %v1480 = vpack.c.b16 %v1476, %v1475
        %v1486 = vsel %vm638, %v1436, 0
        %v1489 = vsel %vm638, %v1437, 0
        %v1492 = vsel %vm638, %v1438, 0
        %v1495 = vsel %vm638, %v1439, 0
        %v1498 = vsel %vm638, %v1440, 0
        %v1501 = vsel %vm638, %v1441, 0
        %v1504 = vsel %vm638, %v1442, 0
        %v1507 = vsel %vm638, %v1443, 0
        %v1510 = vsel %vm638, %v1444, 0
        %v1513 = vsel %vm638, %v1445, 0
        %v1516 = vsel %vm638, %v1446, 0
        %v1519 = vsel %vm638, %v1447, 0
        %v1522 = vsel %vm638, %v1448, 0
        %v1525 = vsel %vm638, %v1449, 0
        %v1528 = vsel %vm638, %v1450, 0
        %v1531 = vsel %vm638, %v1451, 0
        %1533 = vmatprep.subr.bf16.mxu0 0
        %1534 = vmatpush1.bf16.msra.mxu0 %v1477
        %1535 = vmatprep.subr.bf16.mxu0 0
        %1536 = vmatpush1.bf16.msra.mxu0 %v1478
        %1537 = vmatprep.subr.bf16.mxu0 0
        %1538 = vmatpush1.bf16.msra.mxu0 %v1479
        %1539 = vmatprep.subr.bf16.mxu0 0
        %1540 = vmatpush1.bf16.msra.mxu0 %v1480
        %1541 = vmatprep.subr.bf16.mxu0 0
        %1542 = vmatpush1.bf16.msra.mxu0 0
        %1543 = vmatprep.subr.bf16.mxu0 0
        %1544 = vmatpush1.bf16.msra.mxu0 0
        %1545 = vmatprep.subr.bf16.mxu0 0
        %1546 = vmatpush1.bf16.msra.mxu0 0
        %1547 = vmatprep.subr.bf16.mxu0 0
        %1548 = vmatpush1.bf16.msra.mxu0 0
        %1549 = vmatprep.subr.bf16.mxu0 0
        %1550 = vmatpush1.bf16.msra.mxu0 0
        %1551 = vmatprep.subr.bf16.mxu0 0
        %1552 = vmatpush1.bf16.msra.mxu0 0
        %1553 = vmatprep.subr.bf16.mxu0 0
        %1554 = vmatpush1.bf16.msra.mxu0 0
        %1555 = vmatprep.subr.bf16.mxu0 0
        %1556 = vmatpush1.bf16.msra.mxu0 0
        %1557 = vmatprep.subr.bf16.mxu0 0
        %1558 = vmatpush1.bf16.msra.mxu0 0
        %1559 = vmatprep.subr.bf16.mxu0 0
        %1560 = vmatpush1.bf16.msra.mxu0 0
        %1561 = vmatprep.subr.bf16.mxu0 0
        %1562 = vmatpush1.bf16.msra.mxu0 0
        %1563 = vmatprep.subr.bf16.mxu0 0
        %1564 = vmatpush1.bf16.msra.mxu0 0
        %1565 = vmatprep.mubr.bf16.mxu0 0
        %1566 = vmatmul.mubr.bf16.gmra.mrb[0].mxu0 %v1486
        %v1567 = vpop.f32.mrb[0].mxu0
        %v1568 = vadd.f32 0.0, %v1567
        %v1569 = vpop.f32.mrb[0].mxu0
        %v1570 = vpop.f32.mrb[0].mxu0
        %v1571 = vadd.f32 0.0, %v1570
        %v1572 = vpop.f32.mrb[0].mxu0
        %1573 = vmatprep.mubr.bf16.mxu0 0
        %1574 = vmatmul.mubr.bf16.gmra.mrb[0].mxu0 %v1489
        %v1575 = vpop.f32.mrb[0].mxu0
        %v1576 = vadd.f32 0.0, %v1575
        %v1577 = vpop.f32.mrb[0].mxu0
        %v1578 = vpop.f32.mrb[0].mxu0
        %v1579 = vadd.f32 0.0, %v1578
        %v1580 = vpop.f32.mrb[0].mxu0
        %1581 = vmatprep.mubr.bf16.mxu0 0
        %1582 = vmatmul.mubr.bf16.gmra.mrb[0].mxu0 %v1492
        %v1583 = vpop.f32.mrb[0].mxu0
        %v1584 = vadd.f32 0.0, %v1583
        %v1585 = vpop.f32.mrb[0].mxu0
        %v1586 = vpop.f32.mrb[0].mxu0
        %v1587 = vadd.f32 0.0, %v1586
        %v1588 = vpop.f32.mrb[0].mxu0
        %1589 = vmatprep.mubr.bf16.mxu0 0
        %1590 = vmatmul.mubr.bf16.gmra.mrb[0].mxu0 %v1495
        %v1591 = vpop.f32.mrb[0].mxu0
        %v1592 = vadd.f32 0.0, %v1591
        %v1593 = vpop.f32.mrb[0].mxu0
        %v1594 = vpop.f32.mrb[0].mxu0
        %v1595 = vadd.f32 0.0, %v1594
        %v1596 = vpop.f32.mrb[0].mxu0
        %1597 = vmatprep.mubr.bf16.mxu0 0
        %1598 = vmatmul.mubr.bf16.gmra.mrb[0].mxu0 %v1498
        %v1599 = vpop.f32.mrb[0].mxu0
        %v1600 = vadd.f32 0.0, %v1599
        %v1601 = vpop.f32.mrb[0].mxu0
        %v1602 = vpop.f32.mrb[0].mxu0
        %v1603 = vadd.f32 0.0, %v1602
        %v1604 = vpop.f32.mrb[0].mxu0
        %1605 = vmatprep.mubr.bf16.mxu0 0
        %1606 = vmatmul.mubr.bf16.gmra.mrb[0].mxu0 %v1501
        %v1607 = vpop.f32.mrb[0].mxu0
        %v1608 = vadd.f32 0.0, %v1607
        %v1609 = vpop.f32.mrb[0].mxu0
        %v1610 = vpop.f32.mrb[0].mxu0
        %v1611 = vadd.f32 0.0, %v1610
        %v1612 = vpop.f32.mrb[0].mxu0
        %1613 = vmatprep.mubr.bf16.mxu0 0
        %1614 = vmatmul.mubr.bf16.gmra.mrb[0].mxu0 %v1504
        %v1615 = vpop.f32.mrb[0].mxu0
        %v1616 = vadd.f32 0.0, %v1615
        %v1617 = vpop.f32.mrb[0].mxu0
        %v1618 = vpop.f32.mrb[0].mxu0
        %v1619 = vadd.f32 0.0, %v1618
        %v1620 = vpop.f32.mrb[0].mxu0
        %1621 = vmatprep.mubr.bf16.mxu0 0
        %1622 = vmatmul.mubr.bf16.gmra.mrb[0].mxu0 %v1507
        %v1623 = vpop.f32.mrb[0].mxu0
        %v1624 = vadd.f32 0.0, %v1623
        %v1625 = vpop.f32.mrb[0].mxu0
        %v1626 = vpop.f32.mrb[0].mxu0
        %v1627 = vadd.f32 0.0, %v1626
        %v1628 = vpop.f32.mrb[0].mxu0
        %1629 = vmatprep.mubr.bf16.mxu0 0
        %1630 = vmatmul.mubr.bf16.gmra.mrb[0].mxu0 %v1510
        %v1631 = vpop.f32.mrb[0].mxu0
        %v1632 = vadd.f32 0.0, %v1631
        %v1633 = vpop.f32.mrb[0].mxu0
        %v1634 = vpop.f32.mrb[0].mxu0
        %v1635 = vadd.f32 0.0, %v1634
        %v1636 = vpop.f32.mrb[0].mxu0
        %1637 = vmatprep.mubr.bf16.mxu0 0
        %1638 = vmatmul.mubr.bf16.gmra.mrb[0].mxu0 %v1513
        %v1639 = vpop.f32.mrb[0].mxu0
        %v1640 = vadd.f32 0.0, %v1639
        %v1641 = vpop.f32.mrb[0].mxu0
        %v1642 = vpop.f32.mrb[0].mxu0
        %v1643 = vadd.f32 0.0, %v1642
        %v1644 = vpop.f32.mrb[0].mxu0
        %1645 = vmatprep.mubr.bf16.mxu0 0
        %1646 = vmatmul.mubr.bf16.gmra.mrb[0].mxu0 %v1516
        %v1647 = vpop.f32.mrb[0].mxu0
        %v1648 = vadd.f32 0.0, %v1647
        %v1649 = vpop.f32.mrb[0].mxu0
        %v1650 = vpop.f32.mrb[0].mxu0
        %v1651 = vadd.f32 0.0, %v1650
        %v1652 = vpop.f32.mrb[0].mxu0
        %1653 = vmatprep.mubr.bf16.mxu0 0
        %1654 = vmatmul.mubr.bf16.gmra.mrb[0].mxu0 %v1519
        %v1655 = vpop.f32.mrb[0].mxu0
        %v1656 = vadd.f32 0.0, %v1655
        %v1657 = vpop.f32.mrb[0].mxu0
        %v1658 = vpop.f32.mrb[0].mxu0
        %v1659 = vadd.f32 0.0, %v1658
        %v1660 = vpop.f32.mrb[0].mxu0
        %1661 = vmatprep.mubr.bf16.mxu0 0
        %1662 = vmatmul.mubr.bf16.gmra.mrb[0].mxu0 %v1522
        %v1663 = vpop.f32.mrb[0].mxu0
        %v1664 = vadd.f32 0.0, %v1663
        %v1665 = vpop.f32.mrb[0].mxu0
        %v1666 = vpop.f32.mrb[0].mxu0
        %v1667 = vadd.f32 0.0, %v1666
        %v1668 = vpop.f32.mrb[0].mxu0
        %1669 = vmatprep.mubr.bf16.mxu0 0
        %1670 = vmatmul.mubr.bf16.gmra.mrb[0].mxu0 %v1525
        %v1671 = vpop.f32.mrb[0].mxu0
        %v1672 = vadd.f32 0.0, %v1671
        %v1673 = vpop.f32.mrb[0].mxu0
        %v1674 = vpop.f32.mrb[0].mxu0
        %v1675 = vadd.f32 0.0, %v1674
        %v1676 = vpop.f32.mrb[0].mxu0
        %1677 = vmatprep.mubr.bf16.mxu0 0
        %1678 = vmatmul.mubr.bf16.gmra.mrb[0].mxu0 %v1528
        %v1679 = vpop.f32.mrb[0].mxu0
        %v1680 = vadd.f32 0.0, %v1679
        %v1681 = vpop.f32.mrb[0].mxu0
        %v1682 = vpop.f32.mrb[0].mxu0
        %v1683 = vadd.f32 0.0, %v1682
        %v1684 = vpop.f32.mrb[0].mxu0
        %1685 = vmatprep.mubr.bf16.mxu0 0
        %1686 = vmatmul.mubr.bf16.gmra.mrb[0].mxu0 %v1531
        %v1687 = vpop.f32.mrb[0].mxu0
        %v1688 = vadd.f32 0.0, %v1687
        %v1689 = vpop.f32.mrb[0].mxu0
        %v1690 = vpop.f32.mrb[0].mxu0
        %v1691 = vadd.f32 0.0, %v1690
        %v1692 = vpop.f32.mrb[0].mxu0
        %1693 = vdwg.mxu0
        %v1694 = vadd.f32 %v1371, %v1568
        %v1695 = vadd.f32 %v1372, %v1571
        %v1696 = vadd.f32 %v1373, %v1576
        %v1697 = vadd.f32 %v1374, %v1579
        %v1698 = vadd.f32 %v1375, %v1584
        %v1699 = vadd.f32 %v1376, %v1587
        %v1700 = vadd.f32 %v1377, %v1592
        %v1701 = vadd.f32 %v1378, %v1595
        %v1702 = vadd.f32 %v1379, %v1600
        %v1703 = vadd.f32 %v1380, %v1603
        %v1704 = vadd.f32 %v1381, %v1608
        %v1705 = vadd.f32 %v1382, %v1611
        %v1706 = vadd.f32 %v1383, %v1616
        %v1707 = vadd.f32 %v1384, %v1619
        %v1708 = vadd.f32 %v1385, %v1624
        %v1709 = vadd.f32 %v1386, %v1627
        %v1710 = vadd.f32 %v1387, %v1632
        %v1711 = vadd.f32 %v1388, %v1635
        %v1712 = vadd.f32 %v1389, %v1640
        %v1713 = vadd.f32 %v1390, %v1643
        %v1714 = vadd.f32 %v1391, %v1648
        %v1715 = vadd.f32 %v1392, %v1651
        %v1716 = vadd.f32 %v1393, %v1656
        %v1717 = vadd.f32 %v1394, %v1659
        %v1718 = vadd.f32 %v1395, %v1664
        %v1719 = vadd.f32 %v1396, %v1667
        %v1720 = vadd.f32 %v1397, %v1672
        %v1721 = vadd.f32 %v1398, %v1675
        %v1722 = vadd.f32 %v1399, %v1680
        %v1723 = vadd.f32 %v1400, %v1683
        %v1724 = vadd.f32 %v1401, %v1688
        %v1725 = vadd.f32 %v1402, %v1691
        %v1726 = vld [vmem:[%s1403 + $0x1] sm:$0xff]
        %v1727 = vld [vmem:[%s1403 + $0x9] sm:$0xff]
        %v1728 = vld [vmem:[%s1403 + $0x19] sm:$0xff]
        %v1729 = vld [vmem:[%s1403 + $0x21] sm:$0xff]
        %v1730 = vld [vmem:[%s1403 + $0x31] sm:$0xff]
        %v1731 = vld [vmem:[%s1403 + $0x39] sm:$0xff]
        %v1732 = vld [vmem:[%s1403 + $0x49] sm:$0xff]
        %v1733 = vld [vmem:[%s1403 + $0x51] sm:$0xff]
        %v1734 = vld [vmem:[%s1403 + $0x61] sm:$0xff]
        %v1735 = vld [vmem:[%s1403 + $0x69] sm:$0xff]
        %v1736 = vld [vmem:[%s1403 + $0x79] sm:$0xff]
        %v1737 = vld [vmem:[%s1403 + $0x81] sm:$0xff]
        %v1738 = vld [vmem:[%s1403 + $0x91] sm:$0xff]
        %v1739 = vld [vmem:[%s1403 + $0x99] sm:$0xff]
        %v1740 = vld [vmem:[%s1403 + $0xa9] sm:$0xff]
        %v1741 = vld [vmem:[%s1403 + $0xb1] sm:$0xff]
        %v1742 = vld [vmem:[%s1403 + $0xc1] sm:$0xff]
        %v1743 = vld [vmem:[%s1403 + $0xc9] sm:$0xff]
        %v1744 = vld [vmem:[%s1403 + $0xd9] sm:$0xff]
        %v1745 = vld [vmem:[%s1403 + $0xe1] sm:$0xff]
        %v1746 = vld [vmem:[%s1403 + $0xf1] sm:$0xff]
        %v1747 = vld [vmem:[%s1403 + $0xf9] sm:$0xff]
        %v1748 = vld [vmem:[%s1403 + $0x109] sm:$0xff]
        %v1749 = vld [vmem:[%s1403 + $0x111] sm:$0xff]
        %v1750 = vld [vmem:[%s1403 + $0x121] sm:$0xff]
        %v1751 = vld [vmem:[%s1403 + $0x129] sm:$0xff]
        %v1752 = vld [vmem:[%s1403 + $0x139] sm:$0xff]
        %v1753 = vld [vmem:[%s1403 + $0x141] sm:$0xff]
        %v1754 = vld [vmem:[%s1403 + $0x151] sm:$0xff]
        %v1755 = vld [vmem:[%s1403 + $0x159] sm:$0xff]
        %v1756 = vld [vmem:[%s1403 + $0x169] sm:$0xff]
        %v1757 = vld [vmem:[%s1403 + $0x171] sm:$0xff]
        %v1758 = vpack.c.bf16 %v1727, %v1726
        %v1759 = vpack.c.bf16 %v1729, %v1728
        %v1760 = vpack.c.bf16 %v1731, %v1730
        %v1761 = vpack.c.bf16 %v1733, %v1732
        %v1762 = vpack.c.bf16 %v1735, %v1734
        %v1763 = vpack.c.bf16 %v1737, %v1736
        %v1764 = vpack.c.bf16 %v1739, %v1738
        %v1765 = vpack.c.bf16 %v1741, %v1740
        %v1766 = vpack.c.bf16 %v1743, %v1742
        %v1767 = vpack.c.bf16 %v1745, %v1744
        %v1768 = vpack.c.bf16 %v1747, %v1746
        %v1769 = vpack.c.bf16 %v1749, %v1748
        %v1770 = vpack.c.bf16 %v1751, %v1750
        %v1771 = vpack.c.bf16 %v1753, %v1752
        %v1772 = vpack.c.bf16 %v1755, %v1754
        %v1773 = vpack.c.bf16 %v1757, %v1756
        %s1774 = scalar_lea.vmem %s267, 128
        %v1775 = vld [vmem:[%s1774] sm:$0xf]
        %v1776 = vld [vmem:[%s1774 + $0x4] sm:$0xf]
        %v1777 = vld [vmem:[%s1774 + $0x8] sm:$0xf]
        %v1778 = vld [vmem:[%s1774 + $0xc] sm:$0xf]
        %v1779 = vld [vmem:[%s1774 + $0x10] sm:$0xf]
        %v1780 = vld [vmem:[%s1774 + $0x14] sm:$0xf]
        %v1781 = vld [vmem:[%s1774 + $0x18] sm:$0xf]
        %v1782 = vld [vmem:[%s1774 + $0x1c] sm:$0xf]
        %v1791 = vunpack.c.l.b16 %v1775
        %v1792 = vunpack.c.l.b16 %v1776
        %v1793 = vunpack.c.l.b16 %v1777
        %v1794 = vunpack.c.l.b16 %v1778
        %v1795 = vunpack.c.l.b16 %v1779
        %v1796 = vunpack.c.l.b16 %v1780
        %v1797 = vunpack.c.l.b16 %v1781
        %v1798 = vunpack.c.l.b16 %v1782
        %v1799 = vpack.c.b16 %v1792, %v1791
        %v1800 = vpack.c.b16 %v1794, %v1793
        %v1801 = vpack.c.b16 %v1796, %v1795
        %v1802 = vpack.c.b16 %v1798, %v1797
        %v1808 = vsel %vm638, %v1758, 0
        %v1811 = vsel %vm638, %v1759, 0
        %v1814 = vsel %vm638, %v1760, 0
        %v1817 = vsel %vm638, %v1761, 0
        %v1820 = vsel %vm638, %v1762, 0
        %v1823 = vsel %vm638, %v1763, 0
        %v1826 = vsel %vm638, %v1764, 0
        %v1829 = vsel %vm638, %v1765, 0
        %v1832 = vsel %vm638, %v1766, 0
        %v1835 = vsel %vm638, %v1767, 0
        %v1838 = vsel %vm638, %v1768, 0
        %v1841 = vsel %vm638, %v1769, 0
        %v1844 = vsel %vm638, %v1770, 0
        %v1847 = vsel %vm638, %v1771, 0
        %v1850 = vsel %vm638, %v1772, 0
        %v1853 = vsel %vm638, %v1773, 0
        %1855 = vmatprep.subr.bf16.mxu0 0
        %1856 = vmatpush1.bf16.msra.mxu0 %v1799
        %1857 = vmatprep.subr.bf16.mxu0 0
        %1858 = vmatpush1.bf16.msra.mxu0 %v1800
        %1859 = vmatprep.subr.bf16.mxu0 0
        %1860 = vmatpush1.bf16.msra.mxu0 %v1801
        %1861 = vmatprep.subr.bf16.mxu0 0
        %1862 = vmatpush1.bf16.msra.mxu0 %v1802
        %1863 = vmatprep.subr.bf16.mxu0 0
        %1864 = vmatpush1.bf16.msra.mxu0 0
        %1865 = vmatprep.subr.bf16.mxu0 0
        %1866 = vmatpush1.bf16.msra.mxu0 0
        %1867 = vmatprep.subr.bf16.mxu0 0
        %1868 = vmatpush1.bf16.msra.mxu0 0
        %1869 = vmatprep.subr.bf16.mxu0 0
        %1870 = vmatpush1.bf16.msra.mxu0 0
        %1871 = vmatprep.subr.bf16.mxu0 0
        %1872 = vmatpush1.bf16.msra.mxu0 0
        %1873 = vmatprep.subr.bf16.mxu0 0
        %1874 = vmatpush1.bf16.msra.mxu0 0
        %1875 = vmatprep.subr.bf16.mxu0 0
        %1876 = vmatpush1.bf16.msra.mxu0 0
        %1877 = vmatprep.subr.bf16.mxu0 0
        %1878 = vmatpush1.bf16.msra.mxu0 0
        %1879 = vmatprep.subr.bf16.mxu0 0
        %1880 = vmatpush1.bf16.msra.mxu0 0
        %1881 = vmatprep.subr.bf16.mxu0 0
        %1882 = vmatpush1.bf16.msra.mxu0 0
        %1883 = vmatprep.subr.bf16.mxu0 0
        %1884 = vmatpush1.bf16.msra.mxu0 0
        %1885 = vmatprep.subr.bf16.mxu0 0
        %1886 = vmatpush1.bf16.msra.mxu0 0
        %1887 = vmatprep.mubr.bf16.mxu0 0
        %1888 = vmatmul.mubr.bf16.gmra.mrb[0].mxu0 %v1808
        %v1889 = vpop.f32.mrb[0].mxu0
        %v1890 = vadd.f32 0.0, %v1889
        %v1891 = vpop.f32.mrb[0].mxu0
        %v1892 = vpop.f32.mrb[0].mxu0
        %v1893 = vadd.f32 0.0, %v1892
        %v1894 = vpop.f32.mrb[0].mxu0
        %1895 = vmatprep.mubr.bf16.mxu0 0
        %1896 = vmatmul.mubr.bf16.gmra.mrb[0].mxu0 %v1811
        %v1897 = vpop.f32.mrb[0].mxu0
        %v1898 = vadd.f32 0.0, %v1897
        %v1899 = vpop.f32.mrb[0].mxu0
        %v1900 = vpop.f32.mrb[0].mxu0
        %v1901 = vadd.f32 0.0, %v1900
        %v1902 = vpop.f32.mrb[0].mxu0
        %1903 = vmatprep.mubr.bf16.mxu0 0
        %1904 = vmatmul.mubr.bf16.gmra.mrb[0].mxu0 %v1814
        %v1905 = vpop.f32.mrb[0].mxu0
        %v1906 = vadd.f32 0.0, %v1905
        %v1907 = vpop.f32.mrb[0].mxu0
        %v1908 = vpop.f32.mrb[0].mxu0
        %v1909 = vadd.f32 0.0, %v1908
        %v1910 = vpop.f32.mrb[0].mxu0
        %1911 = vmatprep.mubr.bf16.mxu0 0
        %1912 = vmatmul.mubr.bf16.gmra.mrb[0].mxu0 %v1817
        %v1913 = vpop.f32.mrb[0].mxu0
        %v1914 = vadd.f32 0.0, %v1913
        %v1915 = vpop.f32.mrb[0].mxu0
        %v1916 = vpop.f32.mrb[0].mxu0
        %v1917 = vadd.f32 0.0, %v1916
        %v1918 = vpop.f32.mrb[0].mxu0
        %1919 = vmatprep.mubr.bf16.mxu0 0
        %1920 = vmatmul.mubr.bf16.gmra.mrb[0].mxu0 %v1820
        %v1921 = vpop.f32.mrb[0].mxu0
        %v1922 = vadd.f32 0.0, %v1921
        %v1923 = vpop.f32.mrb[0].mxu0
        %v1924 = vpop.f32.mrb[0].mxu0
        %v1925 = vadd.f32 0.0, %v1924
        %v1926 = vpop.f32.mrb[0].mxu0
        %1927 = vmatprep.mubr.bf16.mxu0 0
        %1928 = vmatmul.mubr.bf16.gmra.mrb[0].mxu0 %v1823
        %v1929 = vpop.f32.mrb[0].mxu0
        %v1930 = vadd.f32 0.0, %v1929
        %v1931 = vpop.f32.mrb[0].mxu0
        %v1932 = vpop.f32.mrb[0].mxu0
        %v1933 = vadd.f32 0.0, %v1932
        %v1934 = vpop.f32.mrb[0].mxu0
        %1935 = vmatprep.mubr.bf16.mxu0 0
        %1936 = vmatmul.mubr.bf16.gmra.mrb[0].mxu0 %v1826
        %v1937 = vpop.f32.mrb[0].mxu0
        %v1938 = vadd.f32 0.0, %v1937
        %v1939 = vpop.f32.mrb[0].mxu0
        %v1940 = vpop.f32.mrb[0].mxu0
        %v1941 = vadd.f32 0.0, %v1940
        %v1942 = vpop.f32.mrb[0].mxu0
        %1943 = vmatprep.mubr.bf16.mxu0 0
        %1944 = vmatmul.mubr.bf16.gmra.mrb[0].mxu0 %v1829
        %v1945 = vpop.f32.mrb[0].mxu0
        %v1946 = vadd.f32 0.0, %v1945
        %v1947 = vpop.f32.mrb[0].mxu0
        %v1948 = vpop.f32.mrb[0].mxu0
        %v1949 = vadd.f32 0.0, %v1948
        %v1950 = vpop.f32.mrb[0].mxu0
        %1951 = vmatprep.mubr.bf16.mxu0 0
        %1952 = vmatmul.mubr.bf16.gmra.mrb[0].mxu0 %v1832
        %v1953 = vpop.f32.mrb[0].mxu0
        %v1954 = vadd.f32 0.0, %v1953
        %v1955 = vpop.f32.mrb[0].mxu0
        %v1956 = vpop.f32.mrb[0].mxu0
        %v1957 = vadd.f32 0.0, %v1956
        %v1958 = vpop.f32.mrb[0].mxu0
        %1959 = vmatprep.mubr.bf16.mxu0 0
        %1960 = vmatmul.mubr.bf16.gmra.mrb[0].mxu0 %v1835
        %v1961 = vpop.f32.mrb[0].mxu0
        %v1962 = vadd.f32 0.0, %v1961
        %v1963 = vpop.f32.mrb[0].mxu0
        %v1964 = vpop.f32.mrb[0].mxu0
        %v1965 = vadd.f32 0.0, %v1964
        %v1966 = vpop.f32.mrb[0].mxu0
        %1967 = vmatprep.mubr.bf16.mxu0 0
        %1968 = vmatmul.mubr.bf16.gmra.mrb[0].mxu0 %v1838
        %v1969 = vpop.f32.mrb[0].mxu0
        %v1970 = vadd.f32 0.0, %v1969
        %v1971 = vpop.f32.mrb[0].mxu0
        %v1972 = vpop.f32.mrb[0].mxu0
        %v1973 = vadd.f32 0.0, %v1972
        %v1974 = vpop.f32.mrb[0].mxu0
        %1975 = vmatprep.mubr.bf16.mxu0 0
        %1976 = vmatmul.mubr.bf16.gmra.mrb[0].mxu0 %v1841
        %v1977 = vpop.f32.mrb[0].mxu0
        %v1978 = vadd.f32 0.0, %v1977
        %v1979 = vpop.f32.mrb[0].mxu0
        %v1980 = vpop.f32.mrb[0].mxu0
        %v1981 = vadd.f32 0.0, %v1980
        %v1982 = vpop.f32.mrb[0].mxu0
        %1983 = vmatprep.mubr.bf16.mxu0 0
        %1984 = vmatmul.mubr.bf16.gmra.mrb[0].mxu0 %v1844
        %v1985 = vpop.f32.mrb[0].mxu0
        %v1986 = vadd.f32 0.0, %v1985
        %v1987 = vpop.f32.mrb[0].mxu0
        %v1988 = vpop.f32.mrb[0].mxu0
        %v1989 = vadd.f32 0.0, %v1988
        %v1990 = vpop.f32.mrb[0].mxu0
        %1991 = vmatprep.mubr.bf16.mxu0 0
        %1992 = vmatmul.mubr.bf16.gmra.mrb[0].mxu0 %v1847
        %v1993 = vpop.f32.mrb[0].mxu0
        %v1994 = vadd.f32 0.0, %v1993
        %v1995 = vpop.f32.mrb[0].mxu0
        %v1996 = vpop.f32.mrb[0].mxu0
        %v1997 = vadd.f32 0.0, %v1996
        %v1998 = vpop.f32.mrb[0].mxu0
        %1999 = vmatprep.mubr.bf16.mxu0 0
        %2000 = vmatmul.mubr.bf16.gmra.mrb[0].mxu0 %v1850
        %v2001 = vpop.f32.mrb[0].mxu0
        %v2002 = vadd.f32 0.0, %v2001
        %v2003 = vpop.f32.mrb[0].mxu0
        %v2004 = vpop.f32.mrb[0].mxu0
        %v2005 = vadd.f32 0.0, %v2004
        %v2006 = vpop.f32.mrb[0].mxu0
        %2007 = vmatprep.mubr.bf16.mxu0 0
        %2008 = vmatmul.mubr.bf16.gmra.mrb[0].mxu0 %v1853
        %v2009 = vpop.f32.mrb[0].mxu0
        %v2010 = vadd.f32 0.0, %v2009
        %v2011 = vpop.f32.mrb[0].mxu0
        %v2012 = vpop.f32.mrb[0].mxu0
        %v2013 = vadd.f32 0.0, %v2012
        %v2014 = vpop.f32.mrb[0].mxu0
        %2015 = vdwg.mxu0
        %v2016 = vadd.f32 %v1694, %v1890
        %v2017 = vadd.f32 %v1695, %v1893
        %v2018 = vadd.f32 %v1696, %v1898
        %v2019 = vadd.f32 %v1697, %v1901
        %v2020 = vadd.f32 %v1698, %v1906
        %v2021 = vadd.f32 %v1699, %v1909
        %v2022 = vadd.f32 %v1700, %v1914
        %v2023 = vadd.f32 %v1701, %v1917
        %v2024 = vadd.f32 %v1702, %v1922
        %v2025 = vadd.f32 %v1703, %v1925
        %v2026 = vadd.f32 %v1704, %v1930
        %v2027 = vadd.f32 %v1705, %v1933
        %v2028 = vadd.f32 %v1706, %v1938
        %v2029 = vadd.f32 %v1707, %v1941
        %v2030 = vadd.f32 %v1708, %v1946
        %v2031 = vadd.f32 %v1709, %v1949
        %v2032 = vadd.f32 %v1710, %v1954
        %v2033 = vadd.f32 %v1711, %v1957
        %v2034 = vadd.f32 %v1712, %v1962
        %v2035 = vadd.f32 %v1713, %v1965
        %v2036 = vadd.f32 %v1714, %v1970
        %v2037 = vadd.f32 %v1715, %v1973
        %v2038 = vadd.f32 %v1716, %v1978
        %v2039 = vadd.f32 %v1717, %v1981
        %v2040 = vadd.f32 %v1718, %v1986
        %v2041 = vadd.f32 %v1719, %v1989
        %v2042 = vadd.f32 %v1720, %v1994
        %v2043 = vadd.f32 %v1721, %v1997
        %v2044 = vadd.f32 %v1722, %v2002
        %v2045 = vadd.f32 %v1723, %v2005
        %v2046 = vadd.f32 %v1724, %v2010
        %v2047 = vadd.f32 %v1725, %v2013
        %v2048 = vld [vmem:[%s1403 + $0x2] sm:$0xff]
        %v2049 = vld [vmem:[%s1403 + $0xa] sm:$0xff]
        %v2050 = vld [vmem:[%s1403 + $0x1a] sm:$0xff]
        %v2051 = vld [vmem:[%s1403 + $0x22] sm:$0xff]
        %v2052 = vld [vmem:[%s1403 + $0x32] sm:$0xff]
        %v2053 = vld [vmem:[%s1403 + $0x3a] sm:$0xff]
        %v2054 = vld [vmem:[%s1403 + $0x4a] sm:$0xff]
        %v2055 = vld [vmem:[%s1403 + $0x52] sm:$0xff]
        %v2056 = vld [vmem:[%s1403 + $0x62] sm:$0xff]
        %v2057 = vld [vmem:[%s1403 + $0x6a] sm:$0xff]
        %v2058 = vld [vmem:[%s1403 + $0x7a] sm:$0xff]
        %v2059 = vld [vmem:[%s1403 + $0x82] sm:$0xff]
        %v2060 = vld [vmem:[%s1403 + $0x92] sm:$0xff]
        %v2061 = vld [vmem:[%s1403 + $0x9a] sm:$0xff]
        %v2062 = vld [vmem:[%s1403 + $0xaa] sm:$0xff]
        %v2063 = vld [vmem:[%s1403 + $0xb2] sm:$0xff]
        %v2064 = vld [vmem:[%s1403 + $0xc2] sm:$0xff]
        %v2065 = vld [vmem:[%s1403 + $0xca] sm:$0xff]
        %v2066 = vld [vmem:[%s1403 + $0xda] sm:$0xff]
        %v2067 = vld [vmem:[%s1403 + $0xe2] sm:$0xff]
        %v2068 = vld [vmem:[%s1403 + $0xf2] sm:$0xff]
        %v2069 = vld [vmem:[%s1403 + $0xfa] sm:$0xff]
        %v2070 = vld [vmem:[%s1403 + $0x10a] sm:$0xff]
        %v2071 = vld [vmem:[%s1403 + $0x112] sm:$0xff]
        %v2072 = vld [vmem:[%s1403 + $0x122] sm:$0xff]
        %v2073 = vld [vmem:[%s1403 + $0x12a] sm:$0xff]
        %v2074 = vld [vmem:[%s1403 + $0x13a] sm:$0xff]
        %v2075 = vld [vmem:[%s1403 + $0x142] sm:$0xff]
        %v2076 = vld [vmem:[%s1403 + $0x152] sm:$0xff]
        %v2077 = vld [vmem:[%s1403 + $0x15a] sm:$0xff]
        %v2078 = vld [vmem:[%s1403 + $0x16a] sm:$0xff]
        %v2079 = vld [vmem:[%s1403 + $0x172] sm:$0xff]
        %v2080 = vpack.c.bf16 %v2049, %v2048
        %v2081 = vpack.c.bf16 %v2051, %v2050
        %v2082 = vpack.c.bf16 %v2053, %v2052
        %v2083 = vpack.c.bf16 %v2055, %v2054
        %v2084 = vpack.c.bf16 %v2057, %v2056
        %v2085 = vpack.c.bf16 %v2059, %v2058
        %v2086 = vpack.c.bf16 %v2061, %v2060
        %v2087 = vpack.c.bf16 %v2063, %v2062
        %v2088 = vpack.c.bf16 %v2065, %v2064
        %v2089 = vpack.c.bf16 %v2067, %v2066
        %v2090 = vpack.c.bf16 %v2069, %v2068
        %v2091 = vpack.c.bf16 %v2071, %v2070
        %v2092 = vpack.c.bf16 %v2073, %v2072
        %v2093 = vpack.c.bf16 %v2075, %v2074
        %v2094 = vpack.c.bf16 %v2077, %v2076
        %v2095 = vpack.c.bf16 %v2079, %v2078
        %s2096 = scalar_lea.vmem %s267, 160
        %v2097 = vld [vmem:[%s2096] sm:$0xf]
        %v2098 = vld [vmem:[%s2096 + $0x4] sm:$0xf]
        %v2099 = vld [vmem:[%s2096 + $0x8] sm:$0xf]
        %v2100 = vld [vmem:[%s2096 + $0xc] sm:$0xf]
        %v2101 = vld [vmem:[%s2096 + $0x10] sm:$0xf]
        %v2102 = vld [vmem:[%s2096 + $0x14] sm:$0xf]
        %v2103 = vld [vmem:[%s2096 + $0x18] sm:$0xf]
        %v2104 = vld [vmem:[%s2096 + $0x1c] sm:$0xf]
        %v2113 = vunpack.c.l.b16 %v2097
        %v2114 = vunpack.c.l.b16 %v2098
        %v2115 = vunpack.c.l.b16 %v2099
        %v2116 = vunpack.c.l.b16 %v2100
        %v2117 = vunpack.c.l.b16 %v2101
        %v2118 = vunpack.c.l.b16 %v2102
        %v2119 = vunpack.c.l.b16 %v2103
        %v2120 = vunpack.c.l.b16 %v2104
        %v2121 = vpack.c.b16 %v2114, %v2113
        %v2122 = vpack.c.b16 %v2116, %v2115
        %v2123 = vpack.c.b16 %v2118, %v2117
        %v2124 = vpack.c.b16 %v2120, %v2119
        %v2130 = vsel %vm638, %v2080, 0
        %v2133 = vsel %vm638, %v2081, 0
        %v2136 = vsel %vm638, %v2082, 0
        %v2139 = vsel %vm638, %v2083, 0
        %v2142 = vsel %vm638, %v2084, 0
        %v2145 = vsel %vm638, %v2085, 0
        %v2148 = vsel %vm638, %v2086, 0
        %v2151 = vsel %vm638, %v2087, 0
        %v2154 = vsel %vm638, %v2088, 0
        %v2157 = vsel %vm638, %v2089, 0
        %v2160 = vsel %vm638, %v2090, 0
        %v2163 = vsel %vm638, %v2091, 0
        %v2166 = vsel %vm638, %v2092, 0
        %v2169 = vsel %vm638, %v2093, 0
        %v2172 = vsel %vm638, %v2094, 0
        %v2175 = vsel %vm638, %v2095, 0
        %2177 = vmatprep.subr.bf16.mxu0 0
        %2178 = vmatpush1.bf16.msra.mxu0 %v2121
        %2179 = vmatprep.subr.bf16.mxu0 0
        %2180 = vmatpush1.bf16.msra.mxu0 %v2122
        %2181 = vmatprep.subr.bf16.mxu0 0
        %2182 = vmatpush1.bf16.msra.mxu0 %v2123
        %2183 = vmatprep.subr.bf16.mxu0 0
        %2184 = vmatpush1.bf16.msra.mxu0 %v2124
        %2185 = vmatprep.subr.bf16.mxu0 0
        %2186 = vmatpush1.bf16.msra.mxu0 0
        %2187 = vmatprep.subr.bf16.mxu0 0
        %2188 = vmatpush1.bf16.msra.mxu0 0
        %2189 = vmatprep.subr.bf16.mxu0 0
        %2190 = vmatpush1.bf16.msra.mxu0 0
        %2191 = vmatprep.subr.bf16.mxu0 0
        %2192 = vmatpush1.bf16.msra.mxu0 0
        %2193 = vmatprep.subr.bf16.mxu0 0
        %2194 = vmatpush1.bf16.msra.mxu0 0
        %2195 = vmatprep.subr.bf16.mxu0 0
        %2196 = vmatpush1.bf16.msra.mxu0 0
        %2197 = vmatprep.subr.bf16.mxu0 0
        %2198 = vmatpush1.bf16.msra.mxu0 0
        %2199 = vmatprep.subr.bf16.mxu0 0
        %2200 = vmatpush1.bf16.msra.mxu0 0
        %2201 = vmatprep.subr.bf16.mxu0 0
        %2202 = vmatpush1.bf16.msra.mxu0 0
        %2203 = vmatprep.subr.bf16.mxu0 0
        %2204 = vmatpush1.bf16.msra.mxu0 0
        %2205 = vmatprep.subr.bf16.mxu0 0
        %2206 = vmatpush1.bf16.msra.mxu0 0
        %2207 = vmatprep.subr.bf16.mxu0 0
        %2208 = vmatpush1.bf16.msra.mxu0 0
        %2209 = vmatprep.mubr.bf16.mxu0 0
        %2210 = vmatmul.mubr.bf16.gmra.mrb[0].mxu0 %v2130
        %v2211 = vpop.f32.mrb[0].mxu0
        %v2212 = vadd.f32 0.0, %v2211
        %v2213 = vpop.f32.mrb[0].mxu0
        %v2214 = vpop.f32.mrb[0].mxu0
        %v2215 = vadd.f32 0.0, %v2214
        %v2216 = vpop.f32.mrb[0].mxu0
        %2217 = vmatprep.mubr.bf16.mxu0 0
        %2218 = vmatmul.mubr.bf16.gmra.mrb[0].mxu0 %v2133
        %v2219 = vpop.f32.mrb[0].mxu0
        %v2220 = vadd.f32 0.0, %v2219
        %v2221 = vpop.f32.mrb[0].mxu0
        %v2222 = vpop.f32.mrb[0].mxu0
        %v2223 = vadd.f32 0.0, %v2222
        %v2224 = vpop.f32.mrb[0].mxu0
        %2225 = vmatprep.mubr.bf16.mxu0 0
        %2226 = vmatmul.mubr.bf16.gmra.mrb[0].mxu0 %v2136
        %v2227 = vpop.f32.mrb[0].mxu0
        %v2228 = vadd.f32 0.0, %v2227
        %v2229 = vpop.f32.mrb[0].mxu0
        %v2230 = vpop.f32.mrb[0].mxu0
        %v2231 = vadd.f32 0.0, %v2230
        %v2232 = vpop.f32.mrb[0].mxu0
        %2233 = vmatprep.mubr.bf16.mxu0 0
        %2234 = vmatmul.mubr.bf16.gmra.mrb[0].mxu0 %v2139
        %v2235 = vpop.f32.mrb[0].mxu0
        %v2236 = vadd.f32 0.0, %v2235
        %v2237 = vpop.f32.mrb[0].mxu0
        %v2238 = vpop.f32.mrb[0].mxu0
        %v2239 = vadd.f32 0.0, %v2238
        %v2240 = vpop.f32.mrb[0].mxu0
        %2241 = vmatprep.mubr.bf16.mxu0 0
        %2242 = vmatmul.mubr.bf16.gmra.mrb[0].mxu0 %v2142
        %v2243 = vpop.f32.mrb[0].mxu0
        %v2244 = vadd.f32 0.0, %v2243
        %v2245 = vpop.f32.mrb[0].mxu0
        %v2246 = vpop.f32.mrb[0].mxu0
        %v2247 = vadd.f32 0.0, %v2246
        %v2248 = vpop.f32.mrb[0].mxu0
        %2249 = vmatprep.mubr.bf16.mxu0 0
        %2250 = vmatmul.mubr.bf16.gmra.mrb[0].mxu0 %v2145
        %v2251 = vpop.f32.mrb[0].mxu0
        %v2252 = vadd.f32 0.0, %v2251
        %v2253 = vpop.f32.mrb[0].mxu0
        %v2254 = vpop.f32.mrb[0].mxu0
        %v2255 = vadd.f32 0.0, %v2254
        %v2256 = vpop.f32.mrb[0].mxu0
        %2257 = vmatprep.mubr.bf16.mxu0 0
        %2258 = vmatmul.mubr.bf16.gmra.mrb[0].mxu0 %v2148
        %v2259 = vpop.f32.mrb[0].mxu0
        %v2260 = vadd.f32 0.0, %v2259
        %v2261 = vpop.f32.mrb[0].mxu0
        %v2262 = vpop.f32.mrb[0].mxu0
        %v2263 = vadd.f32 0.0, %v2262
        %v2264 = vpop.f32.mrb[0].mxu0
        %2265 = vmatprep.mubr.bf16.mxu0 0
        %2266 = vmatmul.mubr.bf16.gmra.mrb[0].mxu0 %v2151
        %v2267 = vpop.f32.mrb[0].mxu0
        %v2268 = vadd.f32 0.0, %v2267
        %v2269 = vpop.f32.mrb[0].mxu0
        %v2270 = vpop.f32.mrb[0].mxu0
        %v2271 = vadd.f32 0.0, %v2270
        %v2272 = vpop.f32.mrb[0].mxu0
        %2273 = vmatprep.mubr.bf16.mxu0 0
        %2274 = vmatmul.mubr.bf16.gmra.mrb[0].mxu0 %v2154
        %v2275 = vpop.f32.mrb[0].mxu0
        %v2276 = vadd.f32 0.0, %v2275
        %v2277 = vpop.f32.mrb[0].mxu0
        %v2278 = vpop.f32.mrb[0].mxu0
        %v2279 = vadd.f32 0.0, %v2278
        %v2280 = vpop.f32.mrb[0].mxu0
        %2281 = vmatprep.mubr.bf16.mxu0 0
        %2282 = vmatmul.mubr.bf16.gmra.mrb[0].mxu0 %v2157
        %v2283 = vpop.f32.mrb[0].mxu0
        %v2284 = vadd.f32 0.0, %v2283
        %v2285 = vpop.f32.mrb[0].mxu0
        %v2286 = vpop.f32.mrb[0].mxu0
        %v2287 = vadd.f32 0.0, %v2286
        %v2288 = vpop.f32.mrb[0].mxu0
        %2289 = vmatprep.mubr.bf16.mxu0 0
        %2290 = vmatmul.mubr.bf16.gmra.mrb[0].mxu0 %v2160
        %v2291 = vpop.f32.mrb[0].mxu0
        %v2292 = vadd.f32 0.0, %v2291
        %v2293 = vpop.f32.mrb[0].mxu0
        %v2294 = vpop.f32.mrb[0].mxu0
        %v2295 = vadd.f32 0.0, %v2294
        %v2296 = vpop.f32.mrb[0].mxu0
        %2297 = vmatprep.mubr.bf16.mxu0 0
        %2298 = vmatmul.mubr.bf16.gmra.mrb[0].mxu0 %v2163
        %v2299 = vpop.f32.mrb[0].mxu0
        %v2300 = vadd.f32 0.0, %v2299
        %v2301 = vpop.f32.mrb[0].mxu0
        %v2302 = vpop.f32.mrb[0].mxu0
        %v2303 = vadd.f32 0.0, %v2302
        %v2304 = vpop.f32.mrb[0].mxu0
        %2305 = vmatprep.mubr.bf16.mxu0 0
        %2306 = vmatmul.mubr.bf16.gmra.mrb[0].mxu0 %v2166
        %v2307 = vpop.f32.mrb[0].mxu0
        %v2308 = vadd.f32 0.0, %v2307
        %v2309 = vpop.f32.mrb[0].mxu0
        %v2310 = vpop.f32.mrb[0].mxu0
        %v2311 = vadd.f32 0.0, %v2310
        %v2312 = vpop.f32.mrb[0].mxu0
        %2313 = vmatprep.mubr.bf16.mxu0 0
        %2314 = vmatmul.mubr.bf16.gmra.mrb[0].mxu0 %v2169
        %v2315 = vpop.f32.mrb[0].mxu0
        %v2316 = vadd.f32 0.0, %v2315
        %v2317 = vpop.f32.mrb[0].mxu0
        %v2318 = vpop.f32.mrb[0].mxu0
        %v2319 = vadd.f32 0.0, %v2318
        %v2320 = vpop.f32.mrb[0].mxu0
        %2321 = vmatprep.mubr.bf16.mxu0 0
        %2322 = vmatmul.mubr.bf16.gmra.mrb[0].mxu0 %v2172
        %v2323 = vpop.f32.mrb[0].mxu0
        %v2324 = vadd.f32 0.0, %v2323
        %v2325 = vpop.f32.mrb[0].mxu0
        %v2326 = vpop.f32.mrb[0].mxu0
        %v2327 = vadd.f32 0.0, %v2326
        %v2328 = vpop.f32.mrb[0].mxu0
        %2329 = vmatprep.mubr.bf16.mxu0 0
        %2330 = vmatmul.mubr.bf16.gmra.mrb[0].mxu0 %v2175
        %v2331 = vpop.f32.mrb[0].mxu0
        %v2332 = vadd.f32 0.0, %v2331
        %v2333 = vpop.f32.mrb[0].mxu0
        %v2334 = vpop.f32.mrb[0].mxu0
        %v2335 = vadd.f32 0.0, %v2334
        %v2336 = vpop.f32.mrb[0].mxu0
        %2337 = vdwg.mxu0
        %v2338 = vadd.f32 %v2016, %v2212
        %v2339 = vadd.f32 %v2017, %v2215
        %v2340 = vadd.f32 %v2018, %v2220
        %v2341 = vadd.f32 %v2019, %v2223
        %v2342 = vadd.f32 %v2020, %v2228
        %v2343 = vadd.f32 %v2021, %v2231
        %v2344 = vadd.f32 %v2022, %v2236
        %v2345 = vadd.f32 %v2023, %v2239
        %v2346 = vadd.f32 %v2024, %v2244
        %v2347 = vadd.f32 %v2025, %v2247
        %v2348 = vadd.f32 %v2026, %v2252
        %v2349 = vadd.f32 %v2027, %v2255
        %v2350 = vadd.f32 %v2028, %v2260
        %v2351 = vadd.f32 %v2029, %v2263
        %v2352 = vadd.f32 %v2030, %v2268
        %v2353 = vadd.f32 %v2031, %v2271
        %v2354 = vadd.f32 %v2032, %v2276
        %v2355 = vadd.f32 %v2033, %v2279
        %v2356 = vadd.f32 %v2034, %v2284
        %v2357 = vadd.f32 %v2035, %v2287
        %v2358 = vadd.f32 %v2036, %v2292
        %v2359 = vadd.f32 %v2037, %v2295
        %v2360 = vadd.f32 %v2038, %v2300
        %v2361 = vadd.f32 %v2039, %v2303
        %v2362 = vadd.f32 %v2040, %v2308
        %v2363 = vadd.f32 %v2041, %v2311
        %v2364 = vadd.f32 %v2042, %v2316
        %v2365 = vadd.f32 %v2043, %v2319
        %v2366 = vadd.f32 %v2044, %v2324
        %v2367 = vadd.f32 %v2045, %v2327
        %v2368 = vadd.f32 %v2046, %v2332
        %v2369 = vadd.f32 %v2047, %v2335
        %s2370 = scalar_lea.vmem [#allocation2], 48
        %v2371 = vld [vmem:[%s2370] sm:$0xff]
        %v2372 = vld [vmem:[%s2370 + $0x8] sm:$0xff]
        %v2373 = vld [vmem:[%s2370 + $0x18] sm:$0xff]
        %v2374 = vld [vmem:[%s2370 + $0x20] sm:$0xff]
        %v2375 = vld [vmem:[%s2370 + $0x30] sm:$0xff]
        %v2376 = vld [vmem:[%s2370 + $0x38] sm:$0xff]
        %v2377 = vld [vmem:[%s2370 + $0x48] sm:$0xff]
        %v2378 = vld [vmem:[%s2370 + $0x50] sm:$0xff]
        %v2379 = vld [vmem:[%s2370 + $0x60] sm:$0xff]
        %v2380 = vld [vmem:[%s2370 + $0x68] sm:$0xff]
        %v2381 = vld [vmem:[%s2370 + $0x78] sm:$0xff]
        %v2382 = vld [vmem:[%s2370 + $0x80] sm:$0xff]
        %v2383 = vld [vmem:[%s2370 + $0x90] sm:$0xff]
        %v2384 = vld [vmem:[%s2370 + $0x98] sm:$0xff]
        %v2385 = vld [vmem:[%s2370 + $0xa8] sm:$0xff]
        %v2386 = vld [vmem:[%s2370 + $0xb0] sm:$0xff]
        %v2387 = vld [vmem:[%s2370 + $0xc0] sm:$0xff]
        %v2388 = vld [vmem:[%s2370 + $0xc8] sm:$0xff]
        %v2389 = vld [vmem:[%s2370 + $0xd8] sm:$0xff]
        %v2390 = vld [vmem:[%s2370 + $0xe0] sm:$0xff]
        %v2391 = vld [vmem:[%s2370 + $0xf0] sm:$0xff]
        %v2392 = vld [vmem:[%s2370 + $0xf8] sm:$0xff]
        %v2393 = vld [vmem:[%s2370 + $0x108] sm:$0xff]
        %v2394 = vld [vmem:[%s2370 + $0x110] sm:$0xff]
        %v2395 = vld [vmem:[%s2370 + $0x120] sm:$0xff]
        %v2396 = vld [vmem:[%s2370 + $0x128] sm:$0xff]
        %v2397 = vld [vmem:[%s2370 + $0x138] sm:$0xff]
        %v2398 = vld [vmem:[%s2370 + $0x140] sm:$0xff]
        %v2399 = vld [vmem:[%s2370 + $0x150] sm:$0xff]
        %v2400 = vld [vmem:[%s2370 + $0x158] sm:$0xff]
        %v2401 = vld [vmem:[%s2370 + $0x168] sm:$0xff]
        %v2402 = vld [vmem:[%s2370 + $0x170] sm:$0xff]
        %v2403 = vpack.c.bf16 %v2372, %v2371
        %v2404 = vpack.c.bf16 %v2374, %v2373
        %v2405 = vpack.c.bf16 %v2376, %v2375
        %v2406 = vpack.c.bf16 %v2378, %v2377
        %v2407 = vpack.c.bf16 %v2380, %v2379
        %v2408 = vpack.c.bf16 %v2382, %v2381
        %v2409 = vpack.c.bf16 %v2384, %v2383
        %v2410 = vpack.c.bf16 %v2386, %v2385
        %v2411 = vpack.c.bf16 %v2388, %v2387
        %v2412 = vpack.c.bf16 %v2390, %v2389
        %v2413 = vpack.c.bf16 %v2392, %v2391
        %v2414 = vpack.c.bf16 %v2394, %v2393
        %v2415 = vpack.c.bf16 %v2396, %v2395
        %v2416 = vpack.c.bf16 %v2398, %v2397
        %v2417 = vpack.c.bf16 %v2400, %v2399
        %v2418 = vpack.c.bf16 %v2402, %v2401
        %s2419 = scalar_lea.vmem %s267, 192
        %v2420 = vld [vmem:[%s2419] sm:$0xf]
        %v2421 = vld [vmem:[%s2419 + $0x4] sm:$0xf]
        %v2422 = vld [vmem:[%s2419 + $0x8] sm:$0xf]
        %v2423 = vld [vmem:[%s2419 + $0xc] sm:$0xf]
        %v2424 = vld [vmem:[%s2419 + $0x10] sm:$0xf]
        %v2425 = vld [vmem:[%s2419 + $0x14] sm:$0xf]
        %v2426 = vld [vmem:[%s2419 + $0x18] sm:$0xf]
        %v2427 = vld [vmem:[%s2419 + $0x1c] sm:$0xf]
        %v2436 = vunpack.c.l.b16 %v2420
        %v2437 = vunpack.c.l.b16 %v2421
        %v2438 = vunpack.c.l.b16 %v2422
        %v2439 = vunpack.c.l.b16 %v2423
        %v2440 = vunpack.c.l.b16 %v2424
        %v2441 = vunpack.c.l.b16 %v2425
        %v2442 = vunpack.c.l.b16 %v2426
        %v2443 = vunpack.c.l.b16 %v2427
        %v2444 = vpack.c.b16 %v2437, %v2436
        %v2445 = vpack.c.b16 %v2439, %v2438
        %v2446 = vpack.c.b16 %v2441, %v2440
        %v2447 = vpack.c.b16 %v2443, %v2442
        %v2453 = vsel %vm638, %v2403, 0
        %v2456 = vsel %vm638, %v2404, 0
        %v2459 = vsel %vm638, %v2405, 0
        %v2462 = vsel %vm638, %v2406, 0
        %v2465 = vsel %vm638, %v2407, 0
        %v2468 = vsel %vm638, %v2408, 0
        %v2471 = vsel %vm638, %v2409, 0
        %v2474 = vsel %vm638, %v2410, 0
        %v2477 = vsel %vm638, %v2411, 0
        %v2480 = vsel %vm638, %v2412, 0
        %v2483 = vsel %vm638, %v2413, 0
        %v2486 = vsel %vm638, %v2414, 0
        %v2489 = vsel %vm638, %v2415, 0
        %v2492 = vsel %vm638, %v2416, 0
        %v2495 = vsel %vm638, %v2417, 0
        %v2498 = vsel %vm638, %v2418, 0
        %2500 = vmatprep.subr.bf16.mxu0 0
        %2501 = vmatpush1.bf16.msra.mxu0 %v2444
        %2502 = vmatprep.subr.bf16.mxu0 0
        %2503 = vmatpush1.bf16.msra.mxu0 %v2445
        %2504 = vmatprep.subr.bf16.mxu0 0
        %2505 = vmatpush1.bf16.msra.mxu0 %v2446
        %2506 = vmatprep.subr.bf16.mxu0 0
        %2507 = vmatpush1.bf16.msra.mxu0 %v2447
        %2508 = vmatprep.subr.bf16.mxu0 0
        %2509 = vmatpush1.bf16.msra.mxu0 0
        %2510 = vmatprep.subr.bf16.mxu0 0
        %2511 = vmatpush1.bf16.msra.mxu0 0
        %2512 = vmatprep.subr.bf16.mxu0 0
        %2513 = vmatpush1.bf16.msra.mxu0 0
        %2514 = vmatprep.subr.bf16.mxu0 0
        %2515 = vmatpush1.bf16.msra.mxu0 0
        %2516 = vmatprep.subr.bf16.mxu0 0
        %2517 = vmatpush1.bf16.msra.mxu0 0
        %2518 = vmatprep.subr.bf16.mxu0 0
        %2519 = vmatpush1.bf16.msra.mxu0 0
        %2520 = vmatprep.subr.bf16.mxu0 0
        %2521 = vmatpush1.bf16.msra.mxu0 0
        %2522 = vmatprep.subr.bf16.mxu0 0
        %2523 = vmatpush1.bf16.msra.mxu0 0
        %2524 = vmatprep.subr.bf16.mxu0 0
        %2525 = vmatpush1.bf16.msra.mxu0 0
        %2526 = vmatprep.subr.bf16.mxu0 0
        %2527 = vmatpush1.bf16.msra.mxu0 0
        %2528 = vmatprep.subr.bf16.mxu0 0
        %2529 = vmatpush1.bf16.msra.mxu0 0
        %2530 = vmatprep.subr.bf16.mxu0 0
        %2531 = vmatpush1.bf16.msra.mxu0 0
        %2532 = vmatprep.mubr.bf16.mxu0 0
        %2533 = vmatmul.mubr.bf16.gmra.mrb[0].mxu0 %v2453
        %v2534 = vpop.f32.mrb[0].mxu0
        %v2535 = vadd.f32 0.0, %v2534
        %v2536 = vpop.f32.mrb[0].mxu0
        %v2537 = vpop.f32.mrb[0].mxu0
        %v2538 = vadd.f32 0.0, %v2537
        %v2539 = vpop.f32.mrb[0].mxu0
        %2540 = vmatprep.mubr.bf16.mxu0 0
        %2541 = vmatmul.mubr.bf16.gmra.mrb[0].mxu0 %v2456
        %v2542 = vpop.f32.mrb[0].mxu0
        %v2543 = vadd.f32 0.0, %v2542
        %v2544 = vpop.f32.mrb[0].mxu0
        %v2545 = vpop.f32.mrb[0].mxu0
        %v2546 = vadd.f32 0.0, %v2545
        %v2547 = vpop.f32.mrb[0].mxu0
        %2548 = vmatprep.mubr.bf16.mxu0 0
        %2549 = vmatmul.mubr.bf16.gmra.mrb[0].mxu0 %v2459
        %v2550 = vpop.f32.mrb[0].mxu0
        %v2551 = vadd.f32 0.0, %v2550
        %v2552 = vpop.f32.mrb[0].mxu0
        %v2553 = vpop.f32.mrb[0].mxu0
        %v2554 = vadd.f32 0.0, %v2553
        %v2555 = vpop.f32.mrb[0].mxu0
        %2556 = vmatprep.mubr.bf16.mxu0 0
        %2557 = vmatmul.mubr.bf16.gmra.mrb[0].mxu0 %v2462
        %v2558 = vpop.f32.mrb[0].mxu0
        %v2559 = vadd.f32 0.0, %v2558
        %v2560 = vpop.f32.mrb[0].mxu0
        %v2561 = vpop.f32.mrb[0].mxu0
        %v2562 = vadd.f32 0.0, %v2561
        %v2563 = vpop.f32.mrb[0].mxu0
        %2564 = vmatprep.mubr.bf16.mxu0 0
        %2565 = vmatmul.mubr.bf16.gmra.mrb[0].mxu0 %v2465
        %v2566 = vpop.f32.mrb[0].mxu0
        %v2567 = vadd.f32 0.0, %v2566
        %v2568 = vpop.f32.mrb[0].mxu0
        %v2569 = vpop.f32.mrb[0].mxu0
        %v2570 = vadd.f32 0.0, %v2569
        %v2571 = vpop.f32.mrb[0].mxu0
        %2572 = vmatprep.mubr.bf16.mxu0 0
        %2573 = vmatmul.mubr.bf16.gmra.mrb[0].mxu0 %v2468
        %v2574 = vpop.f32.mrb[0].mxu0
        %v2575 = vadd.f32 0.0, %v2574
        %v2576 = vpop.f32.mrb[0].mxu0
        %v2577 = vpop.f32.mrb[0].mxu0
        %v2578 = vadd.f32 0.0, %v2577
        %v2579 = vpop.f32.mrb[0].mxu0
        %2580 = vmatprep.mubr.bf16.mxu0 0
        %2581 = vmatmul.mubr.bf16.gmra.mrb[0].mxu0 %v2471
        %v2582 = vpop.f32.mrb[0].mxu0
        %v2583 = vadd.f32 0.0, %v2582
        %v2584 = vpop.f32.mrb[0].mxu0
        %v2585 = vpop.f32.mrb[0].mxu0
        %v2586 = vadd.f32 0.0, %v2585
        %v2587 = vpop.f32.mrb[0].mxu0
        %2588 = vmatprep.mubr.bf16.mxu0 0
        %2589 = vmatmul.mubr.bf16.gmra.mrb[0].mxu0 %v2474
        %v2590 = vpop.f32.mrb[0].mxu0
        %v2591 = vadd.f32 0.0, %v2590
        %v2592 = vpop.f32.mrb[0].mxu0
        %v2593 = vpop.f32.mrb[0].mxu0
        %v2594 = vadd.f32 0.0, %v2593
        %v2595 = vpop.f32.mrb[0].mxu0
        %2596 = vmatprep.mubr.bf16.mxu0 0
        %2597 = vmatmul.mubr.bf16.gmra.mrb[0].mxu0 %v2477
        %v2598 = vpop.f32.mrb[0].mxu0
        %v2599 = vadd.f32 0.0, %v2598
        %v2600 = vpop.f32.mrb[0].mxu0
        %v2601 = vpop.f32.mrb[0].mxu0
        %v2602 = vadd.f32 0.0, %v2601
        %v2603 = vpop.f32.mrb[0].mxu0
        %2604 = vmatprep.mubr.bf16.mxu0 0
        %2605 = vmatmul.mubr.bf16.gmra.mrb[0].mxu0 %v2480
        %v2606 = vpop.f32.mrb[0].mxu0
        %v2607 = vadd.f32 0.0, %v2606
        %v2608 = vpop.f32.mrb[0].mxu0
        %v2609 = vpop.f32.mrb[0].mxu0
        %v2610 = vadd.f32 0.0, %v2609
        %v2611 = vpop.f32.mrb[0].mxu0
        %2612 = vmatprep.mubr.bf16.mxu0 0
        %2613 = vmatmul.mubr.bf16.gmra.mrb[0].mxu0 %v2483
        %v2614 = vpop.f32.mrb[0].mxu0
        %v2615 = vadd.f32 0.0, %v2614
        %v2616 = vpop.f32.mrb[0].mxu0
        %v2617 = vpop.f32.mrb[0].mxu0
        %v2618 = vadd.f32 0.0, %v2617
        %v2619 = vpop.f32.mrb[0].mxu0
        %2620 = vmatprep.mubr.bf16.mxu0 0
        %2621 = vmatmul.mubr.bf16.gmra.mrb[0].mxu0 %v2486
        %v2622 = vpop.f32.mrb[0].mxu0
        %v2623 = vadd.f32 0.0, %v2622
        %v2624 = vpop.f32.mrb[0].mxu0
        %v2625 = vpop.f32.mrb[0].mxu0
        %v2626 = vadd.f32 0.0, %v2625
        %v2627 = vpop.f32.mrb[0].mxu0
        %2628 = vmatprep.mubr.bf16.mxu0 0
        %2629 = vmatmul.mubr.bf16.gmra.mrb[0].mxu0 %v2489
        %v2630 = vpop.f32.mrb[0].mxu0
        %v2631 = vadd.f32 0.0, %v2630
        %v2632 = vpop.f32.mrb[0].mxu0
        %v2633 = vpop.f32.mrb[0].mxu0
        %v2634 = vadd.f32 0.0, %v2633
        %v2635 = vpop.f32.mrb[0].mxu0
        %2636 = vmatprep.mubr.bf16.mxu0 0
        %2637 = vmatmul.mubr.bf16.gmra.mrb[0].mxu0 %v2492
        %v2638 = vpop.f32.mrb[0].mxu0
        %v2639 = vadd.f32 0.0, %v2638
        %v2640 = vpop.f32.mrb[0].mxu0
        %v2641 = vpop.f32.mrb[0].mxu0
        %v2642 = vadd.f32 0.0, %v2641
        %v2643 = vpop.f32.mrb[0].mxu0
        %2644 = vmatprep.mubr.bf16.mxu0 0
        %2645 = vmatmul.mubr.bf16.gmra.mrb[0].mxu0 %v2495
        %v2646 = vpop.f32.mrb[0].mxu0
        %v2647 = vadd.f32 0.0, %v2646
        %v2648 = vpop.f32.mrb[0].mxu0
        %v2649 = vpop.f32.mrb[0].mxu0
        %v2650 = vadd.f32 0.0, %v2649
        %v2651 = vpop.f32.mrb[0].mxu0
        %2652 = vmatprep.mubr.bf16.mxu0 0
        %2653 = vmatmul.mubr.bf16.gmra.mrb[0].mxu0 %v2498
        %v2654 = vpop.f32.mrb[0].mxu0
        %v2655 = vadd.f32 0.0, %v2654
        %v2656 = vpop.f32.mrb[0].mxu0
        %v2657 = vpop.f32.mrb[0].mxu0
        %v2658 = vadd.f32 0.0, %v2657
        %v2659 = vpop.f32.mrb[0].mxu0
        %2660 = vdwg.mxu0
        %v2661 = vadd.f32 %v2338, %v2535
        %v2662 = vadd.f32 %v2339, %v2538
        %v2663 = vadd.f32 %v2340, %v2543
        %v2664 = vadd.f32 %v2341, %v2546
        %v2665 = vadd.f32 %v2342, %v2551
        %v2666 = vadd.f32 %v2343, %v2554
        %v2667 = vadd.f32 %v2344, %v2559
        %v2668 = vadd.f32 %v2345, %v2562
        %v2669 = vadd.f32 %v2346, %v2567
        %v2670 = vadd.f32 %v2347, %v2570
        %v2671 = vadd.f32 %v2348, %v2575
        %v2672 = vadd.f32 %v2349, %v2578
        %v2673 = vadd.f32 %v2350, %v2583
        %v2674 = vadd.f32 %v2351, %v2586
        %v2675 = vadd.f32 %v2352, %v2591
        %v2676 = vadd.f32 %v2353, %v2594
        %v2677 = vadd.f32 %v2354, %v2599
        %v2678 = vadd.f32 %v2355, %v2602
        %v2679 = vadd.f32 %v2356, %v2607
        %v2680 = vadd.f32 %v2357, %v2610
        %v2681 = vadd.f32 %v2358, %v2615
        %v2682 = vadd.f32 %v2359, %v2618
        %v2683 = vadd.f32 %v2360, %v2623
        %v2684 = vadd.f32 %v2361, %v2626
        %v2685 = vadd.f32 %v2362, %v2631
        %v2686 = vadd.f32 %v2363, %v2634
        %v2687 = vadd.f32 %v2364, %v2639
        %v2688 = vadd.f32 %v2365, %v2642
        %v2689 = vadd.f32 %v2366, %v2647
        %v2690 = vadd.f32 %v2367, %v2650
        %v2691 = vadd.f32 %v2368, %v2655
        %v2692 = vadd.f32 %v2369, %v2658
        %v2693 = vld [vmem:[%s2370 + $0x1] sm:$0xff]
        %v2694 = vld [vmem:[%s2370 + $0x9] sm:$0xff]
        %v2695 = vld [vmem:[%s2370 + $0x19] sm:$0xff]
        %v2696 = vld [vmem:[%s2370 + $0x21] sm:$0xff]
        %v2697 = vld [vmem:[%s2370 + $0x31] sm:$0xff]
        %v2698 = vld [vmem:[%s2370 + $0x39] sm:$0xff]
        %v2699 = vld [vmem:[%s2370 + $0x49] sm:$0xff]
        %v2700 = vld [vmem:[%s2370 + $0x51] sm:$0xff]
        %v2701 = vld [vmem:[%s2370 + $0x61] sm:$0xff]
        %v2702 = vld [vmem:[%s2370 + $0x69] sm:$0xff]
        %v2703 = vld [vmem:[%s2370 + $0x79] sm:$0xff]
        %v2704 = vld [vmem:[%s2370 + $0x81] sm:$0xff]
        %v2705 = vld [vmem:[%s2370 + $0x91] sm:$0xff]
        %v2706 = vld [vmem:[%s2370 + $0x99] sm:$0xff]
        %v2707 = vld [vmem:[%s2370 + $0xa9] sm:$0xff]
        %v2708 = vld [vmem:[%s2370 + $0xb1] sm:$0xff]
        %v2709 = vld [vmem:[%s2370 + $0xc1] sm:$0xff]
        %v2710 = vld [vmem:[%s2370 + $0xc9] sm:$0xff]
        %v2711 = vld [vmem:[%s2370 + $0xd9] sm:$0xff]
        %v2712 = vld [vmem:[%s2370 + $0xe1] sm:$0xff]
        %v2713 = vld [vmem:[%s2370 + $0xf1] sm:$0xff]
        %v2714 = vld [vmem:[%s2370 + $0xf9] sm:$0xff]
        %v2715 = vld [vmem:[%s2370 + $0x109] sm:$0xff]
        %v2716 = vld [vmem:[%s2370 + $0x111] sm:$0xff]
        %v2717 = vld [vmem:[%s2370 + $0x121] sm:$0xff]
        %v2718 = vld [vmem:[%s2370 + $0x129] sm:$0xff]
        %v2719 = vld [vmem:[%s2370 + $0x139] sm:$0xff]
        %v2720 = vld [vmem:[%s2370 + $0x141] sm:$0xff]
        %v2721 = vld [vmem:[%s2370 + $0x151] sm:$0xff]
        %v2722 = vld [vmem:[%s2370 + $0x159] sm:$0xff]
        %v2723 = vld [vmem:[%s2370 + $0x169] sm:$0xff]
        %v2724 = vld [vmem:[%s2370 + $0x171] sm:$0xff]
        %v2725 = vpack.c.bf16 %v2694, %v2693
        %v2726 = vpack.c.bf16 %v2696, %v2695
        %v2727 = vpack.c.bf16 %v2698, %v2697
        %v2728 = vpack.c.bf16 %v2700, %v2699
        %v2729 = vpack.c.bf16 %v2702, %v2701
        %v2730 = vpack.c.bf16 %v2704, %v2703
        %v2731 = vpack.c.bf16 %v2706, %v2705
        %v2732 = vpack.c.bf16 %v2708, %v2707
        %v2733 = vpack.c.bf16 %v2710, %v2709
        %v2734 = vpack.c.bf16 %v2712, %v2711
        %v2735 = vpack.c.bf16 %v2714, %v2713
        %v2736 = vpack.c.bf16 %v2716, %v2715
        %v2737 = vpack.c.bf16 %v2718, %v2717
        %v2738 = vpack.c.bf16 %v2720, %v2719
        %v2739 = vpack.c.bf16 %v2722, %v2721
        %v2740 = vpack.c.bf16 %v2724, %v2723
        %s2741 = scalar_lea.vmem %s267, 224
        %v2742 = vld [vmem:[%s2741] sm:$0xf]
        %v2743 = vld [vmem:[%s2741 + $0x4] sm:$0xf]
        %v2744 = vld [vmem:[%s2741 + $0x8] sm:$0xf]
        %v2745 = vld [vmem:[%s2741 + $0xc] sm:$0xf]
        %v2746 = vld [vmem:[%s2741 + $0x10] sm:$0xf]
        %v2747 = vld [vmem:[%s2741 + $0x14] sm:$0xf]
        %v2748 = vld [vmem:[%s2741 + $0x18] sm:$0xf]
        %v2749 = vld [vmem:[%s2741 + $0x1c] sm:$0xf]
        %v2758 = vunpack.c.l.b16 %v2742
        %v2759 = vunpack.c.l.b16 %v2743
        %v2760 = vunpack.c.l.b16 %v2744
        %v2761 = vunpack.c.l.b16 %v2745
        %v2762 = vunpack.c.l.b16 %v2746
        %v2763 = vunpack.c.l.b16 %v2747
        %v2764 = vunpack.c.l.b16 %v2748
        %v2765 = vunpack.c.l.b16 %v2749
        %v2766 = vpack.c.b16 %v2759, %v2758
        %v2767 = vpack.c.b16 %v2761, %v2760
        %v2768 = vpack.c.b16 %v2763, %v2762
        %v2769 = vpack.c.b16 %v2765, %v2764
        %v2775 = vsel %vm638, %v2725, 0
        %v2778 = vsel %vm638, %v2726, 0
        %v2781 = vsel %vm638, %v2727, 0
        %v2784 = vsel %vm638, %v2728, 0
        %v2787 = vsel %vm638, %v2729, 0
        %v2790 = vsel %vm638, %v2730, 0
        %v2793 = vsel %vm638, %v2731, 0
        %v2796 = vsel %vm638, %v2732, 0
        %v2799 = vsel %vm638, %v2733, 0
        %v2802 = vsel %vm638, %v2734, 0
        %v2805 = vsel %vm638, %v2735, 0
        %v2808 = vsel %vm638, %v2736, 0
        %v2811 = vsel %vm638, %v2737, 0
        %v2814 = vsel %vm638, %v2738, 0
        %v2817 = vsel %vm638, %v2739, 0
        %v2820 = vsel %vm638, %v2740, 0
        %2822 = vmatprep.subr.bf16.mxu0 0
        %2823 = vmatpush1.bf16.msra.mxu0 %v2766
        %2824 = vmatprep.subr.bf16.mxu0 0
        %2825 = vmatpush1.bf16.msra.mxu0 %v2767
        %2826 = vmatprep.subr.bf16.mxu0 0
        %2827 = vmatpush1.bf16.msra.mxu0 %v2768
        %2828 = vmatprep.subr.bf16.mxu0 0
        %2829 = vmatpush1.bf16.msra.mxu0 %v2769
        %2830 = vmatprep.subr.bf16.mxu0 0
        %2831 = vmatpush1.bf16.msra.mxu0 0
        %2832 = vmatprep.subr.bf16.mxu0 0
        %2833 = vmatpush1.bf16.msra.mxu0 0
        %2834 = vmatprep.subr.bf16.mxu0 0
        %2835 = vmatpush1.bf16.msra.mxu0 0
        %2836 = vmatprep.subr.bf16.mxu0 0
        %2837 = vmatpush1.bf16.msra.mxu0 0
        %2838 = vmatprep.subr.bf16.mxu0 0
        %2839 = vmatpush1.bf16.msra.mxu0 0
        %2840 = vmatprep.subr.bf16.mxu0 0
        %2841 = vmatpush1.bf16.msra.mxu0 0
        %2842 = vmatprep.subr.bf16.mxu0 0
        %2843 = vmatpush1.bf16.msra.mxu0 0
        %2844 = vmatprep.subr.bf16.mxu0 0
        %2845 = vmatpush1.bf16.msra.mxu0 0
        %2846 = vmatprep.subr.bf16.mxu0 0
        %2847 = vmatpush1.bf16.msra.mxu0 0
        %2848 = vmatprep.subr.bf16.mxu0 0
        %2849 = vmatpush1.bf16.msra.mxu0 0
        %2850 = vmatprep.subr.bf16.mxu0 0
        %2851 = vmatpush1.bf16.msra.mxu0 0
        %2852 = vmatprep.subr.bf16.mxu0 0
        %2853 = vmatpush1.bf16.msra.mxu0 0
        %2854 = vmatprep.mubr.bf16.mxu0 0
        %2855 = vmatmul.mubr.bf16.gmra.mrb[0].mxu0 %v2775
        %v2856 = vpop.f32.mrb[0].mxu0
        %v2857 = vadd.f32 0.0, %v2856
        %v2858 = vpop.f32.mrb[0].mxu0
        %v2859 = vpop.f32.mrb[0].mxu0
        %v2860 = vadd.f32 0.0, %v2859
        %v2861 = vpop.f32.mrb[0].mxu0
        %2862 = vmatprep.mubr.bf16.mxu0 0
        %2863 = vmatmul.mubr.bf16.gmra.mrb[0].mxu0 %v2778
        %v2864 = vpop.f32.mrb[0].mxu0
        %v2865 = vadd.f32 0.0, %v2864
        %v2866 = vpop.f32.mrb[0].mxu0
        %v2867 = vpop.f32.mrb[0].mxu0
        %v2868 = vadd.f32 0.0, %v2867
        %v2869 = vpop.f32.mrb[0].mxu0
        %2870 = vmatprep.mubr.bf16.mxu0 0
        %2871 = vmatmul.mubr.bf16.gmra.mrb[0].mxu0 %v2781
        %v2872 = vpop.f32.mrb[0].mxu0
        %v2873 = vadd.f32 0.0, %v2872
        %v2874 = vpop.f32.mrb[0].mxu0
        %v2875 = vpop.f32.mrb[0].mxu0
        %v2876 = vadd.f32 0.0, %v2875
        %v2877 = vpop.f32.mrb[0].mxu0
        %2878 = vmatprep.mubr.bf16.mxu0 0
        %2879 = vmatmul.mubr.bf16.gmra.mrb[0].mxu0 %v2784
        %v2880 = vpop.f32.mrb[0].mxu0
        %v2881 = vadd.f32 0.0, %v2880
        %v2882 = vpop.f32.mrb[0].mxu0
        %v2883 = vpop.f32.mrb[0].mxu0
        %v2884 = vadd.f32 0.0, %v2883
        %v2885 = vpop.f32.mrb[0].mxu0
        %2886 = vmatprep.mubr.bf16.mxu0 0
        %2887 = vmatmul.mubr.bf16.gmra.mrb[0].mxu0 %v2787
        %v2888 = vpop.f32.mrb[0].mxu0
        %v2889 = vadd.f32 0.0, %v2888
        %v2890 = vpop.f32.mrb[0].mxu0
        %v2891 = vpop.f32.mrb[0].mxu0
        %v2892 = vadd.f32 0.0, %v2891
        %v2893 = vpop.f32.mrb[0].mxu0
        %2894 = vmatprep.mubr.bf16.mxu0 0
        %2895 = vmatmul.mubr.bf16.gmra.mrb[0].mxu0 %v2790
        %v2896 = vpop.f32.mrb[0].mxu0
        %v2897 = vadd.f32 0.0, %v2896
        %v2898 = vpop.f32.mrb[0].mxu0
        %v2899 = vpop.f32.mrb[0].mxu0
        %v2900 = vadd.f32 0.0, %v2899
        %v2901 = vpop.f32.mrb[0].mxu0
        %2902 = vmatprep.mubr.bf16.mxu0 0
        %2903 = vmatmul.mubr.bf16.gmra.mrb[0].mxu0 %v2793
        %v2904 = vpop.f32.mrb[0].mxu0
        %v2905 = vadd.f32 0.0, %v2904
        %v2906 = vpop.f32.mrb[0].mxu0
        %v2907 = vpop.f32.mrb[0].mxu0
        %v2908 = vadd.f32 0.0, %v2907
        %v2909 = vpop.f32.mrb[0].mxu0
        %2910 = vmatprep.mubr.bf16.mxu0 0
        %2911 = vmatmul.mubr.bf16.gmra.mrb[0].mxu0 %v2796
        %v2912 = vpop.f32.mrb[0].mxu0
        %v2913 = vadd.f32 0.0, %v2912
        %v2914 = vpop.f32.mrb[0].mxu0
        %v2915 = vpop.f32.mrb[0].mxu0
        %v2916 = vadd.f32 0.0, %v2915
        %v2917 = vpop.f32.mrb[0].mxu0
        %2918 = vmatprep.mubr.bf16.mxu0 0
        %2919 = vmatmul.mubr.bf16.gmra.mrb[0].mxu0 %v2799
        %v2920 = vpop.f32.mrb[0].mxu0
        %v2921 = vadd.f32 0.0, %v2920
        %v2922 = vpop.f32.mrb[0].mxu0
        %v2923 = vpop.f32.mrb[0].mxu0
        %v2924 = vadd.f32 0.0, %v2923
        %v2925 = vpop.f32.mrb[0].mxu0
        %2926 = vmatprep.mubr.bf16.mxu0 0
        %2927 = vmatmul.mubr.bf16.gmra.mrb[0].mxu0 %v2802
        %v2928 = vpop.f32.mrb[0].mxu0
        %v2929 = vadd.f32 0.0, %v2928
        %v2930 = vpop.f32.mrb[0].mxu0
        %v2931 = vpop.f32.mrb[0].mxu0
        %v2932 = vadd.f32 0.0, %v2931
        %v2933 = vpop.f32.mrb[0].mxu0
        %2934 = vmatprep.mubr.bf16.mxu0 0
        %2935 = vmatmul.mubr.bf16.gmra.mrb[0].mxu0 %v2805
        %v2936 = vpop.f32.mrb[0].mxu0
        %v2937 = vadd.f32 0.0, %v2936
        %v2938 = vpop.f32.mrb[0].mxu0
        %v2939 = vpop.f32.mrb[0].mxu0
        %v2940 = vadd.f32 0.0, %v2939
        %v2941 = vpop.f32.mrb[0].mxu0
        %2942 = vmatprep.mubr.bf16.mxu0 0
        %2943 = vmatmul.mubr.bf16.gmra.mrb[0].mxu0 %v2808
        %v2944 = vpop.f32.mrb[0].mxu0
        %v2945 = vadd.f32 0.0, %v2944
        %v2946 = vpop.f32.mrb[0].mxu0
        %v2947 = vpop.f32.mrb[0].mxu0
        %v2948 = vadd.f32 0.0, %v2947
        %v2949 = vpop.f32.mrb[0].mxu0
        %2950 = vmatprep.mubr.bf16.mxu0 0
        %2951 = vmatmul.mubr.bf16.gmra.mrb[0].mxu0 %v2811
        %v2952 = vpop.f32.mrb[0].mxu0
        %v2953 = vadd.f32 0.0, %v2952
        %v2954 = vpop.f32.mrb[0].mxu0
        %v2955 = vpop.f32.mrb[0].mxu0
        %v2956 = vadd.f32 0.0, %v2955
        %v2957 = vpop.f32.mrb[0].mxu0
        %2958 = vmatprep.mubr.bf16.mxu0 0
        %2959 = vmatmul.mubr.bf16.gmra.mrb[0].mxu0 %v2814
        %v2960 = vpop.f32.mrb[0].mxu0
        %v2961 = vadd.f32 0.0, %v2960
        %v2962 = vpop.f32.mrb[0].mxu0
        %v2963 = vpop.f32.mrb[0].mxu0
        %v2964 = vadd.f32 0.0, %v2963
        %v2965 = vpop.f32.mrb[0].mxu0
        %2966 = vmatprep.mubr.bf16.mxu0 0
        %2967 = vmatmul.mubr.bf16.gmra.mrb[0].mxu0 %v2817
        %v2968 = vpop.f32.mrb[0].mxu0
        %v2969 = vadd.f32 0.0, %v2968
        %v2970 = vpop.f32.mrb[0].mxu0
        %v2971 = vpop.f32.mrb[0].mxu0
        %v2972 = vadd.f32 0.0, %v2971
        %v2973 = vpop.f32.mrb[0].mxu0
        %2974 = vmatprep.mubr.bf16.mxu0 0
        %2975 = vmatmul.mubr.bf16.gmra.mrb[0].mxu0 %v2820
        %v2976 = vpop.f32.mrb[0].mxu0
        %v2977 = vadd.f32 0.0, %v2976
        %v2978 = vpop.f32.mrb[0].mxu0
        %v2979 = vpop.f32.mrb[0].mxu0
        %v2980 = vadd.f32 0.0, %v2979
        %v2981 = vpop.f32.mrb[0].mxu0
        %2982 = vdwg.mxu0
        %v2983 = vadd.f32 %v2661, %v2857
        %v2984 = vadd.f32 %v2662, %v2860
        %v2985 = vadd.f32 %v2663, %v2865
        %v2986 = vadd.f32 %v2664, %v2868
        %v2987 = vadd.f32 %v2665, %v2873
        %v2988 = vadd.f32 %v2666, %v2876
        %v2989 = vadd.f32 %v2667, %v2881
        %v2990 = vadd.f32 %v2668, %v2884
        %v2991 = vadd.f32 %v2669, %v2889
        %v2992 = vadd.f32 %v2670, %v2892
        %v2993 = vadd.f32 %v2671, %v2897
        %v2994 = vadd.f32 %v2672, %v2900
        %v2995 = vadd.f32 %v2673, %v2905
        %v2996 = vadd.f32 %v2674, %v2908
        %v2997 = vadd.f32 %v2675, %v2913
        %v2998 = vadd.f32 %v2676, %v2916
        %v2999 = vadd.f32 %v2677, %v2921
        %v3000 = vadd.f32 %v2678, %v2924
        %v3001 = vadd.f32 %v2679, %v2929
        %v3002 = vadd.f32 %v2680, %v2932
        %v3003 = vadd.f32 %v2681, %v2937
        %v3004 = vadd.f32 %v2682, %v2940
        %v3005 = vadd.f32 %v2683, %v2945
        %v3006 = vadd.f32 %v2684, %v2948
        %v3007 = vadd.f32 %v2685, %v2953
        %v3008 = vadd.f32 %v2686, %v2956
        %v3009 = vadd.f32 %v2687, %v2961
        %v3010 = vadd.f32 %v2688, %v2964
        %v3011 = vadd.f32 %v2689, %v2969
        %v3012 = vadd.f32 %v2690, %v2972
        %v3013 = vadd.f32 %v2691, %v2977
        %v3014 = vadd.f32 %v2692, %v2980
        %v3015 = vld [vmem:[%s2370 + $0x2] sm:$0xff]
        %v3016 = vld [vmem:[%s2370 + $0xa] sm:$0xff]
        %v3017 = vld [vmem:[%s2370 + $0x1a] sm:$0xff]
        %v3018 = vld [vmem:[%s2370 + $0x22] sm:$0xff]
        %v3019 = vld [vmem:[%s2370 + $0x32] sm:$0xff]
        %v3020 = vld [vmem:[%s2370 + $0x3a] sm:$0xff]
        %v3021 = vld [vmem:[%s2370 + $0x4a] sm:$0xff]
        %v3022 = vld [vmem:[%s2370 + $0x52] sm:$0xff]
        %v3023 = vld [vmem:[%s2370 + $0x62] sm:$0xff]
        %v3024 = vld [vmem:[%s2370 + $0x6a] sm:$0xff]
        %v3025 = vld [vmem:[%s2370 + $0x7a] sm:$0xff]
        %v3026 = vld [vmem:[%s2370 + $0x82] sm:$0xff]
        %v3027 = vld [vmem:[%s2370 + $0x92] sm:$0xff]
        %v3028 = vld [vmem:[%s2370 + $0x9a] sm:$0xff]
        %v3029 = vld [vmem:[%s2370 + $0xaa] sm:$0xff]
        %v3030 = vld [vmem:[%s2370 + $0xb2] sm:$0xff]
        %v3031 = vld [vmem:[%s2370 + $0xc2] sm:$0xff]
        %v3032 = vld [vmem:[%s2370 + $0xca] sm:$0xff]
        %v3033 = vld [vmem:[%s2370 + $0xda] sm:$0xff]
        %v3034 = vld [vmem:[%s2370 + $0xe2] sm:$0xff]
        %v3035 = vld [vmem:[%s2370 + $0xf2] sm:$0xff]
        %v3036 = vld [vmem:[%s2370 + $0xfa] sm:$0xff]
        %v3037 = vld [vmem:[%s2370 + $0x10a] sm:$0xff]
        %v3038 = vld [vmem:[%s2370 + $0x112] sm:$0xff]
        %v3039 = vld [vmem:[%s2370 + $0x122] sm:$0xff]
        %v3040 = vld [vmem:[%s2370 + $0x12a] sm:$0xff]
        %v3041 = vld [vmem:[%s2370 + $0x13a] sm:$0xff]
        %v3042 = vld [vmem:[%s2370 + $0x142] sm:$0xff]
        %v3043 = vld [vmem:[%s2370 + $0x152] sm:$0xff]
        %v3044 = vld [vmem:[%s2370 + $0x15a] sm:$0xff]
        %v3045 = vld [vmem:[%s2370 + $0x16a] sm:$0xff]
        %v3046 = vld [vmem:[%s2370 + $0x172] sm:$0xff]
        %v3047 = vpack.c.bf16 %v3016, %v3015
        %v3048 = vpack.c.bf16 %v3018, %v3017
        %v3049 = vpack.c.bf16 %v3020, %v3019
        %v3050 = vpack.c.bf16 %v3022, %v3021
        %v3051 = vpack.c.bf16 %v3024, %v3023
        %v3052 = vpack.c.bf16 %v3026, %v3025
        %v3053 = vpack.c.bf16 %v3028, %v3027
        %v3054 = vpack.c.bf16 %v3030, %v3029
        %v3055 = vpack.c.bf16 %v3032, %v3031
        %v3056 = vpack.c.bf16 %v3034, %v3033
        %v3057 = vpack.c.bf16 %v3036, %v3035
        %v3058 = vpack.c.bf16 %v3038, %v3037
        %v3059 = vpack.c.bf16 %v3040, %v3039
        %v3060 = vpack.c.bf16 %v3042, %v3041
        %v3061 = vpack.c.bf16 %v3044, %v3043
        %v3062 = vpack.c.bf16 %v3046, %v3045
        %s3063 = scalar_lea.vmem %s267, 256
        %v3064 = vld [vmem:[%s3063] sm:$0xf]
        %v3065 = vld [vmem:[%s3063 + $0x4] sm:$0xf]
        %v3066 = vld [vmem:[%s3063 + $0x8] sm:$0xf]
        %v3067 = vld [vmem:[%s3063 + $0xc] sm:$0xf]
        %v3068 = vld [vmem:[%s3063 + $0x10] sm:$0xf]
        %v3069 = vld [vmem:[%s3063 + $0x14] sm:$0xf]
        %v3070 = vld [vmem:[%s3063 + $0x18] sm:$0xf]
        %v3071 = vld [vmem:[%s3063 + $0x1c] sm:$0xf]
        %v3080 = vunpack.c.l.b16 %v3064
        %v3081 = vunpack.c.l.b16 %v3065
        %v3082 = vunpack.c.l.b16 %v3066
        %v3083 = vunpack.c.l.b16 %v3067
        %v3084 = vunpack.c.l.b16 %v3068
        %v3085 = vunpack.c.l.b16 %v3069
        %v3086 = vunpack.c.l.b16 %v3070
        %v3087 = vunpack.c.l.b16 %v3071
        %v3088 = vpack.c.b16 %v3081, %v3080
        %v3089 = vpack.c.b16 %v3083, %v3082
        %v3090 = vpack.c.b16 %v3085, %v3084
        %v3091 = vpack.c.b16 %v3087, %v3086
        %v3097 = vsel %vm638, %v3047, 0
        %v3100 = vsel %vm638, %v3048, 0
        %v3103 = vsel %vm638, %v3049, 0
        %v3106 = vsel %vm638, %v3050, 0
        %v3109 = vsel %vm638, %v3051, 0
        %v3112 = vsel %vm638, %v3052, 0
        %v3115 = vsel %vm638, %v3053, 0
        %v3118 = vsel %vm638, %v3054, 0
        %v3121 = vsel %vm638, %v3055, 0
        %v3124 = vsel %vm638, %v3056, 0
        %v3127 = vsel %vm638, %v3057, 0
        %v3130 = vsel %vm638, %v3058, 0
        %v3133 = vsel %vm638, %v3059, 0
        %v3136 = vsel %vm638, %v3060, 0
        %v3139 = vsel %vm638, %v3061, 0
        %v3142 = vsel %vm638, %v3062, 0
        %3144 = vmatprep.subr.bf16.mxu0 0
        %3145 = vmatpush1.bf16.msra.mxu0 %v3088
        %3146 = vmatprep.subr.bf16.mxu0 0
        %3147 = vmatpush1.bf16.msra.mxu0 %v3089
        %3148 = vmatprep.subr.bf16.mxu0 0
        %3149 = vmatpush1.bf16.msra.mxu0 %v3090
        %3150 = vmatprep.subr.bf16.mxu0 0
        %3151 = vmatpush1.bf16.msra.mxu0 %v3091
        %3152 = vmatprep.subr.bf16.mxu0 0
        %3153 = vmatpush1.bf16.msra.mxu0 0
        %3154 = vmatprep.subr.bf16.mxu0 0
        %3155 = vmatpush1.bf16.msra.mxu0 0
        %3156 = vmatprep.subr.bf16.mxu0 0
        %3157 = vmatpush1.bf16.msra.mxu0 0
        %3158 = vmatprep.subr.bf16.mxu0 0
        %3159 = vmatpush1.bf16.msra.mxu0 0
        %3160 = vmatprep.subr.bf16.mxu0 0
        %3161 = vmatpush1.bf16.msra.mxu0 0
        %3162 = vmatprep.subr.bf16.mxu0 0
        %3163 = vmatpush1.bf16.msra.mxu0 0
        %3164 = vmatprep.subr.bf16.mxu0 0
        %3165 = vmatpush1.bf16.msra.mxu0 0
        %3166 = vmatprep.subr.bf16.mxu0 0
        %3167 = vmatpush1.bf16.msra.mxu0 0
        %3168 = vmatprep.subr.bf16.mxu0 0
        %3169 = vmatpush1.bf16.msra.mxu0 0
        %3170 = vmatprep.subr.bf16.mxu0 0
        %3171 = vmatpush1.bf16.msra.mxu0 0
        %3172 = vmatprep.subr.bf16.mxu0 0
        %3173 = vmatpush1.bf16.msra.mxu0 0
        %3174 = vmatprep.subr.bf16.mxu0 0
        %3175 = vmatpush1.bf16.msra.mxu0 0
        %3176 = vmatprep.mubr.bf16.mxu0 0
        %3177 = vmatmul.mubr.bf16.gmra.mrb[0].mxu0 %v3097
        %v3178 = vpop.f32.mrb[0].mxu0
        %v3179 = vadd.f32 0.0, %v3178
        %v3180 = vpop.f32.mrb[0].mxu0
        %v3181 = vpop.f32.mrb[0].mxu0
        %v3182 = vadd.f32 0.0, %v3181
        %v3183 = vpop.f32.mrb[0].mxu0
        %3184 = vmatprep.mubr.bf16.mxu0 0
        %3185 = vmatmul.mubr.bf16.gmra.mrb[0].mxu0 %v3100
        %v3186 = vpop.f32.mrb[0].mxu0
        %v3187 = vadd.f32 0.0, %v3186
        %v3188 = vpop.f32.mrb[0].mxu0
        %v3189 = vpop.f32.mrb[0].mxu0
        %v3190 = vadd.f32 0.0, %v3189
        %v3191 = vpop.f32.mrb[0].mxu0
        %3192 = vmatprep.mubr.bf16.mxu0 0
        %3193 = vmatmul.mubr.bf16.gmra.mrb[0].mxu0 %v3103
        %v3194 = vpop.f32.mrb[0].mxu0
        %v3195 = vadd.f32 0.0, %v3194
        %v3196 = vpop.f32.mrb[0].mxu0
        %v3197 = vpop.f32.mrb[0].mxu0
        %v3198 = vadd.f32 0.0, %v3197
        %v3199 = vpop.f32.mrb[0].mxu0
        %3200 = vmatprep.mubr.bf16.mxu0 0
        %3201 = vmatmul.mubr.bf16.gmra.mrb[0].mxu0 %v3106
        %v3202 = vpop.f32.mrb[0].mxu0
        %v3203 = vadd.f32 0.0, %v3202
        %v3204 = vpop.f32.mrb[0].mxu0
        %v3205 = vpop.f32.mrb[0].mxu0
        %v3206 = vadd.f32 0.0, %v3205
        %v3207 = vpop.f32.mrb[0].mxu0
        %3208 = vmatprep.mubr.bf16.mxu0 0
        %3209 = vmatmul.mubr.bf16.gmra.mrb[0].mxu0 %v3109
        %v3210 = vpop.f32.mrb[0].mxu0
        %v3211 = vadd.f32 0.0, %v3210
        %v3212 = vpop.f32.mrb[0].mxu0
        %v3213 = vpop.f32.mrb[0].mxu0
        %v3214 = vadd.f32 0.0, %v3213
        %v3215 = vpop.f32.mrb[0].mxu0
        %3216 = vmatprep.mubr.bf16.mxu0 0
        %3217 = vmatmul.mubr.bf16.gmra.mrb[0].mxu0 %v3112
        %v3218 = vpop.f32.mrb[0].mxu0
        %v3219 = vadd.f32 0.0, %v3218
        %v3220 = vpop.f32.mrb[0].mxu0
        %v3221 = vpop.f32.mrb[0].mxu0
        %v3222 = vadd.f32 0.0, %v3221
        %v3223 = vpop.f32.mrb[0].mxu0
        %3224 = vmatprep.mubr.bf16.mxu0 0
        %3225 = vmatmul.mubr.bf16.gmra.mrb[0].mxu0 %v3115
        %v3226 = vpop.f32.mrb[0].mxu0
        %v3227 = vadd.f32 0.0, %v3226
        %v3228 = vpop.f32.mrb[0].mxu0
        %v3229 = vpop.f32.mrb[0].mxu0
        %v3230 = vadd.f32 0.0, %v3229
        %v3231 = vpop.f32.mrb[0].mxu0
        %3232 = vmatprep.mubr.bf16.mxu0 0
        %3233 = vmatmul.mubr.bf16.gmra.mrb[0].mxu0 %v3118
        %v3234 = vpop.f32.mrb[0].mxu0
        %v3235 = vadd.f32 0.0, %v3234
        %v3236 = vpop.f32.mrb[0].mxu0
        %v3237 = vpop.f32.mrb[0].mxu0
        %v3238 = vadd.f32 0.0, %v3237
        %v3239 = vpop.f32.mrb[0].mxu0
        %3240 = vmatprep.mubr.bf16.mxu0 0
        %3241 = vmatmul.mubr.bf16.gmra.mrb[0].mxu0 %v3121
        %v3242 = vpop.f32.mrb[0].mxu0
        %v3243 = vadd.f32 0.0, %v3242
        %v3244 = vpop.f32.mrb[0].mxu0
        %v3245 = vpop.f32.mrb[0].mxu0
        %v3246 = vadd.f32 0.0, %v3245
        %v3247 = vpop.f32.mrb[0].mxu0
        %3248 = vmatprep.mubr.bf16.mxu0 0
        %3249 = vmatmul.mubr.bf16.gmra.mrb[0].mxu0 %v3124
        %v3250 = vpop.f32.mrb[0].mxu0
        %v3251 = vadd.f32 0.0, %v3250
        %v3252 = vpop.f32.mrb[0].mxu0
        %v3253 = vpop.f32.mrb[0].mxu0
        %v3254 = vadd.f32 0.0, %v3253
        %v3255 = vpop.f32.mrb[0].mxu0
        %3256 = vmatprep.mubr.bf16.mxu0 0
        %3257 = vmatmul.mubr.bf16.gmra.mrb[0].mxu0 %v3127
        %v3258 = vpop.f32.mrb[0].mxu0
        %v3259 = vadd.f32 0.0, %v3258
        %v3260 = vpop.f32.mrb[0].mxu0
        %v3261 = vpop.f32.mrb[0].mxu0
        %v3262 = vadd.f32 0.0, %v3261
        %v3263 = vpop.f32.mrb[0].mxu0
        %3264 = vmatprep.mubr.bf16.mxu0 0
        %3265 = vmatmul.mubr.bf16.gmra.mrb[0].mxu0 %v3130
        %v3266 = vpop.f32.mrb[0].mxu0
        %v3267 = vadd.f32 0.0, %v3266
        %v3268 = vpop.f32.mrb[0].mxu0
        %v3269 = vpop.f32.mrb[0].mxu0
        %v3270 = vadd.f32 0.0, %v3269
        %v3271 = vpop.f32.mrb[0].mxu0
        %3272 = vmatprep.mubr.bf16.mxu0 0
        %3273 = vmatmul.mubr.bf16.gmra.mrb[0].mxu0 %v3133
        %v3274 = vpop.f32.mrb[0].mxu0
        %v3275 = vadd.f32 0.0, %v3274
        %v3276 = vpop.f32.mrb[0].mxu0
        %v3277 = vpop.f32.mrb[0].mxu0
        %v3278 = vadd.f32 0.0, %v3277
        %v3279 = vpop.f32.mrb[0].mxu0
        %3280 = vmatprep.mubr.bf16.mxu0 0
        %3281 = vmatmul.mubr.bf16.gmra.mrb[0].mxu0 %v3136
        %v3282 = vpop.f32.mrb[0].mxu0
        %v3283 = vadd.f32 0.0, %v3282
        %v3284 = vpop.f32.mrb[0].mxu0
        %v3285 = vpop.f32.mrb[0].mxu0
        %v3286 = vadd.f32 0.0, %v3285
        %v3287 = vpop.f32.mrb[0].mxu0
        %3288 = vmatprep.mubr.bf16.mxu0 0
        %3289 = vmatmul.mubr.bf16.gmra.mrb[0].mxu0 %v3139
        %v3290 = vpop.f32.mrb[0].mxu0
        %v3291 = vadd.f32 0.0, %v3290
        %v3292 = vpop.f32.mrb[0].mxu0
        %v3293 = vpop.f32.mrb[0].mxu0
        %v3294 = vadd.f32 0.0, %v3293
        %v3295 = vpop.f32.mrb[0].mxu0
        %3296 = vmatprep.mubr.bf16.mxu0 0
        %3297 = vmatmul.mubr.bf16.gmra.mrb[0].mxu0 %v3142
        %v3298 = vpop.f32.mrb[0].mxu0
        %v3299 = vadd.f32 0.0, %v3298
        %v3300 = vpop.f32.mrb[0].mxu0
        %v3301 = vpop.f32.mrb[0].mxu0
        %v3302 = vadd.f32 0.0, %v3301
        %v3303 = vpop.f32.mrb[0].mxu0
        %3304 = vdwg.mxu0
        %v3305 = vadd.f32 %v2983, %v3179
        %v3306 = vadd.f32 %v2984, %v3182
        %v3307 = vadd.f32 %v2985, %v3187
        %v3308 = vadd.f32 %v2986, %v3190
        %v3309 = vadd.f32 %v2987, %v3195
        %v3310 = vadd.f32 %v2988, %v3198
        %v3311 = vadd.f32 %v2989, %v3203
        %v3312 = vadd.f32 %v2990, %v3206
        %v3313 = vadd.f32 %v2991, %v3211
        %v3314 = vadd.f32 %v2992, %v3214
        %v3315 = vadd.f32 %v2993, %v3219
        %v3316 = vadd.f32 %v2994, %v3222
        %v3317 = vadd.f32 %v2995, %v3227
        %v3318 = vadd.f32 %v2996, %v3230
        %v3319 = vadd.f32 %v2997, %v3235
        %v3320 = vadd.f32 %v2998, %v3238
        %v3321 = vadd.f32 %v2999, %v3243
        %v3322 = vadd.f32 %v3000, %v3246
        %v3323 = vadd.f32 %v3001, %v3251
        %v3324 = vadd.f32 %v3002, %v3254
        %v3325 = vadd.f32 %v3003, %v3259
        %v3326 = vadd.f32 %v3004, %v3262
        %v3327 = vadd.f32 %v3005, %v3267
        %v3328 = vadd.f32 %v3006, %v3270
        %v3329 = vadd.f32 %v3007, %v3275
        %v3330 = vadd.f32 %v3008, %v3278
        %v3331 = vadd.f32 %v3009, %v3283
        %v3332 = vadd.f32 %v3010, %v3286
        %v3333 = vadd.f32 %v3011, %v3291
        %v3334 = vadd.f32 %v3012, %v3294
        %v3335 = vadd.f32 %v3013, %v3299
        %v3336 = vadd.f32 %v3014, %v3302
        %v3337 = vsel %vm638, %v3305, 0.0
        %v3338 = vsel %vm638, %v3306, 0.0
        %v3339 = vadd.f32 %v3337, %v3338
        %v3340 = vsel %vm638, %v3307, 0.0
        %v3341 = vadd.f32 %v3339, %v3340
        %v3342 = vsel %vm638, %v3308, 0.0
        %v3343 = vadd.f32 %v3341, %v3342
        %v3344 = vsel %vm638, %v3309, 0.0
        %v3345 = vadd.f32 %v3343, %v3344
        %v3346 = vsel %vm638, %v3310, 0.0
        %v3347 = vadd.f32 %v3345, %v3346
        %v3348 = vsel %vm638, %v3311, 0.0
        %v3349 = vadd.f32 %v3347, %v3348
        %v3350 = vsel %vm638, %v3312, 0.0
        %v3351 = vadd.f32 %v3349, %v3350
        %v3352 = vsel %vm638, %v3313, 0.0
        %v3353 = vadd.f32 %v3351, %v3352
        %v3354 = vsel %vm638, %v3314, 0.0
        %v3355 = vadd.f32 %v3353, %v3354
        %v3356 = vsel %vm638, %v3315, 0.0
        %v3357 = vadd.f32 %v3355, %v3356
        %v3358 = vsel %vm638, %v3316, 0.0
        %v3359 = vadd.f32 %v3357, %v3358
        %v3360 = vsel %vm638, %v3317, 0.0
        %v3361 = vadd.f32 %v3359, %v3360
        %v3362 = vsel %vm638, %v3318, 0.0
        %v3363 = vadd.f32 %v3361, %v3362
        %v3364 = vsel %vm638, %v3319, 0.0
        %v3365 = vadd.f32 %v3363, %v3364
        %v3366 = vsel %vm638, %v3320, 0.0
        %v3367 = vadd.f32 %v3365, %v3366
        %v3368 = vsel %vm638, %v3321, 0.0
        %v3369 = vadd.f32 %v3367, %v3368
        %v3370 = vsel %vm638, %v3322, 0.0
        %v3371 = vadd.f32 %v3369, %v3370
        %v3372 = vsel %vm638, %v3323, 0.0
        %v3373 = vadd.f32 %v3371, %v3372
        %v3374 = vsel %vm638, %v3324, 0.0
        %v3375 = vadd.f32 %v3373, %v3374
        %v3376 = vsel %vm638, %v3325, 0.0
        %v3377 = vadd.f32 %v3375, %v3376
        %v3378 = vsel %vm638, %v3326, 0.0
        %v3379 = vadd.f32 %v3377, %v3378
        %v3380 = vsel %vm638, %v3327, 0.0
        %v3381 = vadd.f32 %v3379, %v3380
        %v3382 = vsel %vm638, %v3328, 0.0
        %v3383 = vadd.f32 %v3381, %v3382
        %v3384 = vsel %vm638, %v3329, 0.0
        %v3385 = vadd.f32 %v3383, %v3384
        %v3386 = vsel %vm638, %v3330, 0.0
        %v3387 = vadd.f32 %v3385, %v3386
        %v3388 = vsel %vm638, %v3331, 0.0
        %v3389 = vadd.f32 %v3387, %v3388
        %v3390 = vsel %vm638, %v3332, 0.0
        %v3391 = vadd.f32 %v3389, %v3390
        %v3392 = vsel %vm638, %v3333, 0.0
        %v3393 = vadd.f32 %v3391, %v3392
        %v3394 = vsel %vm638, %v3334, 0.0
        %v3395 = vadd.f32 %v3393, %v3394
        %v3396 = vsel %vm638, %v3335, 0.0
        %v3397 = vadd.f32 %v3395, %v3396
        %v3398 = vsel %vm638, %v3336, 0.0
        %v3399 = vadd.f32 %v3397, %v3398
        %v3400 = vrot.slane %v3399, 4
        %v3401 = vadd.f32 %v3399, %v3400
        %v3402 = vrot.slane %v3401, 2
        %v3403 = vadd.f32 %v3401, %v3402
        %v3404 = vrot.slane %v3403, 1
        %v3405 = vadd.f32 %v3403, %v3404
        %v3406 = vmul.f32 %v3305, %v3305
        %v3407 = vmul.f32 %v3306, %v3306
        %v3408 = vmul.f32 %v3307, %v3307
        %v3409 = vmul.f32 %v3308, %v3308
        %v3410 = vmul.f32 %v3309, %v3309
        %v3411 = vmul.f32 %v3310, %v3310
        %v3412 = vmul.f32 %v3311, %v3311
        %v3413 = vmul.f32 %v3312, %v3312
        %v3414 = vmul.f32 %v3313, %v3313
        %v3415 = vmul.f32 %v3314, %v3314
        %v3416 = vmul.f32 %v3315, %v3315
        %v3417 = vmul.f32 %v3316, %v3316
        %v3418 = vmul.f32 %v3317, %v3317
        %v3419 = vmul.f32 %v3318, %v3318
        %v3420 = vmul.f32 %v3319, %v3319
        %v3421 = vmul.f32 %v3320, %v3320
        %v3422 = vmul.f32 %v3321, %v3321
        %v3423 = vmul.f32 %v3322, %v3322
        %v3424 = vmul.f32 %v3323, %v3323
        %v3425 = vmul.f32 %v3324, %v3324
        %v3426 = vmul.f32 %v3325, %v3325
        %v3427 = vmul.f32 %v3326, %v3326
        %v3428 = vmul.f32 %v3327, %v3327
        %v3429 = vmul.f32 %v3328, %v3328
        %v3430 = vmul.f32 %v3329, %v3329
        %v3431 = vmul.f32 %v3330, %v3330
        %v3432 = vmul.f32 %v3331, %v3331
        %v3433 = vmul.f32 %v3332, %v3332
        %v3434 = vmul.f32 %v3333, %v3333
        %v3435 = vmul.f32 %v3334, %v3334
        %v3436 = vmul.f32 %v3335, %v3335
        %v3437 = vmul.f32 %v3336, %v3336
        %v3438 = vsel %vm638, %v3406, 0.0
        %v3439 = vsel %vm638, %v3407, 0.0
        %v3440 = vadd.f32 %v3438, %v3439
        %v3441 = vsel %vm638, %v3408, 0.0
        %v3442 = vadd.f32 %v3440, %v3441
        %v3443 = vsel %vm638, %v3409, 0.0
        %v3444 = vadd.f32 %v3442, %v3443
        %v3445 = vsel %vm638, %v3410, 0.0
        %v3446 = vadd.f32 %v3444, %v3445
        %v3447 = vsel %vm638, %v3411, 0.0
        %v3448 = vadd.f32 %v3446, %v3447
        %v3449 = vsel %vm638, %v3412, 0.0
        %v3450 = vadd.f32 %v3448, %v3449
        %v3451 = vsel %vm638, %v3413, 0.0
        %v3452 = vadd.f32 %v3450, %v3451
        %v3453 = vsel %vm638, %v3414, 0.0
        %v3454 = vadd.f32 %v3452, %v3453
        %v3455 = vsel %vm638, %v3415, 0.0
        %v3456 = vadd.f32 %v3454, %v3455
        %v3457 = vsel %vm638, %v3416, 0.0
        %v3458 = vadd.f32 %v3456, %v3457
        %v3459 = vsel %vm638, %v3417, 0.0
        %v3460 = vadd.f32 %v3458, %v3459
        %v3461 = vsel %vm638, %v3418, 0.0
        %v3462 = vadd.f32 %v3460, %v3461
        %v3463 = vsel %vm638, %v3419, 0.0
        %v3464 = vadd.f32 %v3462, %v3463
        %v3465 = vsel %vm638, %v3420, 0.0
        %v3466 = vadd.f32 %v3464, %v3465
        %v3467 = vsel %vm638, %v3421, 0.0
        %v3468 = vadd.f32 %v3466, %v3467
        %v3469 = vsel %vm638, %v3422, 0.0
        %v3470 = vadd.f32 %v3468, %v3469
        %v3471 = vsel %vm638, %v3423, 0.0
        %v3472 = vadd.f32 %v3470, %v3471
        %v3473 = vsel %vm638, %v3424, 0.0
        %v3474 = vadd.f32 %v3472, %v3473
        %v3475 = vsel %vm638, %v3425, 0.0
        %v3476 = vadd.f32 %v3474, %v3475
        %v3477 = vsel %vm638, %v3426, 0.0
        %v3478 = vadd.f32 %v3476, %v3477
        %v3479 = vsel %vm638, %v3427, 0.0
        %v3480 = vadd.f32 %v3478, %v3479
        %v3481 = vsel %vm638, %v3428, 0.0
        %v3482 = vadd.f32 %v3480, %v3481
        %v3483 = vsel %vm638, %v3429, 0.0
        %v3484 = vadd.f32 %v3482, %v3483
        %v3485 = vsel %vm638, %v3430, 0.0
        %v3486 = vadd.f32 %v3484, %v3485
        %v3487 = vsel %vm638, %v3431, 0.0
        %v3488 = vadd.f32 %v3486, %v3487
        %v3489 = vsel %vm638, %v3432, 0.0
        %v3490 = vadd.f32 %v3488, %v3489
        %v3491 = vsel %vm638, %v3433, 0.0
        %v3492 = vadd.f32 %v3490, %v3491
        %v3493 = vsel %vm638, %v3434, 0.0
        %v3494 = vadd.f32 %v3492, %v3493
        %v3495 = vsel %vm638, %v3435, 0.0
        %v3496 = vadd.f32 %v3494, %v3495
        %v3497 = vsel %vm638, %v3436, 0.0
        %v3498 = vadd.f32 %v3496, %v3497
        %v3499 = vsel %vm638, %v3437, 0.0
        %v3500 = vadd.f32 %v3498, %v3499
        %v3501 = vrot.slane %v3500, 4
        %v3502 = vadd.f32 %v3500, %v3501
        %v3503 = vrot.slane %v3502, 2
        %v3504 = vadd.f32 %v3502, %v3503
        %v3505 = vrot.slane %v3504, 1
        %v3506 = vadd.f32 %v3504, %v3505
        %vm3507 = vcmask 1040384
        %v3508 = vsel %vm3507, %v3405, %v3506
        %v3509 = vld [vmem:[%s3] sm:$0xff]
        %v3510 = vld [vmem:[%s3 + $0x8] sm:$0xff]
        %v3511 = vld [vmem:[%s3 + $0x10] sm:$0xff]
        %v3512 = vld [vmem:[%s3 + $0x18] sm:$0xff]
        %v3513 = vld [vmem:[%s3 + $0x20] sm:$0xff]
        %v3514 = vld [vmem:[%s3 + $0x28] sm:$0xff]
        %v3515 = vld [vmem:[%s3 + $0x30] sm:$0xff]
        %v3516 = vld [vmem:[%s3 + $0x38] sm:$0xff]
        %v3518 = vsel %vm638, %v3508, 0
        %3520 = vmatprep.subr.mxu0 0.0
        %3521 = vmatpush1.msra.mxu0 %v3509
        %3522 = vmatprep.subr.mxu0 0.0
        %3523 = vmatpush1.msra.mxu0 %v3510
        %3524 = vmatprep.subr.mxu0 0.0
        %3525 = vmatpush1.msra.mxu0 %v3511
        %3526 = vmatprep.subr.mxu0 0.0
        %3527 = vmatpush1.msra.mxu0 %v3512
        %3528 = vmatprep.subr.mxu0 0.0
        %3529 = vmatpush1.msra.mxu0 %v3513
        %3530 = vmatprep.subr.mxu0 0.0
        %3531 = vmatpush1.msra.mxu0 %v3514
        %3532 = vmatprep.subr.mxu0 0.0
        %3533 = vmatpush1.msra.mxu0 %v3515
        %3534 = vmatprep.subr.mxu0 0.0
        %3535 = vmatpush1.msra.mxu0 %v3516
        %3536 = vmatprep.subr.mxu0 0.0
        %3537 = vmatpush1.msra.mxu0 0.0
        %3538 = vmatprep.subr.mxu0 0.0
        %3539 = vmatpush1.msra.mxu0 0.0
        %3540 = vmatprep.subr.mxu0 0.0
        %3541 = vmatpush1.msra.mxu0 0.0
        %3542 = vmatprep.subr.mxu0 0.0
        %3543 = vmatpush1.msra.mxu0 0.0
        %3544 = vmatprep.subr.mxu0 0.0
        %3545 = vmatpush1.msra.mxu0 0.0
        %3546 = vmatprep.subr.mxu0 0.0
        %3547 = vmatpush1.msra.mxu0 0.0
        %3548 = vmatprep.subr.mxu0 0.0
        %3549 = vmatpush1.msra.mxu0 0.0
        %3550 = vmatprep.subr.mxu0 0.0
        %3551 = vmatpush1.msra.mxu0 0.0
        %3552 = vmatprep.subr.mxu0 0.0
        %3553 = vmatpush1.msra.mxu0 0.0
        %3554 = vmatprep.subr.mxu0 0.0
        %3555 = vmatpush1.msra.mxu0 0.0
        %3556 = vmatprep.subr.mxu0 0.0
        %3557 = vmatpush1.msra.mxu0 0.0
        %3558 = vmatprep.subr.mxu0 0.0
        %3559 = vmatpush1.msra.mxu0 0.0
        %3560 = vmatprep.subr.mxu0 0.0
        %3561 = vmatpush1.msra.mxu0 0.0
        %3562 = vmatprep.subr.mxu0 0.0
        %3563 = vmatpush1.msra.mxu0 0.0
        %3564 = vmatprep.subr.mxu0 0.0
        %3565 = vmatpush1.msra.mxu0 0.0
        %3566 = vmatprep.subr.mxu0 0.0
        %3567 = vmatpush1.msra.mxu0 0.0
        %3568 = vmatprep.subr.mxu0 0.0
        %3569 = vmatpush1.msra.mxu0 0.0
        %3570 = vmatprep.subr.mxu0 0.0
        %3571 = vmatpush1.msra.mxu0 0.0
        %3572 = vmatprep.subr.mxu0 0.0
        %3573 = vmatpush1.msra.mxu0 0.0
        %3574 = vmatprep.subr.mxu0 0.0
        %3575 = vmatpush1.msra.mxu0 0.0
        %3576 = vmatprep.subr.mxu0 0.0
        %3577 = vmatpush1.msra.mxu0 0.0
        %3578 = vmatprep.subr.mxu0 0.0
        %3579 = vmatpush1.msra.mxu0 0.0
        %3580 = vmatprep.subr.mxu0 0.0
        %3581 = vmatpush1.msra.mxu0 0.0
        %3582 = vmatprep.subr.mxu0 0.0
        %3583 = vmatpush1.msra.mxu0 0.0
        %3584 = vmatprep.mubr.f32.mxu0 0.0
        %3585 = vmatmul.mubr.f32.gmra.mrb[0].mxu0 %v3518
        %v3586 = vpop.f32.mrb[0].mxu0
        %v3587 = vadd.f32 0.0, %v3586
        %v3588 = vpop.f32.mrb[0].mxu0
        %3589 = vdwg.mxu0
        %v3590 = vmul.f32 %v3587, %v3587
        %v3592 = vrot.slane %v3590, 7
        %v3594 = vsub.f32 %v3587, %v3592
        %v3595 = vmax.f32 %v3594, 0.0
        %v3596 = vadd.f32 %v3595, 1e-05
        %v3597 = vrsqrt.pop %v3596
        %v3598 = vsel %vm3507, %v3587, %v3597
        %v3599 = vld [vmem:[%s4] sm:$0xff]
        %vm3600 = vcmask 64512
        %v3602 = vsel %vm3600, %v3598, 0
        %3604 = vmatprep.subr.mxu0 0.0
        %3605 = vmatpush1.msra.mxu0 %v3599
        %3606 = vmatprep.subr.mxu0 0.0
        %3607 = vmatpush1.msra.mxu0 0.0
        %3608 = vmatprep.subr.mxu0 0.0
        %3609 = vmatpush1.msra.mxu0 0.0
        %3610 = vmatprep.subr.mxu0 0.0
        %3611 = vmatpush1.msra.mxu0 0.0
        %3612 = vmatprep.subr.mxu0 0.0
        %3613 = vmatpush1.msra.mxu0 0.0
        %3614 = vmatprep.subr.mxu0 0.0
        %3615 = vmatpush1.msra.mxu0 0.0
        %3616 = vmatprep.subr.mxu0 0.0
        %3617 = vmatpush1.msra.mxu0 0.0
        %3618 = vmatprep.subr.mxu0 0.0
        %3619 = vmatpush1.msra.mxu0 0.0
        %3620 = vmatprep.subr.mxu0 0.0
        %3621 = vmatpush1.msra.mxu0 0.0
        %3622 = vmatprep.subr.mxu0 0.0
        %3623 = vmatpush1.msra.mxu0 0.0
        %3624 = vmatprep.subr.mxu0 0.0
        %3625 = vmatpush1.msra.mxu0 0.0
        %3626 = vmatprep.subr.mxu0 0.0
        %3627 = vmatpush1.msra.mxu0 0.0
        %3628 = vmatprep.subr.mxu0 0.0
        %3629 = vmatpush1.msra.mxu0 0.0
        %3630 = vmatprep.subr.mxu0 0.0
        %3631 = vmatpush1.msra.mxu0 0.0
        %3632 = vmatprep.subr.mxu0 0.0
        %3633 = vmatpush1.msra.mxu0 0.0
        %3634 = vmatprep.subr.mxu0 0.0
        %3635 = vmatpush1.msra.mxu0 0.0
        %3636 = vmatprep.subr.mxu0 0.0
        %3637 = vmatpush1.msra.mxu0 0.0
        %3638 = vmatprep.subr.mxu0 0.0
        %3639 = vmatpush1.msra.mxu0 0.0
        %3640 = vmatprep.subr.mxu0 0.0
        %3641 = vmatpush1.msra.mxu0 0.0
        %3642 = vmatprep.subr.mxu0 0.0
        %3643 = vmatpush1.msra.mxu0 0.0
        %3644 = vmatprep.subr.mxu0 0.0
        %3645 = vmatpush1.msra.mxu0 0.0
        %3646 = vmatprep.subr.mxu0 0.0
        %3647 = vmatpush1.msra.mxu0 0.0
        %3648 = vmatprep.subr.mxu0 0.0
        %3649 = vmatpush1.msra.mxu0 0.0
        %3650 = vmatprep.subr.mxu0 0.0
        %3651 = vmatpush1.msra.mxu0 0.0
        %3652 = vmatprep.subr.mxu0 0.0
        %3653 = vmatpush1.msra.mxu0 0.0
        %3654 = vmatprep.subr.mxu0 0.0
        %3655 = vmatpush1.msra.mxu0 0.0
        %3656 = vmatprep.subr.mxu0 0.0
        %3657 = vmatpush1.msra.mxu0 0.0
        %3658 = vmatprep.subr.mxu0 0.0
        %3659 = vmatpush1.msra.mxu0 0.0
        %3660 = vmatprep.subr.mxu0 0.0
        %3661 = vmatpush1.msra.mxu0 0.0
        %3662 = vmatprep.subr.mxu0 0.0
        %3663 = vmatpush1.msra.mxu0 0.0
        %3664 = vmatprep.subr.mxu0 0.0
        %3665 = vmatpush1.msra.mxu0 0.0
        %3666 = vmatprep.subr.mxu0 0.0
        %3667 = vmatpush1.msra.mxu0 0.0
        %3668 = vmatprep.mubr.f32.mxu0 0.0
        %3669 = vmatmul.mubr.f32.gmra.mrb[0].mxu0 %v3602
        %v3670 = vpop.f32.mrb[0].mxu0
        %v3671 = vadd.f32 0.0, %v3670
        %v3672 = vpop.f32.mrb[0].mxu0
        %3673 = vdwg.mxu0
        %v3674 = vld [vmem:[%s271] sm:$0x1]
        %v3676 = vrot.slane %v3674, 7
        %v3678 = vmul.f32 %v3671, %v3676
        %v3679 = vld [vmem:[%s271 + $0x1] sm:$0x1]
        %v3681 = vrot.slane %v3678, 1
        %v3683 = vmul.f32 %v3671, %v3681
        %v3684 = vsub.f32 %v3679, %v3683
        %v3685 = vlaneseq
        %v3686 = vshrl.u32 %v3685, 7
        %v3687 = vsub.s32 1, %v3686
        %v3688 = vrot.slane %v3678, %v3687
        %v3689 = vmul.f32 %v3305, %v3688
        %v3690 = vmul.f32 %v3306, %v3688
        %v3691 = vmul.f32 %v3307, %v3688
        %v3692 = vmul.f32 %v3308, %v3688
        %v3693 = vmul.f32 %v3309, %v3688
        %v3694 = vmul.f32 %v3310, %v3688
        %v3695 = vmul.f32 %v3311, %v3688
        %v3696 = vmul.f32 %v3312, %v3688
        %v3697 = vmul.f32 %v3313, %v3688
        %v3698 = vmul.f32 %v3314, %v3688
        %v3699 = vmul.f32 %v3315, %v3688
        %v3700 = vmul.f32 %v3316, %v3688
        %v3701 = vmul.f32 %v3317, %v3688
        %v3702 = vmul.f32 %v3318, %v3688
        %v3703 = vmul.f32 %v3319, %v3688
        %v3704 = vmul.f32 %v3320, %v3688
        %v3705 = vmul.f32 %v3321, %v3688
        %v3706 = vmul.f32 %v3322, %v3688
        %v3707 = vmul.f32 %v3323, %v3688
        %v3708 = vmul.f32 %v3324, %v3688
        %v3709 = vmul.f32 %v3325, %v3688
        %v3710 = vmul.f32 %v3326, %v3688
        %v3711 = vmul.f32 %v3327, %v3688
        %v3712 = vmul.f32 %v3328, %v3688
        %v3713 = vmul.f32 %v3329, %v3688
        %v3714 = vmul.f32 %v3330, %v3688
        %v3715 = vmul.f32 %v3331, %v3688
        %v3716 = vmul.f32 %v3332, %v3688
        %v3717 = vmul.f32 %v3333, %v3688
        %v3718 = vmul.f32 %v3334, %v3688
        %v3719 = vmul.f32 %v3335, %v3688
        %v3720 = vmul.f32 %v3336, %v3688
        %v3721 = vlaneseq
        %v3722 = vshrl.u32 %v3721, 7
        %v3723 = vsub.s32 0, %v3722
        %v3724 = vrot.slane %v3684, %v3723
        %v3725 = vadd.f32 %v3689, %v3724
        %v3726 = vadd.f32 %v3690, %v3724
        %v3727 = vadd.f32 %v3691, %v3724
        %v3728 = vadd.f32 %v3692, %v3724
        %v3729 = vadd.f32 %v3693, %v3724
        %v3730 = vadd.f32 %v3694, %v3724
        %v3731 = vadd.f32 %v3695, %v3724
        %v3732 = vadd.f32 %v3696, %v3724
        %v3733 = vadd.f32 %v3697, %v3724
        %v3734 = vadd.f32 %v3698, %v3724
        %v3735 = vadd.f32 %v3699, %v3724
        %v3736 = vadd.f32 %v3700, %v3724
        %v3737 = vadd.f32 %v3701, %v3724
        %v3738 = vadd.f32 %v3702, %v3724
        %v3739 = vadd.f32 %v3703, %v3724
        %v3740 = vadd.f32 %v3704, %v3724
        %v3741 = vadd.f32 %v3705, %v3724
        %v3742 = vadd.f32 %v3706, %v3724
        %v3743 = vadd.f32 %v3707, %v3724
        %v3744 = vadd.f32 %v3708, %v3724
        %v3745 = vadd.f32 %v3709, %v3724
        %v3746 = vadd.f32 %v3710, %v3724
        %v3747 = vadd.f32 %v3711, %v3724
        %v3748 = vadd.f32 %v3712, %v3724
        %v3749 = vadd.f32 %v3713, %v3724
        %v3750 = vadd.f32 %v3714, %v3724
        %v3751 = vadd.f32 %v3715, %v3724
        %v3752 = vadd.f32 %v3716, %v3724
        %v3753 = vadd.f32 %v3717, %v3724
        %v3754 = vadd.f32 %v3718, %v3724
        %v3755 = vadd.f32 %v3719, %v3724
        %v3756 = vadd.f32 %v3720, %v3724
        %p3757 = scmp.ge.s32.totalorder %s24, 2
        %p3758 = scmp.eq.s32.totalorder %s430, 0
        %p3759 = pnand %p3757, %p3758
        %p3760 = pneg %p3759
        %v3761 = vld [vmem:[#allocation3] sm:$0xff]
        %v3762 = vld [vmem:[#allocation3 + $0x8] sm:$0xff]
        %v3763 = vld [vmem:[#allocation3 + $0x10] sm:$0xff]
        %v3764 = vld [vmem:[#allocation3 + $0x18] sm:$0xff]
        %v3765 = vld [vmem:[#allocation3 + $0x20] sm:$0xff]
        %v3766 = vld [vmem:[#allocation3 + $0x28] sm:$0xff]
        %v3767 = vld [vmem:[#allocation3 + $0x30] sm:$0xff]
        %v3768 = vld [vmem:[#allocation3 + $0x38] sm:$0xff]
        %v3769 = vld [vmem:[#allocation3 + $0x40] sm:$0xff]
        %v3770 = vld [vmem:[#allocation3 + $0x48] sm:$0xff]
        %v3771 = vld [vmem:[#allocation3 + $0x50] sm:$0xff]
        %v3772 = vld [vmem:[#allocation3 + $0x58] sm:$0xff]
        %v3773 = vld [vmem:[#allocation3 + $0x60] sm:$0xff]
        %v3774 = vld [vmem:[#allocation3 + $0x68] sm:$0xff]
        %v3775 = vld [vmem:[#allocation3 + $0x70] sm:$0xff]
        %v3776 = vld [vmem:[#allocation3 + $0x78] sm:$0xff]
        %v3777 = vld [vmem:[#allocation3 + $0x80] sm:$0xff]
        %v3778 = vld [vmem:[#allocation3 + $0x88] sm:$0xff]
        %v3779 = vld [vmem:[#allocation3 + $0x90] sm:$0xff]
        %v3780 = vld [vmem:[#allocation3 + $0x98] sm:$0xff]
        %v3781 = vld [vmem:[#allocation3 + $0xa0] sm:$0xff]
        %v3782 = vld [vmem:[#allocation3 + $0xa8] sm:$0xff]
        %v3783 = vld [vmem:[#allocation3 + $0xb0] sm:$0xff]
        %v3784 = vld [vmem:[#allocation3 + $0xb8] sm:$0xff]
        %v3785 = vld [vmem:[#allocation3 + $0xc0] sm:$0xff]
        %v3786 = vld [vmem:[#allocation3 + $0xc8] sm:$0xff]
        %v3787 = vld [vmem:[#allocation3 + $0xd0] sm:$0xff]
        %v3788 = vld [vmem:[#allocation3 + $0xd8] sm:$0xff]
        %v3789 = vld [vmem:[#allocation3 + $0xe0] sm:$0xff]
        %v3790 = vld [vmem:[#allocation3 + $0xe8] sm:$0xff]
        %v3791 = vld [vmem:[#allocation3 + $0xf0] sm:$0xff]
        %v3792 = vld [vmem:[#allocation3 + $0xf8] sm:$0xff]
        %v3793 = vadd.f32 %v3725, %v3761
        %v3794 = vadd.f32 %v3726, %v3762
        %v3795 = vadd.f32 %v3727, %v3763
        %v3796 = vadd.f32 %v3728, %v3764
        %v3797 = vadd.f32 %v3729, %v3765
        %v3798 = vadd.f32 %v3730, %v3766
        %v3799 = vadd.f32 %v3731, %v3767
        %v3800 = vadd.f32 %v3732, %v3768
        %v3801 = vadd.f32 %v3733, %v3769
        %v3802 = vadd.f32 %v3734, %v3770
        %v3803 = vadd.f32 %v3735, %v3771
        %v3804 = vadd.f32 %v3736, %v3772
        %v3805 = vadd.f32 %v3737, %v3773
        %v3806 = vadd.f32 %v3738, %v3774
        %v3807 = vadd.f32 %v3739, %v3775
        %v3808 = vadd.f32 %v3740, %v3776
        %v3809 = vadd.f32 %v3741, %v3777
        %v3810 = vadd.f32 %v3742, %v3778
        %v3811 = vadd.f32 %v3743, %v3779
        %v3812 = vadd.f32 %v3744, %v3780
        %v3813 = vadd.f32 %v3745, %v3781
        %v3814 = vadd.f32 %v3746, %v3782
        %v3815 = vadd.f32 %v3747, %v3783
        %v3816 = vadd.f32 %v3748, %v3784
        %v3817 = vadd.f32 %v3749, %v3785
        %v3818 = vadd.f32 %v3750, %v3786
        %v3819 = vadd.f32 %v3751, %v3787
        %v3820 = vadd.f32 %v3752, %v3788
        %v3821 = vadd.f32 %v3753, %v3789
        %v3822 = vadd.f32 %v3754, %v3790
        %v3823 = vadd.f32 %v3755, %v3791
        %v3824 = vadd.f32 %v3756, %v3792
        %s3825 = scalar_select %p3760, 1, 0
        %v3826 = vstv %s3825
        %vm3827 = vcmp.eq.s32.totalorder %v3826, 1
        %v3828 = vsel %vm3827, %v3793, %v3725
        %v3829 = vsel %vm3827, %v3794, %v3726
        %v3830 = vsel %vm3827, %v3795, %v3727
        %v3831 = vsel %vm3827, %v3796, %v3728
        %v3832 = vsel %vm3827, %v3797, %v3729
        %v3833 = vsel %vm3827, %v3798, %v3730
        %v3834 = vsel %vm3827, %v3799, %v3731
        %v3835 = vsel %vm3827, %v3800, %v3732
        %v3836 = vsel %vm3827, %v3801, %v3733
        %v3837 = vsel %vm3827, %v3802, %v3734
        %v3838 = vsel %vm3827, %v3803, %v3735
        %v3839 = vsel %vm3827, %v3804, %v3736
        %v3840 = vsel %vm3827, %v3805, %v3737
        %v3841 = vsel %vm3827, %v3806, %v3738
        %v3842 = vsel %vm3827, %v3807, %v3739
        %v3843 = vsel %vm3827, %v3808, %v3740
        %v3844 = vsel %vm3827, %v3809, %v3741
        %v3845 = vsel %vm3827, %v3810, %v3742
        %v3846 = vsel %vm3827, %v3811, %v3743
        %v3847 = vsel %vm3827, %v3812, %v3744
        %v3848 = vsel %vm3827, %v3813, %v3745
        %v3849 = vsel %vm3827, %v3814, %v3746
        %v3850 = vsel %vm3827, %v3815, %v3747
        %v3851 = vsel %vm3827, %v3816, %v3748
        %v3852 = vsel %vm3827, %v3817, %v3749
        %v3853 = vsel %vm3827, %v3818, %v3750
        %v3854 = vsel %vm3827, %v3819, %v3751
        %v3855 = vsel %vm3827, %v3820, %v3752
        %v3856 = vsel %vm3827, %v3821, %v3753
        %v3857 = vsel %vm3827, %v3822, %v3754
        %v3858 = vsel %vm3827, %v3823, %v3755
        %v3859 = vsel %vm3827, %v3824, %v3756
        %v3860 = vmax.f32 %v3828, 0.0
        %v3861 = vmax.f32 %v3829, 0.0
        %v3862 = vmax.f32 %v3830, 0.0
        %v3863 = vmax.f32 %v3831, 0.0
        %v3864 = vmax.f32 %v3832, 0.0
        %v3865 = vmax.f32 %v3833, 0.0
        %v3866 = vmax.f32 %v3834, 0.0
        %v3867 = vmax.f32 %v3835, 0.0
        %v3868 = vmax.f32 %v3836, 0.0
        %v3869 = vmax.f32 %v3837, 0.0
        %v3870 = vmax.f32 %v3838, 0.0
        %v3871 = vmax.f32 %v3839, 0.0
        %v3872 = vmax.f32 %v3840, 0.0
        %v3873 = vmax.f32 %v3841, 0.0
        %v3874 = vmax.f32 %v3842, 0.0
        %v3875 = vmax.f32 %v3843, 0.0
        %v3876 = vmax.f32 %v3844, 0.0
        %v3877 = vmax.f32 %v3845, 0.0
        %v3878 = vmax.f32 %v3846, 0.0
        %v3879 = vmax.f32 %v3847, 0.0
        %v3880 = vmax.f32 %v3848, 0.0
        %v3881 = vmax.f32 %v3849, 0.0
        %v3882 = vmax.f32 %v3850, 0.0
        %v3883 = vmax.f32 %v3851, 0.0
        %v3884 = vmax.f32 %v3852, 0.0
        %v3885 = vmax.f32 %v3853, 0.0
        %v3886 = vmax.f32 %v3854, 0.0
        %v3887 = vmax.f32 %v3855, 0.0
        %v3888 = vmax.f32 %v3856, 0.0
        %v3889 = vmax.f32 %v3857, 0.0
        %v3890 = vmax.f32 %v3858, 0.0
        %v3891 = vmax.f32 %v3859, 0.0
        %3892 = vst.msk [vmem:[%s1403 + $0x1] sm:$0xff] %vm638, %v3860
        %3893 = vst.msk [vmem:[%s1403 + $0x9] sm:$0xff] %vm638, %v3861
        %3894 = vst.msk [vmem:[%s1403 + $0x19] sm:$0xff] %vm638, %v3862
        %3895 = vst.msk [vmem:[%s1403 + $0x21] sm:$0xff] %vm638, %v3863
        %3896 = vst.msk [vmem:[%s1403 + $0x31] sm:$0xff] %vm638, %v3864
        %3897 = vst.msk [vmem:[%s1403 + $0x39] sm:$0xff] %vm638, %v3865
        %3898 = vst.msk [vmem:[%s1403 + $0x49] sm:$0xff] %vm638, %v3866
        %3899 = vst.msk [vmem:[%s1403 + $0x51] sm:$0xff] %vm638, %v3867
        %3900 = vst.msk [vmem:[%s1403 + $0x61] sm:$0xff] %vm638, %v3868
        %3901 = vst.msk [vmem:[%s1403 + $0x69] sm:$0xff] %vm638, %v3869
        %3902 = vst.msk [vmem:[%s1403 + $0x79] sm:$0xff] %vm638, %v3870
        %3903 = vst.msk [vmem:[%s1403 + $0x81] sm:$0xff] %vm638, %v3871
        %3904 = vst.msk [vmem:[%s1403 + $0x91] sm:$0xff] %vm638, %v3872
        %3905 = vst.msk [vmem:[%s1403 + $0x99] sm:$0xff] %vm638, %v3873
        %3906 = vst.msk [vmem:[%s1403 + $0xa9] sm:$0xff] %vm638, %v3874
        %3907 = vst.msk [vmem:[%s1403 + $0xb1] sm:$0xff] %vm638, %v3875
        %3908 = vst.msk [vmem:[%s1403 + $0xc1] sm:$0xff] %vm638, %v3876
        %3909 = vst.msk [vmem:[%s1403 + $0xc9] sm:$0xff] %vm638, %v3877
        %3910 = vst.msk [vmem:[%s1403 + $0xd9] sm:$0xff] %vm638, %v3878
        %3911 = vst.msk [vmem:[%s1403 + $0xe1] sm:$0xff] %vm638, %v3879
        %3912 = vst.msk [vmem:[%s1403 + $0xf1] sm:$0xff] %vm638, %v3880
        %3913 = vst.msk [vmem:[%s1403 + $0xf9] sm:$0xff] %vm638, %v3881
        %3914 = vst.msk [vmem:[%s1403 + $0x109] sm:$0xff] %vm638, %v3882
        %3915 = vst.msk [vmem:[%s1403 + $0x111] sm:$0xff] %vm638, %v3883
        %3916 = vst.msk [vmem:[%s1403 + $0x121] sm:$0xff] %vm638, %v3884
        %3917 = vst.msk [vmem:[%s1403 + $0x129] sm:$0xff] %vm638, %v3885
        %3918 = vst.msk [vmem:[%s1403 + $0x139] sm:$0xff] %vm638, %v3886
        %3919 = vst.msk [vmem:[%s1403 + $0x141] sm:$0xff] %vm638, %v3887
        %3920 = vst.msk [vmem:[%s1403 + $0x151] sm:$0xff] %vm638, %v3888
        %3921 = vst.msk [vmem:[%s1403 + $0x159] sm:$0xff] %vm638, %v3889
        %3922 = vst.msk [vmem:[%s1403 + $0x169] sm:$0xff] %vm638, %v3890
        %3923 = vst.msk [vmem:[%s1403 + $0x171] sm:$0xff] %vm638, %v3891
        %p3924 = scmp.eq.s32.totalorder %s24, 64
        // Predicated region
        $region49: #{feature_get_forward.1} parent=39 // pred_check
          %p3925 = pneg %p3924
        $region50: #{feature_get_forward.1} parent=39 // pred_check_branch
          %3927 = sbr.rel (%p3925) target = $region52
        $region51: #{feature_get_forward.1} parent=39 // pred_region
          %3928 = vst.msk [vmem:[%s257] sm:$0xff] %vm638, %v3860
          %3929 = vst.msk [vmem:[%s257 + $0x8] sm:$0xff] %vm638, %v3861
          %3930 = vst.msk [vmem:[%s257 + $0x10] sm:$0xff] %vm638, %v3862
          %3931 = vst.msk [vmem:[%s257 + $0x18] sm:$0xff] %vm638, %v3863
          %3932 = vst.msk [vmem:[%s257 + $0x20] sm:$0xff] %vm638, %v3864
          %3933 = vst.msk [vmem:[%s257 + $0x28] sm:$0xff] %vm638, %v3865
          %3934 = vst.msk [vmem:[%s257 + $0x30] sm:$0xff] %vm638, %v3866
          %3935 = vst.msk [vmem:[%s257 + $0x38] sm:$0xff] %vm638, %v3867
          %3936 = vst.msk [vmem:[%s257 + $0x40] sm:$0xff] %vm638, %v3868
          %3937 = vst.msk [vmem:[%s257 + $0x48] sm:$0xff] %vm638, %v3869
          %3938 = vst.msk [vmem:[%s257 + $0x50] sm:$0xff] %vm638, %v3870
          %3939 = vst.msk [vmem:[%s257 + $0x58] sm:$0xff] %vm638, %v3871
          %3940 = vst.msk [vmem:[%s257 + $0x60] sm:$0xff] %vm638, %v3872
          %3941 = vst.msk [vmem:[%s257 + $0x68] sm:$0xff] %vm638, %v3873
          %3942 = vst.msk [vmem:[%s257 + $0x70] sm:$0xff] %vm638, %v3874
          %3943 = vst.msk [vmem:[%s257 + $0x78] sm:$0xff] %vm638, %v3875
          %3944 = vst.msk [vmem:[%s257 + $0x80] sm:$0xff] %vm638, %v3876
          %3945 = vst.msk [vmem:[%s257 + $0x88] sm:$0xff] %vm638, %v3877
          %3946 = vst.msk [vmem:[%s257 + $0x90] sm:$0xff] %vm638, %v3878
          %3947 = vst.msk [vmem:[%s257 + $0x98] sm:$0xff] %vm638, %v3879
          %3948 = vst.msk [vmem:[%s257 + $0xa0] sm:$0xff] %vm638, %v3880
          %3949 = vst.msk [vmem:[%s257 + $0xa8] sm:$0xff] %vm638, %v3881
          %3950 = vst.msk [vmem:[%s257 + $0xb0] sm:$0xff] %vm638, %v3882
          %3951 = vst.msk [vmem:[%s257 + $0xb8] sm:$0xff] %vm638, %v3883
          %3952 = vst.msk [vmem:[%s257 + $0xc0] sm:$0xff] %vm638, %v3884
          %3953 = vst.msk [vmem:[%s257 + $0xc8] sm:$0xff] %vm638, %v3885
          %3954 = vst.msk [vmem:[%s257 + $0xd0] sm:$0xff] %vm638, %v3886
          %3955 = vst.msk [vmem:[%s257 + $0xd8] sm:$0xff] %vm638, %v3887
          %3956 = vst.msk [vmem:[%s257 + $0xe0] sm:$0xff] %vm638, %v3888
          %3957 = vst.msk [vmem:[%s257 + $0xe8] sm:$0xff] %vm638, %v3889
          %3958 = vst.msk [vmem:[%s257 + $0xf0] sm:$0xff] %vm638, %v3890
          %3959 = vst.msk [vmem:[%s257 + $0xf8] sm:$0xff] %vm638, %v3891
        $region52: #{feature_get_forward.1} parent=39 // pred_fallthru
          _
        %s3960 = sand.u32 %s159, 1
        %s3961 = scalar_lea.sflag [#allocation5], %s3960
        %s3962 = sand.u32 %s159, 1
        %s3963 = smul.addr %s3962, 256
        %s3964 = scalar_lea.vmem [#allocation4], %s3963
        // Predicated region
        $region53: #{feature_get_forward.1} parent=39 // pred_check
          %p3965 = pneg %p169
        $region54: #{feature_get_forward.1} parent=39 // pred_check_branch
          %3967 = sbr.rel (%p3965) target = $region56
        $region55: #{feature_get_forward.1} parent=39 // pred_region
          %s3969 = ssub.s32 4096, 4096
          %3970 = vsyncadd %s3961, %s3969
          %s3971 = smul.addr %s23, 32
          %s3972 = smul.addr %s3971, 128
          %s3973 = scalar_lea.hbm %s5, %s3972
          %s3974 = sshll.u32 %s3964, 4
          %s3975 = int_to_ptr.vmem [resolvable:$true] %s3974
          %3980 = dma.vmem_to_hbm [thread:$0]  %s3975, 4096, %s3973, %s3961, 128, 128, 8
        $region56: #{feature_get_forward.1} parent=39 // pred_fallthru
          _
      $region40: #{feature_get_forward.1} parent=5 // pred_fallthru
        _
      %p3981 = scmp.le.s32.totalorder 2, %s14
      // Predicated region
      $region57: #{feature_get_forward.1} parent=5 // pred_check
        %p3982 = pneg %p3981
      $region58: #{feature_get_forward.1} parent=5 // pred_check_branch
        %3984 = sbr.rel (%p3982) target = $region60
      $region59: #{feature_get_forward.1} parent=5 // pred_region
        %s3985 = ssub.s32 %s14, 2
        // Predicated region
        $region61: #{feature_get_forward.1} parent=59 // pred_check
          %p3986 = pneg %p175
        $region62: #{feature_get_forward.1} parent=59 // pred_check_branch
          %3988 = sbr.rel (%p3986) target = $region64
        $region63: #{feature_get_forward.1} parent=59 // pred_region
          %s3989 = sand.u32 %s160, 1
          %s3990 = scalar_lea.sflag [#allocation5], %s3989
          %s3991 = sand.u32 %s160, 1
          %s3992 = smul.addr %s3991, 256
          %s3993 = scalar_lea.vmem [#allocation4], %s3992
          %3994 = dma.done %s3990, 4096
        $region64: #{feature_get_forward.1} parent=59 // pred_fallthru
          _
      $region60: #{feature_get_forward.1} parent=5 // pred_fallthru
        _
    $region6: #{feature_get_forward.1} parent=1 // loop_footer
      %s18 = sadd.s32 1, %s14
    $region7: #{feature_get_forward.1} parent=1 // loop_footer_branch
      %13 = sbr.rel target = $region3
    $region8: #{feature_get_forward.1} parent=1 // loop_exit
      _
    %3995 = vsyncpa [#allocation5], 1
    %s3996 = scalar_lea.sflag [#allocation5], 1
    %3997 = vsyncpa %s3996, 1

</llo_original>
